<compile_context>
chip_gen: v7x
topology: tpu7x:2x2x1
jax: 0.10.0
libtpu: 0.0.40
codegen_flags: <defaults>
</compile_context>

<pallas_src>
import math

import jax
import jax.numpy as jnp
from jax.experimental import pallas as pl
from jax.experimental.pallas import tpu as pltpu

# ---- static configuration (cfg.model_parameters stand-in) ----
D_MODEL = 96            # forced by nn.Linear(96, 2) after flatten with W == 1
N_HEAD = 4
HEAD_DIM = D_MODEL // N_HEAD
SEQ_L = 5               # forced by nn.AvgPool2d((5, 1)) + .squeeze(2)
EEG_CH = 8
T_LEN = 64
CT = EEG_CH * T_LEN     # flattened raw sample length (512)
NS = 4                  # support samples per episode
NQ = 2                  # query samples per episode
N_OUT = 2               # nn.Linear(96, 2)
LANE = 128              # lane block
SAMP_PAD = 8            # samples per episode padded to one sublane tile
MT = SEQ_L * SAMP_PAD   # padded token count (40)
QKV_W = 3 * N_HEAD * LANE   # 1536: head-blocked Q|K|V lanes
FEAT_W = SEQ_L * LANE       # 640: per-position 128-lane feature blocks


# ---------------------------------------------------------------------------
# Fused kernel: feature projection + bidirectional cross-MHA + AvgPool + head
# ---------------------------------------------------------------------------
def _make_fused_kernel(nq, ns):
    nsamp = nq + ns
    assert 0 < nq and 0 < ns and nsamp <= SAMP_PAD

    def kernel(x_ref, wf_ref, wqkv_ref, wo_ref, wl_ref, bias_ref, out_ref, xseq_ref):
        # (1) frozen feature-extractor stand-in: tanh(x @ Wf + bf); one MXU matmul,
        #     features never leave VMEM.  feats: (8, SEQ_L*128) f32, per-position
        #     128-lane blocks (valid lanes 0..95).
        feats = jnp.tanh(
            jnp.dot(x_ref[...], wf_ref[...], preferred_element_type=jnp.float32)
            + bias_ref[0:1, 0:FEAT_W])

        # (2) token tile: token t = position*8 + sample-slot.  Five aligned (8,128)
        #     vreg copies into a VMEM scratch -- no unaligned gather/concat.
        for l in range(SEQ_L):
            xseq_ref[l * SAMP_PAD:(l + 1) * SAMP_PAD, :] = feats[:, l * LANE:(l + 1) * LANE]
        x_seq = xseq_ref[...].astype(jnp.bfloat16)                      # (MT, 128)

        # (3) fused head-blocked QKV projection (1/sqrt(head_dim) folded into Q blocks).
        qkv = (jnp.dot(x_seq, wqkv_ref[...], preferred_element_type=jnp.float32)
               + bias_ref[1:2, :])                                       # (MT, 1536) f32

        # additive cross-attention mask, built once: query rows attend support
        # columns and vice versa; padded sample slots are never valid columns.
        row_s = jnp.bitwise_and(jax.lax.broadcasted_iota(jnp.int32, (MT, MT), 0),
                                SAMP_PAD - 1)
        col_s = jnp.bitwise_and(jax.lax.broadcasted_iota(jnp.int32, (MT, MT), 1),
                                SAMP_PAD - 1)
        allowed = jnp.logical_and(jnp.logical_xor(row_s < nq, col_s < nq),
                                  col_s < nsamp)
        mask_bias = jnp.where(allowed, 0.0, -1e30).astype(jnp.float32)   # (MT, MT)

        # (4) per-head attention; AvgPool commuted before the output projection
        #     (1/SEQ_L folded into wo), per-head Wo accumulation (no concat).
        acc = jnp.zeros((SAMP_PAD, LANE), jnp.float32)
        for h in range(N_HEAD):
            q_h = qkv[:, h * LANE:(h + 1) * LANE].astype(jnp.bfloat16)
            k_h = qkv[:, (N_HEAD + h) * LANE:(N_HEAD + h + 1) * LANE].astype(jnp.bfloat16)
            v_h = qkv[:, (2 * N_HEAD + h) * LANE:(2 * N_HEAD + h + 1) * LANE].astype(jnp.bfloat16)

            s = jax.lax.dot_general(q_h, k_h, (((1,), (1,)), ((), ())),
                                    preferred_element_type=jnp.float32) + mask_bias
            s = s - jnp.max(s, axis=-1, keepdims=True)
            p = jnp.exp(s)
            p = p * pl.reciprocal(jnp.sum(p, axis=-1, keepdims=True), approx=True)

            ho = jnp.dot(p.astype(jnp.bfloat16), v_h,
                         preferred_element_type=jnp.float32)             # (MT, 128)

            # AvgPool2d((5,1)): sum the 5 position groups (8-aligned sublane slices);
            # the 1/5 factor is folded into wo.
            ps = ho[0:SAMP_PAD, :]
            for l in range(1, SEQ_L):
                ps = ps + ho[l * SAMP_PAD:(l + 1) * SAMP_PAD, :]         # (8, 128)

            acc = acc + jnp.dot(ps.astype(jnp.bfloat16),
                                wo_ref[:, h * LANE:(h + 1) * LANE],
                                preferred_element_type=jnp.float32)

        cam = acc + bias_ref[2:3, 0:LANE]          # (8,128): rows 0..nq-1 q_cam,
                                                   #          rows nq..nq+ns-1 s_cam
        # (5) query branch: ReLU -> flatten -> Linear(96, 2) (lane-padded to 128).
        relu_cam = jnp.maximum(cam, 0.0).astype(jnp.bfloat16)
        binary = (jnp.dot(relu_cam, wl_ref[...], preferred_element_type=jnp.float32)
                  + bias_ref[3:4, 0:LANE])                               # (8, 128)

        # (6) one lane-dense output slab, two aligned full-block stores.
        out_ref[0:SAMP_PAD, :] = cam
        out_ref[SAMP_PAD:2 * SAMP_PAD, :] = binary

    return kernel


def _fused_forward_call(x_batched, params, nq, ns):
    """x_batched: (E, SAMP_PAD, CT) bf16 -> (E, 2*SAMP_PAD, LANE) f32 slab."""
    num_episodes = x_batched.shape[0]
    kernel = _make_fused_kernel(nq, ns)

    def resident(shape):
        # weights: full block, same block every grid step -> stays VMEM-resident.
        return pl.BlockSpec(shape, lambda e: (0, 0))

    return pl.pallas_call(
        kernel,
        out_shape=jax.ShapeDtypeStruct((num_episodes, 2 * SAMP_PAD, LANE), jnp.float32),
        grid=(num_episodes,),
        in_specs=[
            pl.BlockSpec((None, SAMP_PAD, CT), lambda e: (e, 0, 0)),  # x (per episode)
            resident((CT, FEAT_W)),                                   # wf
            resident((LANE, QKV_W)),                                  # wqkv (head-blocked)
            resident((LANE, N_HEAD * LANE)),                          # wo   (per-head blocks)
            resident((LANE, LANE)),                                   # wl   (lane-padded)
            resident((SAMP_PAD, QKV_W)),                              # packed bias slab
        ],
        out_specs=pl.BlockSpec((None, 2 * SAMP_PAD, LANE), lambda e: (e, 0, 0)),
        scratch_shapes=[pltpu.VMEM((MT, LANE), jnp.float32)],
        compiler_params=pltpu.CompilerParams(dimension_semantics=("parallel",)),
    )(x_batched, params["wf"], params["wqkv"], params["wo"], params["wl"], params["bias"])


# ---------------------------------------------------------------------------
# Forward wrappers (mirror CrossAttention_flatten_2class.forward)
# ---------------------------------------------------------------------------
def cross_attention_flatten_2class_forward_batched(s_samples, q_samples, params):
    """Batched over episodes: s_samples (E, ns, C, T), q_samples (E, nq, C, T)."""
    num_episodes, ns = s_samples.shape[0], s_samples.shape[1]
    nq = q_samples.shape[1]
    assert nq > 0 and ns > 0 and nq + ns <= SAMP_PAD

    q_flat = q_samples.reshape(num_episodes, nq, -1)
    s_flat = s_samples.reshape(num_episodes, ns, -1)
    x = jnp.concatenate([q_flat, s_flat], axis=1)                 # queries first
    pad = SAMP_PAD - (nq + ns)
    if pad:
        x = jnp.concatenate([x, jnp.zeros((num_episodes, pad, x.shape[-1]), x.dtype)],
                            axis=1)
    x = x.astype(jnp.bfloat16)

    slab = _fused_forward_call(x, params, nq, ns)                 # (E, 16, 128)
    q_cam = slab[:, 0:nq, 0:D_MODEL]
    s_cam = slab[:, nq:nq + ns, 0:D_MODEL]
    binary = slab[:, SAMP_PAD:SAMP_PAD + nq, 0:N_OUT]
    return {
        "binary_class": binary,                                   # (E, nq, 2)
        "s_cam_f": s_cam.reshape(num_episodes, ns, D_MODEL, 1),   # torch shape after squeeze(2)
        "q_cam_f": q_cam.reshape(num_episodes, nq, D_MODEL, 1),
    }


def cross_attention_flatten_2class_forward(s_samples, q_samples, s_labels, q_labels,
                                           params):
    del s_labels, q_labels   # labels only organize episodes inside feature_extract
    out = cross_attention_flatten_2class_forward_batched(s_samples[None], q_samples[None],
                                                         params)
    return {k: v[0] for k, v in out.items()}


# ---------------------------------------------------------------------------
# Parameter construction (stand-in for pretrained checkpoints)
# ---------------------------------------------------------------------------
def init_params(key):
    # Linear weights stored as (in, out) so that y = x @ W + b (torch stores (out, in)).
    ks = jax.random.split(key, 6)
    sd = 0.02
    scale = 1.0 / math.sqrt(HEAD_DIM)
    inv_l = 1.0 / SEQ_L

    # Frozen feature-extractor stand-in: one 96-wide block per sequence position,
    # padded to a lane-dense 128 stride.
    wf_core = sd * jax.random.normal(ks[0], (CT, SEQ_L, D_MODEL), jnp.float32)
    wf = jnp.zeros((CT, FEAT_W), jnp.float32)
    for l in range(SEQ_L):
        wf = wf.at[:, l * LANE:l * LANE + D_MODEL].set(wf_core[:, l, :])
    bf = jnp.zeros((FEAT_W,), jnp.float32)

    # Head-blocked, lane-padded QKV weight; input dim padded 96->128 (zero rows);
    # attention scale folded into the Q blocks (and would be folded into the Q bias).
    wq = sd * jax.random.normal(ks[1], (D_MODEL, D_MODEL), jnp.float32)
    wk = sd * jax.random.normal(ks[2], (D_MODEL, D_MODEL), jnp.float32)
    wv = sd * jax.random.normal(ks[3], (D_MODEL, D_MODEL), jnp.float32)
    wqkv = jnp.zeros((LANE, QKV_W), jnp.float32)
    bqkv = jnp.zeros((QKV_W,), jnp.float32)
    for h in range(N_HEAD):
        cs, ce = h * HEAD_DIM, (h + 1) * HEAD_DIM
        wqkv = wqkv.at[0:D_MODEL, h * LANE:h * LANE + HEAD_DIM].set(wq[:, cs:ce] * scale)
        wqkv = wqkv.at[0:D_MODEL,
                       (N_HEAD + h) * LANE:(N_HEAD + h) * LANE + HEAD_DIM].set(wk[:, cs:ce])
        wqkv = wqkv.at[0:D_MODEL,
                       (2 * N_HEAD + h) * LANE:(2 * N_HEAD + h) * LANE + HEAD_DIM].set(wv[:, cs:ce])

    # Output projection, per-head 128x128 blocks along lanes; 1/SEQ_L (AvgPool) folded in.
    wo_full = sd * jax.random.normal(ks[4], (D_MODEL, D_MODEL), jnp.float32)
    wo = jnp.zeros((LANE, N_HEAD * LANE), jnp.float32)
    for h in range(N_HEAD):
        wo = wo.at[0:HEAD_DIM, h * LANE:h * LANE + D_MODEL].set(
            wo_full[h * HEAD_DIM:(h + 1) * HEAD_DIM, :] * inv_l)
    bo = jnp.zeros((D_MODEL,), jnp.float32)

    # Final Linear(96, 2), lane-padded to (128, 128).
    wl_core = sd * jax.random.normal(ks[5], (D_MODEL, N_OUT), jnp.float32)
    wl = jnp.zeros((LANE, LANE), jnp.float32).at[0:D_MODEL, 0:N_OUT].set(wl_core)
    bl = jnp.zeros((N_OUT,), jnp.float32)

    # Packed bias slab (one f32 DMA): row0=bf, row1=bqkv, row2=bo, row3=bl.
    bias = jnp.zeros((SAMP_PAD, QKV_W), jnp.float32)
    bias = bias.at[0, 0:FEAT_W].set(bf)
    bias = bias.at[1, :].set(bqkv)
    bias = bias.at[2, 0:D_MODEL].set(bo)
    bias = bias.at[3, 0:N_OUT].set(bl)

    return {
        "wf": wf.astype(jnp.bfloat16),
        "wqkv": wqkv.astype(jnp.bfloat16),
        "wo": wo.astype(jnp.bfloat16),
        "wl": wl.astype(jnp.bfloat16),
        "bias": bias,
    }


if __name__ == "__main__":
    key = jax.random.PRNGKey(0)
    k_s, k_q, k_p = jax.random.split(key, 3)

    s_samples = jax.random.normal(k_s, (NS, EEG_CH, T_LEN), jnp.float32)
    q_samples = jax.random.normal(k_q, (NQ, EEG_CH, T_LEN), jnp.float32)
    s_labels = jnp.arange(NS, dtype=jnp.int32) % 2
    q_labels = jnp.arange(NQ, dtype=jnp.int32) % 2
    params = init_params(k_p)

    # Single-episode path (matches the torch module forward).
    out = jax.jit(cross_attention_flatten_2class_forward)(
        s_samples, q_samples, s_labels, q_labels, params)
    out = jax.block_until_ready(out)

    assert out["binary_class"].shape == (NQ, N_OUT)
    assert out["binary_class"].dtype == jnp.float32
    assert out["s_cam_f"].shape == (NS, D_MODEL, 1)
    assert out["q_cam_f"].shape == (NQ, D_MODEL, 1)
    assert bool(jnp.all(jnp.isfinite(out["binary_class"])))
    assert bool(jnp.all(jnp.isfinite(out["s_cam_f"])))
    assert bool(jnp.all(jnp.isfinite(out["q_cam_f"])))

    # Batched episode path: weights stay VMEM-resident across the episode grid
    # (and shard across both TensorCores on v7x).
    E = 3
    s_b = jnp.stack([s_samples, s_samples * 0.5, -s_samples], axis=0)
    q_b = jnp.stack([q_samples, -q_samples, q_samples * 2.0], axis=0)
    out_b = jax.jit(cross_attention_flatten_2class_forward_batched)(s_b, q_b, params)
    out_b = jax.block_until_ready(out_b)

    assert out_b["binary_class"].shape == (E, NQ, N_OUT)
    assert out_b["s_cam_f"].shape == (E, NS, D_MODEL, 1)
    assert out_b["q_cam_f"].shape == (E, NQ, D_MODEL, 1)
    # episode 0 of the batched path must match the single-episode path
    assert bool(jnp.allclose(out_b["binary_class"][0], out["binary_class"],
                             atol=1e-5, rtol=1e-5))

    print("KERNEL_OK")
</pallas_src>

<mosaic_0001>
module attributes {stable_mosaic.version = 11 : i64} {
  func.func @kernel(%arg0: i32, %arg1: memref<1x8x512xbf16, #tpu.memory_space<vmem>>, %arg2: memref<512x640xbf16, #tpu.memory_space<vmem>>, %arg3: memref<128x1536xbf16, #tpu.memory_space<vmem>>, %arg4: memref<128x512xbf16, #tpu.memory_space<vmem>>, %arg5: memref<128x128xbf16, #tpu.memory_space<vmem>>, %arg6: memref<8x1536xf32, #tpu.memory_space<vmem>>, %arg7: memref<1x16x128xf32, #tpu.memory_space<vmem>>, %arg8: memref<40x128xf32, #tpu.memory_space<vmem>>) attributes {dimension_semantics = [#tpu.dimension_semantics<parallel>], iteration_bounds = array<i64: 1>, scalar_prefetch = 0 : i64, scratch_operands = 1 : i64, tpu.core_type = #tpu.core_type<tc>, window_params = [{transform_indices = @transform_0, window_bounds = array<i64: 1, 8, 512>}, {pipeline_mode = #tpu.pipeline_mode<synchronous>, transform_indices = @transform_1, window_bounds = array<i64: 512, 640>}, {pipeline_mode = #tpu.pipeline_mode<synchronous>, transform_indices = @transform_2, window_bounds = array<i64: 128, 1536>}, {pipeline_mode = #tpu.pipeline_mode<synchronous>, transform_indices = @transform_3, window_bounds = array<i64: 128, 512>}, {pipeline_mode = #tpu.pipeline_mode<synchronous>, transform_indices = @transform_4, window_bounds = array<i64: 128, 128>}, {pipeline_mode = #tpu.pipeline_mode<synchronous>, transform_indices = @transform_5, window_bounds = array<i64: 8, 1536>}, {transform_indices = @transform_6, window_bounds = array<i64: 1, 16, 128>}]} {
    %c0 = arith.constant 0 : index
    %c0_0 = arith.constant 0 : index
    %c0_1 = arith.constant 0 : index
    %0 = vector.load %arg1[%c0, %c0_0, %c0_1] : memref<1x8x512xbf16, #tpu.memory_space<vmem>>, vector<1x8x512xbf16>
    %1 = vector.shape_cast %0 : vector<1x8x512xbf16> to vector<8x512xbf16>
    %c0_2 = arith.constant 0 : index
    %c0_3 = arith.constant 0 : index
    %2 = vector.load %arg2[%c0_2, %c0_3] : memref<512x640xbf16, #tpu.memory_space<vmem>>, vector<512x640xbf16>
    %cst = arith.constant dense<0.000000e+00> : vector<8x640xf32>
    %3 = tpu.matmul %1, %2, %cst {dimension_numbers = #tpu.dot_dimension_numbers<[1], [0], [0], [1], [0, 0, 1, 1], [], []>} : vector<8x512xbf16>, vector<512x640xbf16>, vector<8x640xf32> -> vector<8x640xf32>
    %c0_4 = arith.constant 0 : index
    %c0_5 = arith.constant 0 : index
    %4 = vector.load %arg6[%c0_4, %c0_5] : memref<8x1536xf32, #tpu.memory_space<vmem>>, vector<1x640xf32>
    %5 = vector.broadcast %4 : vector<1x640xf32> to vector<8x640xf32>
    %6 = arith.addf %3, %5 : vector<8x640xf32>
    %7 = math.tanh %6 : vector<8x640xf32>
    %8 = vector.extract_strided_slice %7 {offsets = [0, 0], sizes = [8, 128], strides = [1, 1]} : vector<8x640xf32> to vector<8x128xf32>
    %c0_6 = arith.constant 0 : index
    %c0_7 = arith.constant 0 : index
    %9 = vector.load %arg8[%c0_6, %c0_7] : memref<40x128xf32, #tpu.memory_space<vmem>>, vector<8x128xf32>
    tpu.vector_store %arg8[%c0_6, %c0_7], %8 {strides = array<i32>} : memref<40x128xf32, #tpu.memory_space<vmem>>, vector<8x128xf32>,
    %10 = vector.extract_strided_slice %7 {offsets = [0, 128], sizes = [8, 128], strides = [1, 1]} : vector<8x640xf32> to vector<8x128xf32>
    %c8 = arith.constant 8 : index
    %c0_8 = arith.constant 0 : index
    %11 = vector.load %arg8[%c8, %c0_8] : memref<40x128xf32, #tpu.memory_space<vmem>>, vector<8x128xf32>
    tpu.vector_store %arg8[%c8, %c0_8], %10 {strides = array<i32>} : memref<40x128xf32, #tpu.memory_space<vmem>>, vector<8x128xf32>,
    %12 = vector.extract_strided_slice %7 {offsets = [0, 256], sizes = [8, 128], strides = [1, 1]} : vector<8x640xf32> to vector<8x128xf32>
    %c16 = arith.constant 16 : index
    %c0_9 = arith.constant 0 : index
    %13 = vector.load %arg8[%c16, %c0_9] : memref<40x128xf32, #tpu.memory_space<vmem>>, vector<8x128xf32>
    tpu.vector_store %arg8[%c16, %c0_9], %12 {strides = array<i32>} : memref<40x128xf32, #tpu.memory_space<vmem>>, vector<8x128xf32>,
    %14 = vector.extract_strided_slice %7 {offsets = [0, 384], sizes = [8, 128], strides = [1, 1]} : vector<8x640xf32> to vector<8x128xf32>
    %c24 = arith.constant 24 : index
    %c0_10 = arith.constant 0 : index
    %15 = vector.load %arg8[%c24, %c0_10] : memref<40x128xf32, #tpu.memory_space<vmem>>, vector<8x128xf32>
    tpu.vector_store %arg8[%c24, %c0_10], %14 {strides = array<i32>} : memref<40x128xf32, #tpu.memory_space<vmem>>, vector<8x128xf32>,
    %16 = vector.extract_strided_slice %7 {offsets = [0, 512], sizes = [8, 128], strides = [1, 1]} : vector<8x640xf32> to vector<8x128xf32>
    %c32 = arith.constant 32 : index
    %c0_11 = arith.constant 0 : index
    %17 = vector.load %arg8[%c32, %c0_11] : memref<40x128xf32, #tpu.memory_space<vmem>>, vector<8x128xf32>
    tpu.vector_store %arg8[%c32, %c0_11], %16 {strides = array<i32>} : memref<40x128xf32, #tpu.memory_space<vmem>>, vector<8x128xf32>,
    %c0_12 = arith.constant 0 : index
    %c0_13 = arith.constant 0 : index
    %18 = vector.load %arg8[%c0_12, %c0_13] : memref<40x128xf32, #tpu.memory_space<vmem>>, vector<40x128xf32>
    %19 = arith.truncf %18 : vector<40x128xf32> to vector<40x128xbf16>
    %c0_14 = arith.constant 0 : index
    %c0_15 = arith.constant 0 : index
    %20 = vector.load %arg3[%c0_14, %c0_15] : memref<128x1536xbf16, #tpu.memory_space<vmem>>, vector<128x1536xbf16>
    %cst_16 = arith.constant dense<0.000000e+00> : vector<40x1536xf32>
    %21 = tpu.matmul %19, %20, %cst_16 {dimension_numbers = #tpu.dot_dimension_numbers<[1], [0], [0], [1], [0, 0, 1, 1], [], []>} : vector<40x128xbf16>, vector<128x1536xbf16>, vector<40x1536xf32> -> vector<40x1536xf32>
    %c1 = arith.constant 1 : index
    %c0_17 = arith.constant 0 : index
    %22 = vector.load %arg6[%c1, %c0_17] : memref<8x1536xf32, #tpu.memory_space<vmem>>, vector<1x1536xf32>
    %23 = vector.broadcast %22 : vector<1x1536xf32> to vector<40x1536xf32>
    %24 = arith.addf %21, %23 : vector<40x1536xf32>
    %25 = tpu.iota {dimensions = array<i32: 0>} : vector<40x40xi32>
    %c7_i32 = arith.constant 7 : i32
    %26 = vector.broadcast %c7_i32 : i32 to vector<40x40xi32>
    %27 = arith.andi %25, %26 : vector<40x40xi32>
    %28 = tpu.iota {dimensions = array<i32: 1>} : vector<40x40xi32>
    %c7_i32_18 = arith.constant 7 : i32
    %29 = vector.broadcast %c7_i32_18 : i32 to vector<40x40xi32>
    %30 = arith.andi %28, %29 : vector<40x40xi32>
    %c2_i32 = arith.constant 2 : i32
    %31 = vector.broadcast %c2_i32 : i32 to vector<40x40xi32>
    %32 = arith.cmpi slt, %27, %31 : vector<40x40xi32>
    %c2_i32_19 = arith.constant 2 : i32
    %33 = vector.broadcast %c2_i32_19 : i32 to vector<40x40xi32>
    %34 = arith.cmpi slt, %30, %33 : vector<40x40xi32>
    %35 = arith.xori %32, %34 : vector<40x40xi1>
    %c6_i32 = arith.constant 6 : i32
    %36 = vector.broadcast %c6_i32 : i32 to vector<40x40xi32>
    %37 = arith.cmpi slt, %30, %36 : vector<40x40xi32>
    %38 = arith.andi %35, %37 : vector<40x40xi1>
    %cst_20 = arith.constant 0.000000e+00 : f32
    %cst_21 = arith.constant -1.000000e+30 : f32
    %39 = vector.broadcast %cst_20 : f32 to vector<40x40xf32>
    %40 = vector.broadcast %cst_21 : f32 to vector<40x40xf32>
    %41 = arith.select %38, %39, %40 : vector<40x40xi1>, vector<40x40xf32>
    %cst_22 = arith.constant 0.000000e+00 : f32
    %42 = vector.broadcast %cst_22 : f32 to vector<8x128xf32>
    %43 = vector.extract_strided_slice %24 {offsets = [0, 0], sizes = [40, 128], strides = [1, 1]} : vector<40x1536xf32> to vector<40x128xf32>
    %44 = arith.truncf %43 : vector<40x128xf32> to vector<40x128xbf16>
    %45 = vector.extract_strided_slice %24 {offsets = [0, 512], sizes = [40, 128], strides = [1, 1]} : vector<40x1536xf32> to vector<40x128xf32>
    %46 = arith.truncf %45 : vector<40x128xf32> to vector<40x128xbf16>
    %47 = vector.extract_strided_slice %24 {offsets = [0, 1024], sizes = [40, 128], strides = [1, 1]} : vector<40x1536xf32> to vector<40x128xf32>
    %48 = arith.truncf %47 : vector<40x128xf32> to vector<40x128xbf16>
    %cst_23 = arith.constant dense<0.000000e+00> : vector<40x40xf32>
    %49 = tpu.matmul %44, %46, %cst_23 {dimension_numbers = #tpu.dot_dimension_numbers<[1], [1], [0], [0], [0, 0, 1, 0], [], []>} : vector<40x128xbf16>, vector<40x128xbf16>, vector<40x40xf32> -> vector<40x40xf32>
    %50 = arith.addf %49, %41 : vector<40x40xf32>
    %cst_24 = arith.constant dense<0xFF800000> : vector<40xf32>
    %51 = vector.multi_reduction <maximumf>, %50, %cst_24 [1] : vector<40x40xf32> to vector<40xf32>
    %52 = vector.shape_cast %51 : vector<40xf32> to vector<40x1xf32>
    %53 = vector.broadcast %52 : vector<40x1xf32> to vector<40x40xf32>
    %54 = arith.subf %50, %53 : vector<40x40xf32>
    %55 = math.exp %54 : vector<40x40xf32>
    %cst_25 = arith.constant dense<0.000000e+00> : vector<40xf32>
    %56 = vector.multi_reduction <add>, %55, %cst_25 [1] : vector<40x40xf32> to vector<40xf32>
    %57 = vector.shape_cast %56 : vector<40xf32> to vector<40x1xf32>
    %58 = tpu.reciprocal %57 {approx = true} : vector<40x1xf32> -> vector<40x1xf32>
    %59 = vector.broadcast %58 : vector<40x1xf32> to vector<40x40xf32>
    %60 = arith.mulf %55, %59 : vector<40x40xf32>
    %61 = arith.truncf %60 : vector<40x40xf32> to vector<40x40xbf16>
    %cst_26 = arith.constant dense<0.000000e+00> : vector<40x128xf32>
    %62 = tpu.matmul %61, %48, %cst_26 {dimension_numbers = #tpu.dot_dimension_numbers<[1], [0], [0], [1], [0, 0, 1, 1], [], []>} : vector<40x40xbf16>, vector<40x128xbf16>, vector<40x128xf32> -> vector<40x128xf32>
    %63 = vector.extract_strided_slice %62 {offsets = [0, 0], sizes = [8, 128], strides = [1, 1]} : vector<40x128xf32> to vector<8x128xf32>
    %64 = vector.extract_strided_slice %62 {offsets = [8, 0], sizes = [8, 128], strides = [1, 1]} : vector<40x128xf32> to vector<8x128xf32>
    %65 = arith.addf %63, %64 : vector<8x128xf32>
    %66 = vector.extract_strided_slice %62 {offsets = [16, 0], sizes = [8, 128], strides = [1, 1]} : vector<40x128xf32> to vector<8x128xf32>
    %67 = arith.addf %65, %66 : vector<8x128xf32>
    %68 = vector.extract_strided_slice %62 {offsets = [24, 0], sizes = [8, 128], strides = [1, 1]} : vector<40x128xf32> to vector<8x128xf32>
    %69 = arith.addf %67, %68 : vector<8x128xf32>
    %70 = vector.extract_strided_slice %62 {offsets = [32, 0], sizes = [8, 128], strides = [1, 1]} : vector<40x128xf32> to vector<8x128xf32>
    %71 = arith.addf %69, %70 : vector<8x128xf32>
    %72 = arith.truncf %71 : vector<8x128xf32> to vector<8x128xbf16>
    %c0_27 = arith.constant 0 : index
    %c0_28 = arith.constant 0 : index
    %73 = vector.load %arg4[%c0_27, %c0_28] : memref<128x512xbf16, #tpu.memory_space<vmem>>, vector<128x128xbf16>
    %cst_29 = arith.constant dense<0.000000e+00> : vector<8x128xf32>
    %74 = tpu.matmul %72, %73, %cst_29 {dimension_numbers = #tpu.dot_dimension_numbers<[1], [0], [0], [1], [0, 0, 1, 1], [], []>} : vector<8x128xbf16>, vector<128x128xbf16>, vector<8x128xf32> -> vector<8x128xf32>
    %75 = arith.addf %42, %74 : vector<8x128xf32>
    %76 = vector.extract_strided_slice %24 {offsets = [0, 128], sizes = [40, 128], strides = [1, 1]} : vector<40x1536xf32> to vector<40x128xf32>
    %77 = arith.truncf %76 : vector<40x128xf32> to vector<40x128xbf16>
    %78 = vector.extract_strided_slice %24 {offsets = [0, 640], sizes = [40, 128], strides = [1, 1]} : vector<40x1536xf32> to vector<40x128xf32>
    %79 = arith.truncf %78 : vector<40x128xf32> to vector<40x128xbf16>
    %80 = vector.extract_strided_slice %24 {offsets = [0, 1152], sizes = [40, 128], strides = [1, 1]} : vector<40x1536xf32> to vector<40x128xf32>
    %81 = arith.truncf %80 : vector<40x128xf32> to vector<40x128xbf16>
    %cst_30 = arith.constant dense<0.000000e+00> : vector<40x40xf32>
    %82 = tpu.matmul %77, %79, %cst_30 {dimension_numbers = #tpu.dot_dimension_numbers<[1], [1], [0], [0], [0, 0, 1, 0], [], []>} : vector<40x128xbf16>, vector<40x128xbf16>, vector<40x40xf32> -> vector<40x40xf32>
    %83 = arith.addf %82, %41 : vector<40x40xf32>
    %cst_31 = arith.constant dense<0xFF800000> : vector<40xf32>
    %84 = vector.multi_reduction <maximumf>, %83, %cst_31 [1] : vector<40x40xf32> to vector<40xf32>
    %85 = vector.shape_cast %84 : vector<40xf32> to vector<40x1xf32>
    %86 = vector.broadcast %85 : vector<40x1xf32> to vector<40x40xf32>
    %87 = arith.subf %83, %86 : vector<40x40xf32>
    %88 = math.exp %87 : vector<40x40xf32>
    %cst_32 = arith.constant dense<0.000000e+00> : vector<40xf32>
    %89 = vector.multi_reduction <add>, %88, %cst_32 [1] : vector<40x40xf32> to vector<40xf32>
    %90 = vector.shape_cast %89 : vector<40xf32> to vector<40x1xf32>
    %91 = tpu.reciprocal %90 {approx = true} : vector<40x1xf32> -> vector<40x1xf32>
    %92 = vector.broadcast %91 : vector<40x1xf32> to vector<40x40xf32>
    %93 = arith.mulf %88, %92 : vector<40x40xf32>
    %94 = arith.truncf %93 : vector<40x40xf32> to vector<40x40xbf16>
    %cst_33 = arith.constant dense<0.000000e+00> : vector<40x128xf32>
    %95 = tpu.matmul %94, %81, %cst_33 {dimension_numbers = #tpu.dot_dimension_numbers<[1], [0], [0], [1], [0, 0, 1, 1], [], []>} : vector<40x40xbf16>, vector<40x128xbf16>, vector<40x128xf32> -> vector<40x128xf32>
    %96 = vector.extract_strided_slice %95 {offsets = [0, 0], sizes = [8, 128], strides = [1, 1]} : vector<40x128xf32> to vector<8x128xf32>
    %97 = vector.extract_strided_slice %95 {offsets = [8, 0], sizes = [8, 128], strides = [1, 1]} : vector<40x128xf32> to vector<8x128xf32>
    %98 = arith.addf %96, %97 : vector<8x128xf32>
    %99 = vector.extract_strided_slice %95 {offsets = [16, 0], sizes = [8, 128], strides = [1, 1]} : vector<40x128xf32> to vector<8x128xf32>
    %100 = arith.addf %98, %99 : vector<8x128xf32>
    %101 = vector.extract_strided_slice %95 {offsets = [24, 0], sizes = [8, 128], strides = [1, 1]} : vector<40x128xf32> to vector<8x128xf32>
    %102 = arith.addf %100, %101 : vector<8x128xf32>
    %103 = vector.extract_strided_slice %95 {offsets = [32, 0], sizes = [8, 128], strides = [1, 1]} : vector<40x128xf32> to vector<8x128xf32>
    %104 = arith.addf %102, %103 : vector<8x128xf32>
    %105 = arith.truncf %104 : vector<8x128xf32> to vector<8x128xbf16>
    %c0_34 = arith.constant 0 : index
    %c128 = arith.constant 128 : index
    %106 = vector.load %arg4[%c0_34, %c128] : memref<128x512xbf16, #tpu.memory_space<vmem>>, vector<128x128xbf16>
    %cst_35 = arith.constant dense<0.000000e+00> : vector<8x128xf32>
    %107 = tpu.matmul %105, %106, %cst_35 {dimension_numbers = #tpu.dot_dimension_numbers<[1], [0], [0], [1], [0, 0, 1, 1], [], []>} : vector<8x128xbf16>, vector<128x128xbf16>, vector<8x128xf32> -> vector<8x128xf32>
    %108 = arith.addf %75, %107 : vector<8x128xf32>
    %109 = vector.extract_strided_slice %24 {offsets = [0, 256], sizes = [40, 128], strides = [1, 1]} : vector<40x1536xf32> to vector<40x128xf32>
    %110 = arith.truncf %109 : vector<40x128xf32> to vector<40x128xbf16>
    %111 = vector.extract_strided_slice %24 {offsets = [0, 768], sizes = [40, 128], strides = [1, 1]} : vector<40x1536xf32> to vector<40x128xf32>
    %112 = arith.truncf %111 : vector<40x128xf32> to vector<40x128xbf16>
    %113 = vector.extract_strided_slice %24 {offsets = [0, 1280], sizes = [40, 128], strides = [1, 1]} : vector<40x1536xf32> to vector<40x128xf32>
    %114 = arith.truncf %113 : vector<40x128xf32> to vector<40x128xbf16>
    %cst_36 = arith.constant dense<0.000000e+00> : vector<40x40xf32>
    %115 = tpu.matmul %110, %112, %cst_36 {dimension_numbers = #tpu.dot_dimension_numbers<[1], [1], [0], [0], [0, 0, 1, 0], [], []>} : vector<40x128xbf16>, vector<40x128xbf16>, vector<40x40xf32> -> vector<40x40xf32>
    %116 = arith.addf %115, %41 : vector<40x40xf32>
    %cst_37 = arith.constant dense<0xFF800000> : vector<40xf32>
    %117 = vector.multi_reduction <maximumf>, %116, %cst_37 [1] : vector<40x40xf32> to vector<40xf32>
    %118 = vector.shape_cast %117 : vector<40xf32> to vector<40x1xf32>
    %119 = vector.broadcast %118 : vector<40x1xf32> to vector<40x40xf32>
    %120 = arith.subf %116, %119 : vector<40x40xf32>
    %121 = math.exp %120 : vector<40x40xf32>
    %cst_38 = arith.constant dense<0.000000e+00> : vector<40xf32>
    %122 = vector.multi_reduction <add>, %121, %cst_38 [1] : vector<40x40xf32> to vector<40xf32>
    %123 = vector.shape_cast %122 : vector<40xf32> to vector<40x1xf32>
    %124 = tpu.reciprocal %123 {approx = true} : vector<40x1xf32> -> vector<40x1xf32>
    %125 = vector.broadcast %124 : vector<40x1xf32> to vector<40x40xf32>
    %126 = arith.mulf %121, %125 : vector<40x40xf32>
    %127 = arith.truncf %126 : vector<40x40xf32> to vector<40x40xbf16>
    %cst_39 = arith.constant dense<0.000000e+00> : vector<40x128xf32>
    %128 = tpu.matmul %127, %114, %cst_39 {dimension_numbers = #tpu.dot_dimension_numbers<[1], [0], [0], [1], [0, 0, 1, 1], [], []>} : vector<40x40xbf16>, vector<40x128xbf16>, vector<40x128xf32> -> vector<40x128xf32>
    %129 = vector.extract_strided_slice %128 {offsets = [0, 0], sizes = [8, 128], strides = [1, 1]} : vector<40x128xf32> to vector<8x128xf32>
    %130 = vector.extract_strided_slice %128 {offsets = [8, 0], sizes = [8, 128], strides = [1, 1]} : vector<40x128xf32> to vector<8x128xf32>
    %131 = arith.addf %129, %130 : vector<8x128xf32>
    %132 = vector.extract_strided_slice %128 {offsets = [16, 0], sizes = [8, 128], strides = [1, 1]} : vector<40x128xf32> to vector<8x128xf32>
    %133 = arith.addf %131, %132 : vector<8x128xf32>
    %134 = vector.extract_strided_slice %128 {offsets = [24, 0], sizes = [8, 128], strides = [1, 1]} : vector<40x128xf32> to vector<8x128xf32>
    %135 = arith.addf %133, %134 : vector<8x128xf32>
    %136 = vector.extract_strided_slice %128 {offsets = [32, 0], sizes = [8, 128], strides = [1, 1]} : vector<40x128xf32> to vector<8x128xf32>
    %137 = arith.addf %135, %136 : vector<8x128xf32>
    %138 = arith.truncf %137 : vector<8x128xf32> to vector<8x128xbf16>
    %c0_40 = arith.constant 0 : index
    %c256 = arith.constant 256 : index
    %139 = vector.load %arg4[%c0_40, %c256] : memref<128x512xbf16, #tpu.memory_space<vmem>>, vector<128x128xbf16>
    %cst_41 = arith.constant dense<0.000000e+00> : vector<8x128xf32>
    %140 = tpu.matmul %138, %139, %cst_41 {dimension_numbers = #tpu.dot_dimension_numbers<[1], [0], [0], [1], [0, 0, 1, 1], [], []>} : vector<8x128xbf16>, vector<128x128xbf16>, vector<8x128xf32> -> vector<8x128xf32>
    %141 = arith.addf %108, %140 : vector<8x128xf32>
    %142 = vector.extract_strided_slice %24 {offsets = [0, 384], sizes = [40, 128], strides = [1, 1]} : vector<40x1536xf32> to vector<40x128xf32>
    %143 = arith.truncf %142 : vector<40x128xf32> to vector<40x128xbf16>
    %144 = vector.extract_strided_slice %24 {offsets = [0, 896], sizes = [40, 128], strides = [1, 1]} : vector<40x1536xf32> to vector<40x128xf32>
    %145 = arith.truncf %144 : vector<40x128xf32> to vector<40x128xbf16>
    %146 = vector.extract_strided_slice %24 {offsets = [0, 1408], sizes = [40, 128], strides = [1, 1]} : vector<40x1536xf32> to vector<40x128xf32>
    %147 = arith.truncf %146 : vector<40x128xf32> to vector<40x128xbf16>
    %cst_42 = arith.constant dense<0.000000e+00> : vector<40x40xf32>
    %148 = tpu.matmul %143, %145, %cst_42 {dimension_numbers = #tpu.dot_dimension_numbers<[1], [1], [0], [0], [0, 0, 1, 0], [], []>} : vector<40x128xbf16>, vector<40x128xbf16>, vector<40x40xf32> -> vector<40x40xf32>
    %149 = arith.addf %148, %41 : vector<40x40xf32>
    %cst_43 = arith.constant dense<0xFF800000> : vector<40xf32>
    %150 = vector.multi_reduction <maximumf>, %149, %cst_43 [1] : vector<40x40xf32> to vector<40xf32>
    %151 = vector.shape_cast %150 : vector<40xf32> to vector<40x1xf32>
    %152 = vector.broadcast %151 : vector<40x1xf32> to vector<40x40xf32>
    %153 = arith.subf %149, %152 : vector<40x40xf32>
    %154 = math.exp %153 : vector<40x40xf32>
    %cst_44 = arith.constant dense<0.000000e+00> : vector<40xf32>
    %155 = vector.multi_reduction <add>, %154, %cst_44 [1] : vector<40x40xf32> to vector<40xf32>
    %156 = vector.shape_cast %155 : vector<40xf32> to vector<40x1xf32>
    %157 = tpu.reciprocal %156 {approx = true} : vector<40x1xf32> -> vector<40x1xf32>
    %158 = vector.broadcast %157 : vector<40x1xf32> to vector<40x40xf32>
    %159 = arith.mulf %154, %158 : vector<40x40xf32>
    %160 = arith.truncf %159 : vector<40x40xf32> to vector<40x40xbf16>
    %cst_45 = arith.constant dense<0.000000e+00> : vector<40x128xf32>
    %161 = tpu.matmul %160, %147, %cst_45 {dimension_numbers = #tpu.dot_dimension_numbers<[1], [0], [0], [1], [0, 0, 1, 1], [], []>} : vector<40x40xbf16>, vector<40x128xbf16>, vector<40x128xf32> -> vector<40x128xf32>
    %162 = vector.extract_strided_slice %161 {offsets = [0, 0], sizes = [8, 128], strides = [1, 1]} : vector<40x128xf32> to vector<8x128xf32>
    %163 = vector.extract_strided_slice %161 {offsets = [8, 0], sizes = [8, 128], strides = [1, 1]} : vector<40x128xf32> to vector<8x128xf32>
    %164 = arith.addf %162, %163 : vector<8x128xf32>
    %165 = vector.extract_strided_slice %161 {offsets = [16, 0], sizes = [8, 128], strides = [1, 1]} : vector<40x128xf32> to vector<8x128xf32>
    %166 = arith.addf %164, %165 : vector<8x128xf32>
    %167 = vector.extract_strided_slice %161 {offsets = [24, 0], sizes = [8, 128], strides = [1, 1]} : vector<40x128xf32> to vector<8x128xf32>
    %168 = arith.addf %166, %167 : vector<8x128xf32>
    %169 = vector.extract_strided_slice %161 {offsets = [32, 0], sizes = [8, 128], strides = [1, 1]} : vector<40x128xf32> to vector<8x128xf32>
    %170 = arith.addf %168, %169 : vector<8x128xf32>
    %171 = arith.truncf %170 : vector<8x128xf32> to vector<8x128xbf16>
    %c0_46 = arith.constant 0 : index
    %c384 = arith.constant 384 : index
    %172 = vector.load %arg4[%c0_46, %c384] : memref<128x512xbf16, #tpu.memory_space<vmem>>, vector<128x128xbf16>
    %cst_47 = arith.constant dense<0.000000e+00> : vector<8x128xf32>
    %173 = tpu.matmul %171, %172, %cst_47 {dimension_numbers = #tpu.dot_dimension_numbers<[1], [0], [0], [1], [0, 0, 1, 1], [], []>} : vector<8x128xbf16>, vector<128x128xbf16>, vector<8x128xf32> -> vector<8x128xf32>
    %174 = arith.addf %141, %173 : vector<8x128xf32>
    %c2 = arith.constant 2 : index
    %c0_48 = arith.constant 0 : index
    %175 = vector.load %arg6[%c2, %c0_48] : memref<8x1536xf32, #tpu.memory_space<vmem>>, vector<1x128xf32>
    %176 = vector.broadcast %175 : vector<1x128xf32> to vector<8x128xf32>
    %177 = arith.addf %174, %176 : vector<8x128xf32>
    %cst_49 = arith.constant 0.000000e+00 : f32
    %178 = vector.broadcast %cst_49 : f32 to vector<8x128xf32>
    %179 = arith.maximumf %177, %178 : vector<8x128xf32>
    %180 = arith.truncf %179 : vector<8x128xf32> to vector<8x128xbf16>
    %c0_50 = arith.constant 0 : index
    %c0_51 = arith.constant 0 : index
    %181 = vector.load %arg5[%c0_50, %c0_51] : memref<128x128xbf16, #tpu.memory_space<vmem>>, vector<128x128xbf16>
    %cst_52 = arith.constant dense<0.000000e+00> : vector<8x128xf32>
    %182 = tpu.matmul %180, %181, %cst_52 {dimension_numbers = #tpu.dot_dimension_numbers<[1], [0], [0], [1], [0, 0, 1, 1], [], []>} : vector<8x128xbf16>, vector<128x128xbf16>, vector<8x128xf32> -> vector<8x128xf32>
    %c3 = arith.constant 3 : index
    %c0_53 = arith.constant 0 : index
    %183 = vector.load %arg6[%c3, %c0_53] : memref<8x1536xf32, #tpu.memory_space<vmem>>, vector<1x128xf32>
    %184 = vector.broadcast %183 : vector<1x128xf32> to vector<8x128xf32>
    %185 = arith.addf %182, %184 : vector<8x128xf32>
    %c0_54 = arith.constant 0 : index
    %c0_55 = arith.constant 0 : index
    %c0_56 = arith.constant 0 : index
    %186 = vector.load %arg7[%c0_54, %c0_55, %c0_56] : memref<1x16x128xf32, #tpu.memory_space<vmem>>, vector<1x8x128xf32>
    %187 = vector.shape_cast %186 : vector<1x8x128xf32> to vector<8x128xf32>
    %188 = vector.shape_cast %177 : vector<8x128xf32> to vector<1x8x128xf32>
    tpu.vector_store %arg7[%c0_54, %c0_55, %c0_56], %188 {strides = array<i32>} : memref<1x16x128xf32, #tpu.memory_space<vmem>>, vector<1x8x128xf32>,
    %c0_57 = arith.constant 0 : index
    %c8_58 = arith.constant 8 : index
    %c0_59 = arith.constant 0 : index
    %189 = vector.load %arg7[%c0_57, %c8_58, %c0_59] : memref<1x16x128xf32, #tpu.memory_space<vmem>>, vector<1x8x128xf32>
    %190 = vector.shape_cast %189 : vector<1x8x128xf32> to vector<8x128xf32>
    %191 = vector.shape_cast %185 : vector<8x128xf32> to vector<1x8x128xf32>
    tpu.vector_store %arg7[%c0_57, %c8_58, %c0_59], %191 {strides = array<i32>} : memref<1x16x128xf32, #tpu.memory_space<vmem>>, vector<1x8x128xf32>,
    return
  }
  func.func @transform_0(%arg0: i32) -> (i32, i32, i32) {
    %c0_i32 = arith.constant 0 : i32
    %c0_i32_0 = arith.constant 0 : i32
    %c0_i32_1 = arith.constant 0 : i32
    return %arg0, %c0_i32, %c0_i32_0 : i32, i32, i32
  }
  func.func @transform_1(%arg0: i32) -> (i32, i32) {
    %c0_i32 = arith.constant 0 : i32
    %c0_i32_0 = arith.constant 0 : i32
    %c0_i32_1 = arith.constant 0 : i32
    return %c0_i32, %c0_i32_0 : i32, i32
  }
  func.func @transform_2(%arg0: i32) -> (i32, i32) {
    %c0_i32 = arith.constant 0 : i32
    %c0_i32_0 = arith.constant 0 : i32
    %c0_i32_1 = arith.constant 0 : i32
    return %c0_i32, %c0_i32_0 : i32, i32
  }
  func.func @transform_3(%arg0: i32) -> (i32, i32) {
    %c0_i32 = arith.constant 0 : i32
    %c0_i32_0 = arith.constant 0 : i32
    %c0_i32_1 = arith.constant 0 : i32
    return %c0_i32, %c0_i32_0 : i32, i32
  }
  func.func @transform_4(%arg0: i32) -> (i32, i32) {
    %c0_i32 = arith.constant 0 : i32
    %c0_i32_0 = arith.constant 0 : i32
    %c0_i32_1 = arith.constant 0 : i32
    return %c0_i32, %c0_i32_0 : i32, i32
  }
  func.func @transform_5(%arg0: i32) -> (i32, i32) {
    %c0_i32 = arith.constant 0 : i32
    %c0_i32_0 = arith.constant 0 : i32
    %c0_i32_1 = arith.constant 0 : i32
    return %c0_i32, %c0_i32_0 : i32, i32
  }
  func.func @transform_6(%arg0: i32) -> (i32, i32, i32) {
    %c0_i32 = arith.constant 0 : i32
    %c0_i32_0 = arith.constant 0 : i32
    %c0_i32_1 = arith.constant 0 : i32
    return %arg0, %c0_i32, %c0_i32_0 : i32, i32, i32
  }
}

</mosaic_0001>

<llo_original>
// kernel: cross_attention_flatten_2class_forward.1
$region0: #{cross_attention_flatten_2class_forward.1}
  #allocation0 [shape = 'u32[]', space=smem, size = 0x4, offset = 0x4, fixed_abs, tag = 'smem constant byte address 0x4 - core index']
  #allocation1 [shape = 'u32[144,128]{1,0:T(1,128)}', space=vmem, size = 0x12000, scoped, tag = 'internal scratch']
  #allocation2 [shape = 'f32[40,128]{1,0:T(8,128)}', space=vmem, size = 0x5000, scoped, tag = 'scratch operand']
  %s0 = inlined_call_operand.vmem [shape: bf16[1,8,512], index: 0, kind: input, shape index: {}]
  %s1 = inlined_call_operand.hbm [shape: bf16[512,640], index: 1, kind: input, shape index: {}]
  %s2 = inlined_call_operand.hbm [shape: bf16[128,1536], index: 2, kind: input, shape index: {}]
  %s3 = inlined_call_operand.hbm [shape: bf16[128,512], index: 3, kind: input, shape index: {}]
  %s4 = inlined_call_operand.hbm [shape: bf16[128,128], index: 4, kind: input, shape index: {}]
  %s5 = inlined_call_operand.vmem [shape: f32[8,1536], index: 5, kind: input, shape index: {}]
  %s6 = inlined_call_operand.vmem [shape: f32[1,16,128], index: 6, kind: output, shape index: {}]
  %s7 = sld [smem:[#allocation0]]
  $region50: #{cross_attention_flatten_2class_forward.1} parent=0
    _
  %s9 = ssub.s32 1, %s7
  %s10 = scalar_select 0, %s9, %s7
  $region1: #{cross_attention_flatten_2class_forward.1} parent=0
    #allocation3 [shape = 'u8[655360]{0}', space=vmem, size = 0xa0000, scoped, tag = 'input window, operand 1, single buffered']
    #allocation4 [shape = 's32[1]{0}', space=sflag, size = 0x4, scoped, tag = 'scoped memory for cross_attention_flatten_2class_forward.1']
    #allocation5 [shape = 'u8[393216]{0}', space=vmem, size = 0x60000, scoped, tag = 'input window, operand 2, single buffered']
    #allocation6 [shape = 's32[1]{0}', space=sflag, size = 0x4, scoped, tag = 'scoped memory for cross_attention_flatten_2class_forward.1']
    #allocation7 [shape = 'u8[131072]{0}', space=vmem, size = 0x20000, scoped, tag = 'input window, operand 3, single buffered']
    #allocation8 [shape = 'u8[32768]{0}', space=vmem, size = 0x8000, scoped, tag = 'input window, operand 4, single buffered']
    #allocation9 [shape = 's32[1]{0}', space=sflag, size = 0x4, scoped, tag = 'scoped memory for cross_attention_flatten_2class_forward.1']
    %11 = vsyncpa [#allocation4], 0
    %12 = vsyncpa [#allocation6], 0
    %13 = vsyncpa [#allocation9], 0
    // Predicated region
    $region2: #{cross_attention_flatten_2class_forward.1} parent=1 // pred_check
      _
    $region3: #{cross_attention_flatten_2class_forward.1} parent=1 // pred_check_branch
      %15 = sbr.rel (0) target = $region5
    $region4: #{cross_attention_flatten_2class_forward.1} parent=1 // pred_region
      _
    $region5: #{cross_attention_flatten_2class_forward.1} parent=1 // pred_fallthru
      _
    // Predicated region
    $region6: #{cross_attention_flatten_2class_forward.1} parent=1 // pred_check
      _
    $region7: #{cross_attention_flatten_2class_forward.1} parent=1 // pred_check_branch
      %17 = sbr.rel (0) target = $region9
    $region8: #{cross_attention_flatten_2class_forward.1} parent=1 // pred_region
      %s19 = ssub.s32 20480, 20480
      %20 = vsyncadd [#allocation4], %s19
      %s21 = sshll.u32 [#allocation3], 4
      %s22 = int_to_ptr.vmem [resolvable:$true] %s21
      %27 = dma.hbm_to_vmem [thread:$0]  %s1, 20480, %s22, [#allocation4], 320, 320, 20
    $region9: #{cross_attention_flatten_2class_forward.1} parent=1 // pred_fallthru
      _
    // Predicated region
    $region10: #{cross_attention_flatten_2class_forward.1} parent=1 // pred_check
      _
    $region11: #{cross_attention_flatten_2class_forward.1} parent=1 // pred_check_branch
      %29 = sbr.rel (0) target = $region13
    $region12: #{cross_attention_flatten_2class_forward.1} parent=1 // pred_region
      %s31 = ssub.s32 12288, 12288
      %32 = vsyncadd [#allocation6], %s31
      %s33 = sshll.u32 [#allocation5], 4
      %s34 = int_to_ptr.vmem [resolvable:$true] %s33
      %39 = dma.hbm_to_vmem [thread:$0]  %s2, 12288, %s34, [#allocation6], 768, 768, 48
    $region13: #{cross_attention_flatten_2class_forward.1} parent=1 // pred_fallthru
      _
    // Predicated region
    $region14: #{cross_attention_flatten_2class_forward.1} parent=1 // pred_check
      _
    $region15: #{cross_attention_flatten_2class_forward.1} parent=1 // pred_check_branch
      %41 = sbr.rel (0) target = $region17
    $region16: #{cross_attention_flatten_2class_forward.1} parent=1 // pred_region
      %s43 = ssub.s32 4096, 4096
      %44 = vsyncadd [#allocation6], %s43
      %s45 = sshll.u32 [#allocation7], 4
      %s46 = int_to_ptr.vmem [resolvable:$true] %s45
      %51 = dma.hbm_to_vmem [thread:$0]  %s3, 4096, %s46, [#allocation6], 256, 256, 16
    $region17: #{cross_attention_flatten_2class_forward.1} parent=1 // pred_fallthru
      _
    // Predicated region
    $region18: #{cross_attention_flatten_2class_forward.1} parent=1 // pred_check
      _
    $region19: #{cross_attention_flatten_2class_forward.1} parent=1 // pred_check_branch
      %53 = sbr.rel (0) target = $region21
    $region20: #{cross_attention_flatten_2class_forward.1} parent=1 // pred_region
      %s55 = ssub.s32 1024, 1024
      %56 = vsyncadd [#allocation9], %s55
      %s57 = sshll.u32 [#allocation8], 4
      %s58 = int_to_ptr.vmem [resolvable:$true] %s57
      %63 = dma.hbm_to_vmem [thread:$0]  %s4, 1024, %s58, [#allocation9], 64, 64, 4
    $region21: #{cross_attention_flatten_2class_forward.1} parent=1 // pred_fallthru
      _
    // Predicated region
    $region22: #{cross_attention_flatten_2class_forward.1} parent=1 // pred_check
      _
    $region23: #{cross_attention_flatten_2class_forward.1} parent=1 // pred_check_branch
      %65 = sbr.rel (0) target = $region25
    $region24: #{cross_attention_flatten_2class_forward.1} parent=1 // pred_region
      _
    $region25: #{cross_attention_flatten_2class_forward.1} parent=1 // pred_fallthru
      _
    // Predicated region
    $region26: #{cross_attention_flatten_2class_forward.1} parent=1 // pred_check
      _
    $region27: #{cross_attention_flatten_2class_forward.1} parent=1 // pred_check_branch
      %67 = sbr.rel (0) target = $region29
    $region28: #{cross_attention_flatten_2class_forward.1} parent=1 // pred_region
      %68 = dma.done [#allocation4], 20480
    $region29: #{cross_attention_flatten_2class_forward.1} parent=1 // pred_fallthru
      _
    // Predicated region
    $region30: #{cross_attention_flatten_2class_forward.1} parent=1 // pred_check
      _
    $region31: #{cross_attention_flatten_2class_forward.1} parent=1 // pred_check_branch
      %70 = sbr.rel (0) target = $region33
    $region32: #{cross_attention_flatten_2class_forward.1} parent=1 // pred_region
      %71 = dma.done [#allocation6], 12288
    $region33: #{cross_attention_flatten_2class_forward.1} parent=1 // pred_fallthru
      _
    // Predicated region
    $region34: #{cross_attention_flatten_2class_forward.1} parent=1 // pred_check
      _
    $region35: #{cross_attention_flatten_2class_forward.1} parent=1 // pred_check_branch
      %73 = sbr.rel (0) target = $region37
    $region36: #{cross_attention_flatten_2class_forward.1} parent=1 // pred_region
      %74 = dma.done [#allocation6], 4096
    $region37: #{cross_attention_flatten_2class_forward.1} parent=1 // pred_fallthru
      _
    // Predicated region
    $region38: #{cross_attention_flatten_2class_forward.1} parent=1 // pred_check
      _
    $region39: #{cross_attention_flatten_2class_forward.1} parent=1 // pred_check_branch
      %76 = sbr.rel (0) target = $region41
    $region40: #{cross_attention_flatten_2class_forward.1} parent=1 // pred_region
      %77 = dma.done [#allocation9], 1024
    $region41: #{cross_attention_flatten_2class_forward.1} parent=1 // pred_fallthru
      _
    %v79 = vld [vmem:[%s0] sm:$0xff]
    %v80 = vld [vmem:[%s0 + $0x8] sm:$0xff]
    %v81 = vld [vmem:[#allocation3] sm:$0xff]
    %v82 = vld [vmem:[#allocation3 + $0x8] sm:$0xff]
    %v83 = vld [vmem:[#allocation3 + $0x10] sm:$0xf]
    %v84 = vld [vmem:[#allocation3 + $0x14] sm:$0xff]
    %v85 = vld [vmem:[#allocation3 + $0x1c] sm:$0xff]
    %v86 = vld [vmem:[#allocation3 + $0x24] sm:$0xf]
    %v87 = vld [vmem:[#allocation3 + $0x28] sm:$0xff]
    %v88 = vld [vmem:[#allocation3 + $0x30] sm:$0xff]
    %v89 = vld [vmem:[#allocation3 + $0x38] sm:$0xf]
    %v90 = vld [vmem:[#allocation3 + $0x3c] sm:$0xff]
    %v91 = vld [vmem:[#allocation3 + $0x44] sm:$0xff]
    %v92 = vld [vmem:[#allocation3 + $0x4c] sm:$0xf]
    %v93 = vld [vmem:[#allocation3 + $0x50] sm:$0xff]
    %v94 = vld [vmem:[#allocation3 + $0x58] sm:$0xff]
    %v95 = vld [vmem:[#allocation3 + $0x60] sm:$0xf]
    %v96 = vld [vmem:[#allocation3 + $0x64] sm:$0xff]
    %v97 = vld [vmem:[#allocation3 + $0x6c] sm:$0xff]
    %v98 = vld [vmem:[#allocation3 + $0x74] sm:$0xf]
    %v99 = vld [vmem:[#allocation3 + $0x78] sm:$0xff]
    %v100 = vld [vmem:[#allocation3 + $0x80] sm:$0xff]
    %v101 = vld [vmem:[#allocation3 + $0x88] sm:$0xf]
    %v102 = vld [vmem:[#allocation3 + $0x8c] sm:$0xff]
    %v103 = vld [vmem:[#allocation3 + $0x94] sm:$0xff]
    %v104 = vld [vmem:[#allocation3 + $0x9c] sm:$0xf]
    %v105 = vld [vmem:[#allocation3 + $0xa0] sm:$0xff]
    %v106 = vld [vmem:[#allocation3 + $0xa8] sm:$0xff]
    %v107 = vld [vmem:[#allocation3 + $0xb0] sm:$0xf]
    %v108 = vld [vmem:[#allocation3 + $0xb4] sm:$0xff]
    %v109 = vld [vmem:[#allocation3 + $0xbc] sm:$0xff]
    %v110 = vld [vmem:[#allocation3 + $0xc4] sm:$0xf]
    %v111 = vld [vmem:[#allocation3 + $0xc8] sm:$0xff]
    %v112 = vld [vmem:[#allocation3 + $0xd0] sm:$0xff]
    %v113 = vld [vmem:[#allocation3 + $0xd8] sm:$0xf]
    %v114 = vld [vmem:[#allocation3 + $0xdc] sm:$0xff]
    %v115 = vld [vmem:[#allocation3 + $0xe4] sm:$0xff]
    %v116 = vld [vmem:[#allocation3 + $0xec] sm:$0xf]
    %v117 = vld [vmem:[#allocation3 + $0xf0] sm:$0xff]
    %v118 = vld [vmem:[#allocation3 + $0xf8] sm:$0xff]
    %v119 = vld [vmem:[#allocation3 + $0x100] sm:$0xf]
    %v120 = vld [vmem:[#allocation3 + $0x104] sm:$0xff]
    %v121 = vld [vmem:[#allocation3 + $0x10c] sm:$0xff]
    %v122 = vld [vmem:[#allocation3 + $0x114] sm:$0xf]
    %v123 = vld [vmem:[#allocation3 + $0x118] sm:$0xff]
    %v124 = vld [vmem:[#allocation3 + $0x120] sm:$0xff]
    %v125 = vld [vmem:[#allocation3 + $0x128] sm:$0xf]
    %v126 = vld [vmem:[#allocation3 + $0x12c] sm:$0xff]
    %v127 = vld [vmem:[#allocation3 + $0x134] sm:$0xff]
    %v128 = vld [vmem:[#allocation3 + $0x13c] sm:$0xf]
    %v129 = vld [vmem:[#allocation3 + $0x140] sm:$0xff]
    %v130 = vld [vmem:[#allocation3 + $0x148] sm:$0xff]
    %v131 = vld [vmem:[#allocation3 + $0x150] sm:$0xf]
    %v132 = vld [vmem:[#allocation3 + $0x154] sm:$0xff]
    %v133 = vld [vmem:[#allocation3 + $0x15c] sm:$0xff]
    %v134 = vld [vmem:[#allocation3 + $0x164] sm:$0xf]
    %v135 = vld [vmem:[#allocation3 + $0x168] sm:$0xff]
    %v136 = vld [vmem:[#allocation3 + $0x170] sm:$0xff]
    %v137 = vld [vmem:[#allocation3 + $0x178] sm:$0xf]
    %v138 = vld [vmem:[#allocation3 + $0x17c] sm:$0xff]
    %v139 = vld [vmem:[#allocation3 + $0x184] sm:$0xff]
    %v140 = vld [vmem:[#allocation3 + $0x18c] sm:$0xf]
    %v141 = vld [vmem:[#allocation3 + $0x190] sm:$0xff]
    %v142 = vld [vmem:[#allocation3 + $0x198] sm:$0xff]
    %v143 = vld [vmem:[#allocation3 + $0x1a0] sm:$0xf]
    %v144 = vld [vmem:[#allocation3 + $0x1a4] sm:$0xff]
    %v145 = vld [vmem:[#allocation3 + $0x1ac] sm:$0xff]
    %v146 = vld [vmem:[#allocation3 + $0x1b4] sm:$0xf]
    %v147 = vld [vmem:[#allocation3 + $0x1b8] sm:$0xff]
    %v148 = vld [vmem:[#allocation3 + $0x1c0] sm:$0xff]
    %v149 = vld [vmem:[#allocation3 + $0x1c8] sm:$0xf]
    %v150 = vld [vmem:[#allocation3 + $0x1cc] sm:$0xff]
    %v151 = vld [vmem:[#allocation3 + $0x1d4] sm:$0xff]
    %v152 = vld [vmem:[#allocation3 + $0x1dc] sm:$0xf]
    %v153 = vld [vmem:[#allocation3 + $0x1e0] sm:$0xff]
    %v154 = vld [vmem:[#allocation3 + $0x1e8] sm:$0xff]
    %v155 = vld [vmem:[#allocation3 + $0x1f0] sm:$0xf]
    %v156 = vld [vmem:[#allocation3 + $0x1f4] sm:$0xff]
    %v157 = vld [vmem:[#allocation3 + $0x1fc] sm:$0xff]
    %v158 = vld [vmem:[#allocation3 + $0x204] sm:$0xf]
    %v159 = vld [vmem:[#allocation3 + $0x208] sm:$0xff]
    %v160 = vld [vmem:[#allocation3 + $0x210] sm:$0xff]
    %v161 = vld [vmem:[#allocation3 + $0x218] sm:$0xf]
    %v162 = vld [vmem:[#allocation3 + $0x21c] sm:$0xff]
    %v163 = vld [vmem:[#allocation3 + $0x224] sm:$0xff]
    %v164 = vld [vmem:[#allocation3 + $0x22c] sm:$0xf]
    %v165 = vld [vmem:[#allocation3 + $0x230] sm:$0xff]
    %v166 = vld [vmem:[#allocation3 + $0x238] sm:$0xff]
    %v167 = vld [vmem:[#allocation3 + $0x240] sm:$0xf]
    %v168 = vld [vmem:[#allocation3 + $0x244] sm:$0xff]
    %v169 = vld [vmem:[#allocation3 + $0x24c] sm:$0xff]
    %v170 = vld [vmem:[#allocation3 + $0x254] sm:$0xf]
    %v171 = vld [vmem:[#allocation3 + $0x258] sm:$0xff]
    %v172 = vld [vmem:[#allocation3 + $0x260] sm:$0xff]
    %v173 = vld [vmem:[#allocation3 + $0x268] sm:$0xf]
    %v174 = vld [vmem:[#allocation3 + $0x26c] sm:$0xff]
    %v175 = vld [vmem:[#allocation3 + $0x274] sm:$0xff]
    %v176 = vld [vmem:[#allocation3 + $0x27c] sm:$0xf]
    %v177 = vld [vmem:[#allocation3 + $0x280] sm:$0xff]
    %v178 = vld [vmem:[#allocation3 + $0x288] sm:$0xff]
    %v179 = vld [vmem:[#allocation3 + $0x290] sm:$0xf]
    %v180 = vld [vmem:[#allocation3 + $0x294] sm:$0xff]
    %v181 = vld [vmem:[#allocation3 + $0x29c] sm:$0xff]
    %v182 = vld [vmem:[#allocation3 + $0x2a4] sm:$0xf]
    %v183 = vld [vmem:[#allocation3 + $0x2a8] sm:$0xff]
    %v184 = vld [vmem:[#allocation3 + $0x2b0] sm:$0xff]
    %v185 = vld [vmem:[#allocation3 + $0x2b8] sm:$0xf]
    %v186 = vld [vmem:[#allocation3 + $0x2bc] sm:$0xff]
    %v187 = vld [vmem:[#allocation3 + $0x2c4] sm:$0xff]
    %v188 = vld [vmem:[#allocation3 + $0x2cc] sm:$0xf]
    %v189 = vld [vmem:[#allocation3 + $0x2d0] sm:$0xff]
    %v190 = vld [vmem:[#allocation3 + $0x2d8] sm:$0xff]
    %v191 = vld [vmem:[#allocation3 + $0x2e0] sm:$0xf]
    %v192 = vld [vmem:[#allocation3 + $0x2e4] sm:$0xff]
    %v193 = vld [vmem:[#allocation3 + $0x2ec] sm:$0xff]
    %v194 = vld [vmem:[#allocation3 + $0x2f4] sm:$0xf]
    %v195 = vld [vmem:[#allocation3 + $0x2f8] sm:$0xff]
    %v196 = vld [vmem:[#allocation3 + $0x300] sm:$0xff]
    %v197 = vld [vmem:[#allocation3 + $0x308] sm:$0xf]
    %v198 = vld [vmem:[#allocation3 + $0x30c] sm:$0xff]
    %v199 = vld [vmem:[#allocation3 + $0x314] sm:$0xff]
    %v200 = vld [vmem:[#allocation3 + $0x31c] sm:$0xf]
    %v201 = vld [vmem:[#allocation3 + $0x320] sm:$0xff]
    %v202 = vld [vmem:[#allocation3 + $0x328] sm:$0xff]
    %v203 = vld [vmem:[#allocation3 + $0x330] sm:$0xf]
    %v204 = vld [vmem:[#allocation3 + $0x334] sm:$0xff]
    %v205 = vld [vmem:[#allocation3 + $0x33c] sm:$0xff]
    %v206 = vld [vmem:[#allocation3 + $0x344] sm:$0xf]
    %v207 = vld [vmem:[#allocation3 + $0x348] sm:$0xff]
    %v208 = vld [vmem:[#allocation3 + $0x350] sm:$0xff]
    %v209 = vld [vmem:[#allocation3 + $0x358] sm:$0xf]
    %v210 = vld [vmem:[#allocation3 + $0x35c] sm:$0xff]
    %v211 = vld [vmem:[#allocation3 + $0x364] sm:$0xff]
    %v212 = vld [vmem:[#allocation3 + $0x36c] sm:$0xf]
    %v213 = vld [vmem:[#allocation3 + $0x370] sm:$0xff]
    %v214 = vld [vmem:[#allocation3 + $0x378] sm:$0xff]
    %v215 = vld [vmem:[#allocation3 + $0x380] sm:$0xf]
    %v216 = vld [vmem:[#allocation3 + $0x384] sm:$0xff]
    %v217 = vld [vmem:[#allocation3 + $0x38c] sm:$0xff]
    %v218 = vld [vmem:[#allocation3 + $0x394] sm:$0xf]
    %v219 = vld [vmem:[#allocation3 + $0x398] sm:$0xff]
    %v220 = vld [vmem:[#allocation3 + $0x3a0] sm:$0xff]
    %v221 = vld [vmem:[#allocation3 + $0x3a8] sm:$0xf]
    %v222 = vld [vmem:[#allocation3 + $0x3ac] sm:$0xff]
    %v223 = vld [vmem:[#allocation3 + $0x3b4] sm:$0xff]
    %v224 = vld [vmem:[#allocation3 + $0x3bc] sm:$0xf]
    %v225 = vld [vmem:[#allocation3 + $0x3c0] sm:$0xff]
    %v226 = vld [vmem:[#allocation3 + $0x3c8] sm:$0xff]
    %v227 = vld [vmem:[#allocation3 + $0x3d0] sm:$0xf]
    %v228 = vld [vmem:[#allocation3 + $0x3d4] sm:$0xff]
    %v229 = vld [vmem:[#allocation3 + $0x3dc] sm:$0xff]
    %v230 = vld [vmem:[#allocation3 + $0x3e4] sm:$0xf]
    %v231 = vld [vmem:[#allocation3 + $0x3e8] sm:$0xff]
    %v232 = vld [vmem:[#allocation3 + $0x3f0] sm:$0xff]
    %v233 = vld [vmem:[#allocation3 + $0x3f8] sm:$0xf]
    %v234 = vld [vmem:[#allocation3 + $0x3fc] sm:$0xff]
    %v235 = vld [vmem:[#allocation3 + $0x404] sm:$0xff]
    %v236 = vld [vmem:[#allocation3 + $0x40c] sm:$0xf]
    %v237 = vld [vmem:[#allocation3 + $0x410] sm:$0xff]
    %v238 = vld [vmem:[#allocation3 + $0x418] sm:$0xff]
    %v239 = vld [vmem:[#allocation3 + $0x420] sm:$0xf]
    %v240 = vld [vmem:[#allocation3 + $0x424] sm:$0xff]
    %v241 = vld [vmem:[#allocation3 + $0x42c] sm:$0xff]
    %v242 = vld [vmem:[#allocation3 + $0x434] sm:$0xf]
    %v243 = vld [vmem:[#allocation3 + $0x438] sm:$0xff]
    %v244 = vld [vmem:[#allocation3 + $0x440] sm:$0xff]
    %v245 = vld [vmem:[#allocation3 + $0x448] sm:$0xf]
    %v246 = vld [vmem:[#allocation3 + $0x44c] sm:$0xff]
    %v247 = vld [vmem:[#allocation3 + $0x454] sm:$0xff]
    %v248 = vld [vmem:[#allocation3 + $0x45c] sm:$0xf]
    %v249 = vld [vmem:[#allocation3 + $0x460] sm:$0xff]
    %v250 = vld [vmem:[#allocation3 + $0x468] sm:$0xff]
    %v251 = vld [vmem:[#allocation3 + $0x470] sm:$0xf]
    %v252 = vld [vmem:[#allocation3 + $0x474] sm:$0xff]
    %v253 = vld [vmem:[#allocation3 + $0x47c] sm:$0xff]
    %v254 = vld [vmem:[#allocation3 + $0x484] sm:$0xf]
    %v255 = vld [vmem:[#allocation3 + $0x488] sm:$0xff]
    %v256 = vld [vmem:[#allocation3 + $0x490] sm:$0xff]
    %v257 = vld [vmem:[#allocation3 + $0x498] sm:$0xf]
    %v258 = vld [vmem:[#allocation3 + $0x49c] sm:$0xff]
    %v259 = vld [vmem:[#allocation3 + $0x4a4] sm:$0xff]
    %v260 = vld [vmem:[#allocation3 + $0x4ac] sm:$0xf]
    %v261 = vld [vmem:[#allocation3 + $0x4b0] sm:$0xff]
    %v262 = vld [vmem:[#allocation3 + $0x4b8] sm:$0xff]
    %v263 = vld [vmem:[#allocation3 + $0x4c0] sm:$0xf]
    %v264 = vld [vmem:[#allocation3 + $0x4c4] sm:$0xff]
    %v265 = vld [vmem:[#allocation3 + $0x4cc] sm:$0xff]
    %v266 = vld [vmem:[#allocation3 + $0x4d4] sm:$0xf]
    %v267 = vld [vmem:[#allocation3 + $0x4d8] sm:$0xff]
    %v268 = vld [vmem:[#allocation3 + $0x4e0] sm:$0xff]
    %v269 = vld [vmem:[#allocation3 + $0x4e8] sm:$0xf]
    %v270 = vld [vmem:[#allocation3 + $0x4ec] sm:$0xff]
    %v271 = vld [vmem:[#allocation3 + $0x4f4] sm:$0xff]
    %v272 = vld [vmem:[#allocation3 + $0x4fc] sm:$0xf]
    %v273 = vld [vmem:[%s5] ss:$8 sm:$0xf]
    %v274 = vld [vmem:[%s5] ss:$8 sm:$0x10]
    %v275 = vor.u32 %v273, %v274
    %v277 = vlaneseq
    %v278 = vshrl.u32 %v277, 7
    %v279 = vsub.s32 0, %v278
    %v280 = vrot.slane %v275, %v279
    %v281 = vlaneseq
    %v282 = vshrl.u32 %v281, 7
    %v283 = vsub.s32 1, %v282
    %v284 = vrot.slane %v275, %v283
    %v285 = vlaneseq
    %v286 = vshrl.u32 %v285, 7
    %v287 = vsub.s32 2, %v286
    %v288 = vrot.slane %v275, %v287
    %v289 = vlaneseq
    %v290 = vshrl.u32 %v289, 7
    %v291 = vsub.s32 3, %v290
    %v292 = vrot.slane %v275, %v291
    %v293 = vlaneseq
    %v294 = vshrl.u32 %v293, 7
    %v295 = vsub.s32 4, %v294
    %v296 = vrot.slane %v275, %v295
    %v304 = vunpack.c.l.b16 %v79
    %v305 = vunpack.c.h.b16 %v79
    %v306 = vunpack.c.l.b16 %v80
    %v307 = vunpack.c.h.b16 %v80
    %v308 = vpack.c.b16 %v304, %v304
    %v309 = vpack.c.b16 %v305, %v305
    %v310 = vpack.c.b16 %v306, %v306
    %v311 = vpack.c.b16 %v307, %v307
    %v508 = vunpack.c.l.b16 %v81
    %v509 = vunpack.c.h.b16 %v81
    %v510 = vunpack.c.l.b16 %v82
    %v511 = vunpack.c.h.b16 %v82
    %v512 = vunpack.c.l.b16 %v83
    %v513 = vunpack.c.l.b16 %v84
    %v514 = vunpack.c.h.b16 %v84
    %v515 = vunpack.c.l.b16 %v85
    %v516 = vunpack.c.h.b16 %v85
    %v517 = vunpack.c.l.b16 %v86
    %v518 = vunpack.c.l.b16 %v87
    %v519 = vunpack.c.h.b16 %v87
    %v520 = vunpack.c.l.b16 %v88
    %v521 = vunpack.c.h.b16 %v88
    %v522 = vunpack.c.l.b16 %v89
    %v523 = vunpack.c.l.b16 %v90
    %v524 = vunpack.c.h.b16 %v90
    %v525 = vunpack.c.l.b16 %v91
    %v526 = vunpack.c.h.b16 %v91
    %v527 = vunpack.c.l.b16 %v92
    %v528 = vunpack.c.l.b16 %v93
    %v529 = vunpack.c.h.b16 %v93
    %v530 = vunpack.c.l.b16 %v94
    %v531 = vunpack.c.h.b16 %v94
    %v532 = vunpack.c.l.b16 %v95
    %v533 = vunpack.c.l.b16 %v96
    %v534 = vunpack.c.h.b16 %v96
    %v535 = vunpack.c.l.b16 %v97
    %v536 = vunpack.c.h.b16 %v97
    %v537 = vunpack.c.l.b16 %v98
    %v538 = vunpack.c.l.b16 %v99
    %v539 = vunpack.c.h.b16 %v99
    %v540 = vunpack.c.l.b16 %v100
    %v541 = vunpack.c.h.b16 %v100
    %v542 = vunpack.c.l.b16 %v101
    %v543 = vunpack.c.l.b16 %v102
    %v544 = vunpack.c.h.b16 %v102
    %v545 = vunpack.c.l.b16 %v103
    %v546 = vunpack.c.h.b16 %v103
    %v547 = vunpack.c.l.b16 %v104
    %v548 = vunpack.c.l.b16 %v105
    %v549 = vunpack.c.h.b16 %v105
    %v550 = vunpack.c.l.b16 %v106
    %v551 = vunpack.c.h.b16 %v106
    %v552 = vunpack.c.l.b16 %v107
    %v553 = vunpack.c.l.b16 %v108
    %v554 = vunpack.c.h.b16 %v108
    %v555 = vunpack.c.l.b16 %v109
    %v556 = vunpack.c.h.b16 %v109
    %v557 = vunpack.c.l.b16 %v110
    %v558 = vunpack.c.l.b16 %v111
    %v559 = vunpack.c.h.b16 %v111
    %v560 = vunpack.c.l.b16 %v112
    %v561 = vunpack.c.h.b16 %v112
    %v562 = vunpack.c.l.b16 %v113
    %v563 = vunpack.c.l.b16 %v114
    %v564 = vunpack.c.h.b16 %v114
    %v565 = vunpack.c.l.b16 %v115
    %v566 = vunpack.c.h.b16 %v115
    %v567 = vunpack.c.l.b16 %v116
    %v568 = vunpack.c.l.b16 %v117
    %v569 = vunpack.c.h.b16 %v117
    %v570 = vunpack.c.l.b16 %v118
    %v571 = vunpack.c.h.b16 %v118
    %v572 = vunpack.c.l.b16 %v119
    %v573 = vunpack.c.l.b16 %v120
    %v574 = vunpack.c.h.b16 %v120
    %v575 = vunpack.c.l.b16 %v121
    %v576 = vunpack.c.h.b16 %v121
    %v577 = vunpack.c.l.b16 %v122
    %v578 = vunpack.c.l.b16 %v123
    %v579 = vunpack.c.h.b16 %v123
    %v580 = vunpack.c.l.b16 %v124
    %v581 = vunpack.c.h.b16 %v124
    %v582 = vunpack.c.l.b16 %v125
    %v583 = vunpack.c.l.b16 %v126
    %v584 = vunpack.c.h.b16 %v126
    %v585 = vunpack.c.l.b16 %v127
    %v586 = vunpack.c.h.b16 %v127
    %v587 = vunpack.c.l.b16 %v128
    %v588 = vunpack.c.l.b16 %v129
    %v589 = vunpack.c.h.b16 %v129
    %v590 = vunpack.c.l.b16 %v130
    %v591 = vunpack.c.h.b16 %v130
    %v592 = vunpack.c.l.b16 %v131
    %v593 = vunpack.c.l.b16 %v132
    %v594 = vunpack.c.h.b16 %v132
    %v595 = vunpack.c.l.b16 %v133
    %v596 = vunpack.c.h.b16 %v133
    %v597 = vunpack.c.l.b16 %v134
    %v598 = vunpack.c.l.b16 %v135
    %v599 = vunpack.c.h.b16 %v135
    %v600 = vunpack.c.l.b16 %v136
    %v601 = vunpack.c.h.b16 %v136
    %v602 = vunpack.c.l.b16 %v137
    %v603 = vunpack.c.l.b16 %v138
    %v604 = vunpack.c.h.b16 %v138
    %v605 = vunpack.c.l.b16 %v139
    %v606 = vunpack.c.h.b16 %v139
    %v607 = vunpack.c.l.b16 %v140
    %v608 = vunpack.c.l.b16 %v141
    %v609 = vunpack.c.h.b16 %v141
    %v610 = vunpack.c.l.b16 %v142
    %v611 = vunpack.c.h.b16 %v142
    %v612 = vunpack.c.l.b16 %v143
    %v613 = vunpack.c.l.b16 %v144
    %v614 = vunpack.c.h.b16 %v144
    %v615 = vunpack.c.l.b16 %v145
    %v616 = vunpack.c.h.b16 %v145
    %v617 = vunpack.c.l.b16 %v146
    %v618 = vunpack.c.l.b16 %v147
    %v619 = vunpack.c.h.b16 %v147
    %v620 = vunpack.c.l.b16 %v148
    %v621 = vunpack.c.h.b16 %v148
    %v622 = vunpack.c.l.b16 %v149
    %v623 = vunpack.c.l.b16 %v150
    %v624 = vunpack.c.h.b16 %v150
    %v625 = vunpack.c.l.b16 %v151
    %v626 = vunpack.c.h.b16 %v151
    %v627 = vunpack.c.l.b16 %v152
    %v628 = vunpack.c.l.b16 %v153
    %v629 = vunpack.c.h.b16 %v153
    %v630 = vunpack.c.l.b16 %v154
    %v631 = vunpack.c.h.b16 %v154
    %v632 = vunpack.c.l.b16 %v155
    %v633 = vunpack.c.l.b16 %v156
    %v634 = vunpack.c.h.b16 %v156
    %v635 = vunpack.c.l.b16 %v157
    %v636 = vunpack.c.h.b16 %v157
    %v637 = vunpack.c.l.b16 %v158
    %v638 = vunpack.c.l.b16 %v159
    %v639 = vunpack.c.h.b16 %v159
    %v640 = vunpack.c.l.b16 %v160
    %v641 = vunpack.c.h.b16 %v160
    %v642 = vunpack.c.l.b16 %v161
    %v643 = vunpack.c.l.b16 %v162
    %v644 = vunpack.c.h.b16 %v162
    %v645 = vunpack.c.l.b16 %v163
    %v646 = vunpack.c.h.b16 %v163
    %v647 = vunpack.c.l.b16 %v164
    %v648 = vunpack.c.l.b16 %v165
    %v649 = vunpack.c.h.b16 %v165
    %v650 = vunpack.c.l.b16 %v166
    %v651 = vunpack.c.h.b16 %v166
    %v652 = vunpack.c.l.b16 %v167
    %v653 = vunpack.c.l.b16 %v168
    %v654 = vunpack.c.h.b16 %v168
    %v655 = vunpack.c.l.b16 %v169
    %v656 = vunpack.c.h.b16 %v169
    %v657 = vunpack.c.l.b16 %v170
    %v658 = vunpack.c.l.b16 %v171
    %v659 = vunpack.c.h.b16 %v171
    %v660 = vunpack.c.l.b16 %v172
    %v661 = vunpack.c.h.b16 %v172
    %v662 = vunpack.c.l.b16 %v173
    %v663 = vunpack.c.l.b16 %v174
    %v664 = vunpack.c.h.b16 %v174
    %v665 = vunpack.c.l.b16 %v175
    %v666 = vunpack.c.h.b16 %v175
    %v667 = vunpack.c.l.b16 %v176
    %v668 = vunpack.c.l.b16 %v177
    %v669 = vunpack.c.h.b16 %v177
    %v670 = vunpack.c.l.b16 %v178
    %v671 = vunpack.c.h.b16 %v178
    %v672 = vunpack.c.l.b16 %v179
    %v673 = vunpack.c.l.b16 %v180
    %v674 = vunpack.c.h.b16 %v180
    %v675 = vunpack.c.l.b16 %v181
    %v676 = vunpack.c.h.b16 %v181
    %v677 = vunpack.c.l.b16 %v182
    %v678 = vunpack.c.l.b16 %v183
    %v679 = vunpack.c.h.b16 %v183
    %v680 = vunpack.c.l.b16 %v184
    %v681 = vunpack.c.h.b16 %v184
    %v682 = vunpack.c.l.b16 %v185
    %v683 = vunpack.c.l.b16 %v186
    %v684 = vunpack.c.h.b16 %v186
    %v685 = vunpack.c.l.b16 %v187
    %v686 = vunpack.c.h.b16 %v187
    %v687 = vunpack.c.l.b16 %v188
    %v688 = vunpack.c.l.b16 %v189
    %v689 = vunpack.c.h.b16 %v189
    %v690 = vunpack.c.l.b16 %v190
    %v691 = vunpack.c.h.b16 %v190
    %v692 = vunpack.c.l.b16 %v191
    %v693 = vunpack.c.l.b16 %v192
    %v694 = vunpack.c.h.b16 %v192
    %v695 = vunpack.c.l.b16 %v193
    %v696 = vunpack.c.h.b16 %v193
    %v697 = vunpack.c.l.b16 %v194
    %v698 = vunpack.c.l.b16 %v195
    %v699 = vunpack.c.h.b16 %v195
    %v700 = vunpack.c.l.b16 %v196
    %v701 = vunpack.c.h.b16 %v196
    %v702 = vunpack.c.l.b16 %v197
    %v703 = vunpack.c.l.b16 %v198
    %v704 = vunpack.c.h.b16 %v198
    %v705 = vunpack.c.l.b16 %v199
    %v706 = vunpack.c.h.b16 %v199
    %v707 = vunpack.c.l.b16 %v200
    %v708 = vunpack.c.l.b16 %v201
    %v709 = vunpack.c.h.b16 %v201
    %v710 = vunpack.c.l.b16 %v202
    %v711 = vunpack.c.h.b16 %v202
    %v712 = vunpack.c.l.b16 %v203
    %v713 = vunpack.c.l.b16 %v204
    %v714 = vunpack.c.h.b16 %v204
    %v715 = vunpack.c.l.b16 %v205
    %v716 = vunpack.c.h.b16 %v205
    %v717 = vunpack.c.l.b16 %v206
    %v718 = vunpack.c.l.b16 %v207
    %v719 = vunpack.c.h.b16 %v207
    %v720 = vunpack.c.l.b16 %v208
    %v721 = vunpack.c.h.b16 %v208
    %v722 = vunpack.c.l.b16 %v209
    %v723 = vunpack.c.l.b16 %v210
    %v724 = vunpack.c.h.b16 %v210
    %v725 = vunpack.c.l.b16 %v211
    %v726 = vunpack.c.h.b16 %v211
    %v727 = vunpack.c.l.b16 %v212
    %v728 = vunpack.c.l.b16 %v213
    %v729 = vunpack.c.h.b16 %v213
    %v730 = vunpack.c.l.b16 %v214
    %v731 = vunpack.c.h.b16 %v214
    %v732 = vunpack.c.l.b16 %v215
    %v733 = vunpack.c.l.b16 %v216
    %v734 = vunpack.c.h.b16 %v216
    %v735 = vunpack.c.l.b16 %v217
    %v736 = vunpack.c.h.b16 %v217
    %v737 = vunpack.c.l.b16 %v218
    %v738 = vunpack.c.l.b16 %v219
    %v739 = vunpack.c.h.b16 %v219
    %v740 = vunpack.c.l.b16 %v220
    %v741 = vunpack.c.h.b16 %v220
    %v742 = vunpack.c.l.b16 %v221
    %v743 = vunpack.c.l.b16 %v222
    %v744 = vunpack.c.h.b16 %v222
    %v745 = vunpack.c.l.b16 %v223
    %v746 = vunpack.c.h.b16 %v223
    %v747 = vunpack.c.l.b16 %v224
    %v748 = vunpack.c.l.b16 %v225
    %v749 = vunpack.c.h.b16 %v225
    %v750 = vunpack.c.l.b16 %v226
    %v751 = vunpack.c.h.b16 %v226
    %v752 = vunpack.c.l.b16 %v227
    %v753 = vunpack.c.l.b16 %v228
    %v754 = vunpack.c.h.b16 %v228
    %v755 = vunpack.c.l.b16 %v229
    %v756 = vunpack.c.h.b16 %v229
    %v757 = vunpack.c.l.b16 %v230
    %v758 = vunpack.c.l.b16 %v231
    %v759 = vunpack.c.h.b16 %v231
    %v760 = vunpack.c.l.b16 %v232
    %v761 = vunpack.c.h.b16 %v232
    %v762 = vunpack.c.l.b16 %v233
    %v763 = vunpack.c.l.b16 %v234
    %v764 = vunpack.c.h.b16 %v234
    %v765 = vunpack.c.l.b16 %v235
    %v766 = vunpack.c.h.b16 %v235
    %v767 = vunpack.c.l.b16 %v236
    %v768 = vunpack.c.l.b16 %v237
    %v769 = vunpack.c.h.b16 %v237
    %v770 = vunpack.c.l.b16 %v238
    %v771 = vunpack.c.h.b16 %v238
    %v772 = vunpack.c.l.b16 %v239
    %v773 = vunpack.c.l.b16 %v240
    %v774 = vunpack.c.h.b16 %v240
    %v775 = vunpack.c.l.b16 %v241
    %v776 = vunpack.c.h.b16 %v241
    %v777 = vunpack.c.l.b16 %v242
    %v778 = vunpack.c.l.b16 %v243
    %v779 = vunpack.c.h.b16 %v243
    %v780 = vunpack.c.l.b16 %v244
    %v781 = vunpack.c.h.b16 %v244
    %v782 = vunpack.c.l.b16 %v245
    %v783 = vunpack.c.l.b16 %v246
    %v784 = vunpack.c.h.b16 %v246
    %v785 = vunpack.c.l.b16 %v247
    %v786 = vunpack.c.h.b16 %v247
    %v787 = vunpack.c.l.b16 %v248
    %v788 = vunpack.c.l.b16 %v249
    %v789 = vunpack.c.h.b16 %v249
    %v790 = vunpack.c.l.b16 %v250
    %v791 = vunpack.c.h.b16 %v250
    %v792 = vunpack.c.l.b16 %v251
    %v793 = vunpack.c.l.b16 %v252
    %v794 = vunpack.c.h.b16 %v252
    %v795 = vunpack.c.l.b16 %v253
    %v796 = vunpack.c.h.b16 %v253
    %v797 = vunpack.c.l.b16 %v254
    %v798 = vunpack.c.l.b16 %v255
    %v799 = vunpack.c.h.b16 %v255
    %v800 = vunpack.c.l.b16 %v256
    %v801 = vunpack.c.h.b16 %v256
    %v802 = vunpack.c.l.b16 %v257
    %v803 = vunpack.c.l.b16 %v258
    %v804 = vunpack.c.h.b16 %v258
    %v805 = vunpack.c.l.b16 %v259
    %v806 = vunpack.c.h.b16 %v259
    %v807 = vunpack.c.l.b16 %v260
    %v808 = vunpack.c.l.b16 %v261
    %v809 = vunpack.c.h.b16 %v261
    %v810 = vunpack.c.l.b16 %v262
    %v811 = vunpack.c.h.b16 %v262
    %v812 = vunpack.c.l.b16 %v263
    %v813 = vunpack.c.l.b16 %v264
    %v814 = vunpack.c.h.b16 %v264
    %v815 = vunpack.c.l.b16 %v265
    %v816 = vunpack.c.h.b16 %v265
    %v817 = vunpack.c.l.b16 %v266
    %v818 = vunpack.c.l.b16 %v267
    %v819 = vunpack.c.h.b16 %v267
    %v820 = vunpack.c.l.b16 %v268
    %v821 = vunpack.c.h.b16 %v268
    %v822 = vunpack.c.l.b16 %v269
    %v823 = vunpack.c.l.b16 %v270
    %v824 = vunpack.c.h.b16 %v270
    %v825 = vunpack.c.l.b16 %v271
    %v826 = vunpack.c.h.b16 %v271
    %v827 = vunpack.c.l.b16 %v272
    %v828 = vpack.c.b16 %v513, %v508
    %v829 = vpack.c.b16 %v514, %v509
    %v830 = vpack.c.b16 %v515, %v510
    %v831 = vpack.c.b16 %v516, %v511
    %v832 = vpack.c.b16 %v517, %v512
    %v833 = vpack.c.b16 %v523, %v518
    %v834 = vpack.c.b16 %v524, %v519
    %v835 = vpack.c.b16 %v525, %v520
    %v836 = vpack.c.b16 %v526, %v521
    %v837 = vpack.c.b16 %v527, %v522
    %v838 = vpack.c.b16 %v533, %v528
    %v839 = vpack.c.b16 %v534, %v529
    %v840 = vpack.c.b16 %v535, %v530
    %v841 = vpack.c.b16 %v536, %v531
    %v842 = vpack.c.b16 %v537, %v532
    %v843 = vpack.c.b16 %v543, %v538
    %v844 = vpack.c.b16 %v544, %v539
    %v845 = vpack.c.b16 %v545, %v540
    %v846 = vpack.c.b16 %v546, %v541
    %v847 = vpack.c.b16 %v547, %v542
    %v848 = vpack.c.b16 %v553, %v548
    %v849 = vpack.c.b16 %v554, %v549
    %v850 = vpack.c.b16 %v555, %v550
    %v851 = vpack.c.b16 %v556, %v551
    %v852 = vpack.c.b16 %v557, %v552
    %v853 = vpack.c.b16 %v563, %v558
    %v854 = vpack.c.b16 %v564, %v559
    %v855 = vpack.c.b16 %v565, %v560
    %v856 = vpack.c.b16 %v566, %v561
    %v857 = vpack.c.b16 %v567, %v562
    %v858 = vpack.c.b16 %v573, %v568
    %v859 = vpack.c.b16 %v574, %v569
    %v860 = vpack.c.b16 %v575, %v570
    %v861 = vpack.c.b16 %v576, %v571
    %v862 = vpack.c.b16 %v577, %v572
    %v863 = vpack.c.b16 %v583, %v578
    %v864 = vpack.c.b16 %v584, %v579
    %v865 = vpack.c.b16 %v585, %v580
    %v866 = vpack.c.b16 %v586, %v581
    %v867 = vpack.c.b16 %v587, %v582
    %v868 = vpack.c.b16 %v593, %v588
    %v869 = vpack.c.b16 %v594, %v589
    %v870 = vpack.c.b16 %v595, %v590
    %v871 = vpack.c.b16 %v596, %v591
    %v872 = vpack.c.b16 %v597, %v592
    %v873 = vpack.c.b16 %v603, %v598
    %v874 = vpack.c.b16 %v604, %v599
    %v875 = vpack.c.b16 %v605, %v600
    %v876 = vpack.c.b16 %v606, %v601
    %v877 = vpack.c.b16 %v607, %v602
    %v878 = vpack.c.b16 %v613, %v608
    %v879 = vpack.c.b16 %v614, %v609
    %v880 = vpack.c.b16 %v615, %v610
    %v881 = vpack.c.b16 %v616, %v611
    %v882 = vpack.c.b16 %v617, %v612
    %v883 = vpack.c.b16 %v623, %v618
    %v884 = vpack.c.b16 %v624, %v619
    %v885 = vpack.c.b16 %v625, %v620
    %v886 = vpack.c.b16 %v626, %v621
    %v887 = vpack.c.b16 %v627, %v622
    %v888 = vpack.c.b16 %v633, %v628
    %v889 = vpack.c.b16 %v634, %v629
    %v890 = vpack.c.b16 %v635, %v630
    %v891 = vpack.c.b16 %v636, %v631
    %v892 = vpack.c.b16 %v637, %v632
    %v893 = vpack.c.b16 %v643, %v638
    %v894 = vpack.c.b16 %v644, %v639
    %v895 = vpack.c.b16 %v645, %v640
    %v896 = vpack.c.b16 %v646, %v641
    %v897 = vpack.c.b16 %v647, %v642
    %v898 = vpack.c.b16 %v653, %v648
    %v899 = vpack.c.b16 %v654, %v649
    %v900 = vpack.c.b16 %v655, %v650
    %v901 = vpack.c.b16 %v656, %v651
    %v902 = vpack.c.b16 %v657, %v652
    %v903 = vpack.c.b16 %v663, %v658
    %v904 = vpack.c.b16 %v664, %v659
    %v905 = vpack.c.b16 %v665, %v660
    %v906 = vpack.c.b16 %v666, %v661
    %v907 = vpack.c.b16 %v667, %v662
    %v908 = vpack.c.b16 %v673, %v668
    %v909 = vpack.c.b16 %v674, %v669
    %v910 = vpack.c.b16 %v675, %v670
    %v911 = vpack.c.b16 %v676, %v671
    %v912 = vpack.c.b16 %v677, %v672
    %v913 = vpack.c.b16 %v683, %v678
    %v914 = vpack.c.b16 %v684, %v679
    %v915 = vpack.c.b16 %v685, %v680
    %v916 = vpack.c.b16 %v686, %v681
    %v917 = vpack.c.b16 %v687, %v682
    %v918 = vpack.c.b16 %v693, %v688
    %v919 = vpack.c.b16 %v694, %v689
    %v920 = vpack.c.b16 %v695, %v690
    %v921 = vpack.c.b16 %v696, %v691
    %v922 = vpack.c.b16 %v697, %v692
    %v923 = vpack.c.b16 %v703, %v698
    %v924 = vpack.c.b16 %v704, %v699
    %v925 = vpack.c.b16 %v705, %v700
    %v926 = vpack.c.b16 %v706, %v701
    %v927 = vpack.c.b16 %v707, %v702
    %v928 = vpack.c.b16 %v713, %v708
    %v929 = vpack.c.b16 %v714, %v709
    %v930 = vpack.c.b16 %v715, %v710
    %v931 = vpack.c.b16 %v716, %v711
    %v932 = vpack.c.b16 %v717, %v712
    %v933 = vpack.c.b16 %v723, %v718
    %v934 = vpack.c.b16 %v724, %v719
    %v935 = vpack.c.b16 %v725, %v720
    %v936 = vpack.c.b16 %v726, %v721
    %v937 = vpack.c.b16 %v727, %v722
    %v938 = vpack.c.b16 %v733, %v728
    %v939 = vpack.c.b16 %v734, %v729
    %v940 = vpack.c.b16 %v735, %v730
    %v941 = vpack.c.b16 %v736, %v731
    %v942 = vpack.c.b16 %v737, %v732
    %v943 = vpack.c.b16 %v743, %v738
    %v944 = vpack.c.b16 %v744, %v739
    %v945 = vpack.c.b16 %v745, %v740
    %v946 = vpack.c.b16 %v746, %v741
    %v947 = vpack.c.b16 %v747, %v742
    %v948 = vpack.c.b16 %v753, %v748
    %v949 = vpack.c.b16 %v754, %v749
    %v950 = vpack.c.b16 %v755, %v750
    %v951 = vpack.c.b16 %v756, %v751
    %v952 = vpack.c.b16 %v757, %v752
    %v953 = vpack.c.b16 %v763, %v758
    %v954 = vpack.c.b16 %v764, %v759
    %v955 = vpack.c.b16 %v765, %v760
    %v956 = vpack.c.b16 %v766, %v761
    %v957 = vpack.c.b16 %v767, %v762
    %v958 = vpack.c.b16 %v773, %v768
    %v959 = vpack.c.b16 %v774, %v769
    %v960 = vpack.c.b16 %v775, %v770
    %v961 = vpack.c.b16 %v776, %v771
    %v962 = vpack.c.b16 %v777, %v772
    %v963 = vpack.c.b16 %v783, %v778
    %v964 = vpack.c.b16 %v784, %v779
    %v965 = vpack.c.b16 %v785, %v780
    %v966 = vpack.c.b16 %v786, %v781
    %v967 = vpack.c.b16 %v787, %v782
    %v968 = vpack.c.b16 %v793, %v788
    %v969 = vpack.c.b16 %v794, %v789
    %v970 = vpack.c.b16 %v795, %v790
    %v971 = vpack.c.b16 %v796, %v791
    %v972 = vpack.c.b16 %v797, %v792
    %v973 = vpack.c.b16 %v803, %v798
    %v974 = vpack.c.b16 %v804, %v799
    %v975 = vpack.c.b16 %v805, %v800
    %v976 = vpack.c.b16 %v806, %v801
    %v977 = vpack.c.b16 %v807, %v802
    %v978 = vpack.c.b16 %v813, %v808
    %v979 = vpack.c.b16 %v814, %v809
    %v980 = vpack.c.b16 %v815, %v810
    %v981 = vpack.c.b16 %v816, %v811
    %v982 = vpack.c.b16 %v817, %v812
    %v983 = vpack.c.b16 %v823, %v818
    %v984 = vpack.c.b16 %v824, %v819
    %v985 = vpack.c.b16 %v825, %v820
    %v986 = vpack.c.b16 %v826, %v821
    %v987 = vpack.c.b16 %v827, %v822
    %1148 = vmatprep.subr.bf16.mxu0 %v829
    %1149 = vmatpush1.bf16.msra.mxu0 %v828
    %1150 = vmatprep.subr.bf16.mxu0 %v834
    %1151 = vmatpush1.bf16.msra.mxu0 %v833
    %1152 = vmatprep.subr.bf16.mxu0 %v839
    %1153 = vmatpush1.bf16.msra.mxu0 %v838
    %1154 = vmatprep.subr.bf16.mxu0 %v844
    %1155 = vmatpush1.bf16.msra.mxu0 %v843
    %1156 = vmatprep.subr.bf16.mxu0 %v849
    %1157 = vmatpush1.bf16.msra.mxu0 %v848
    %1158 = vmatprep.subr.bf16.mxu0 %v854
    %1159 = vmatpush1.bf16.msra.mxu0 %v853
    %1160 = vmatprep.subr.bf16.mxu0 %v859
    %1161 = vmatpush1.bf16.msra.mxu0 %v858
    %1162 = vmatprep.subr.bf16.mxu0 %v864
    %1163 = vmatpush1.bf16.msra.mxu0 %v863
    %1164 = vmatprep.subr.bf16.mxu0 %v869
    %1165 = vmatpush1.bf16.msra.mxu0 %v868
    %1166 = vmatprep.subr.bf16.mxu0 %v874
    %1167 = vmatpush1.bf16.msra.mxu0 %v873
    %1168 = vmatprep.subr.bf16.mxu0 %v879
    %1169 = vmatpush1.bf16.msra.mxu0 %v878
    %1170 = vmatprep.subr.bf16.mxu0 %v884
    %1171 = vmatpush1.bf16.msra.mxu0 %v883
    %1172 = vmatprep.subr.bf16.mxu0 %v889
    %1173 = vmatpush1.bf16.msra.mxu0 %v888
    %1174 = vmatprep.subr.bf16.mxu0 %v894
    %1175 = vmatpush1.bf16.msra.mxu0 %v893
    %1176 = vmatprep.subr.bf16.mxu0 %v899
    %1177 = vmatpush1.bf16.msra.mxu0 %v898
    %1178 = vmatprep.subr.bf16.mxu0 %v904
    %1179 = vmatpush1.bf16.msra.mxu0 %v903
    %1180 = vmatprep.mubr.bf16.mxu0 %v309
    %1181 = vmatmul.mubr.bf16.gmra.mrb[0].mxu0 %v308
    %v1182 = vpop.f32.mrb[0].mxu0
    %v1183 = vadd.f32 %v280, %v1182
    %v1184 = vpop.f32.mrb[0].mxu0
    %v1185 = vadd.f32 %v284, %v1184
    %v1186 = vpop.f32.mrb[0].mxu0
    %v1187 = vpop.f32.mrb[0].mxu0
    %1188 = vdwg.mxu0
    %1189 = vmatprep.subr.bf16.mxu0 %v909
    %1190 = vmatpush1.bf16.msra.mxu0 %v908
    %1191 = vmatprep.subr.bf16.mxu0 %v914
    %1192 = vmatpush1.bf16.msra.mxu0 %v913
    %1193 = vmatprep.subr.bf16.mxu0 %v919
    %1194 = vmatpush1.bf16.msra.mxu0 %v918
    %1195 = vmatprep.subr.bf16.mxu0 %v924
    %1196 = vmatpush1.bf16.msra.mxu0 %v923
    %1197 = vmatprep.subr.bf16.mxu0 %v929
    %1198 = vmatpush1.bf16.msra.mxu0 %v928
    %1199 = vmatprep.subr.bf16.mxu0 %v934
    %1200 = vmatpush1.bf16.msra.mxu0 %v933
    %1201 = vmatprep.subr.bf16.mxu0 %v939
    %1202 = vmatpush1.bf16.msra.mxu0 %v938
    %1203 = vmatprep.subr.bf16.mxu0 %v944
    %1204 = vmatpush1.bf16.msra.mxu0 %v943
    %1205 = vmatprep.subr.bf16.mxu0 %v949
    %1206 = vmatpush1.bf16.msra.mxu0 %v948
    %1207 = vmatprep.subr.bf16.mxu0 %v954
    %1208 = vmatpush1.bf16.msra.mxu0 %v953
    %1209 = vmatprep.subr.bf16.mxu0 %v959
    %1210 = vmatpush1.bf16.msra.mxu0 %v958
    %1211 = vmatprep.subr.bf16.mxu0 %v964
    %1212 = vmatpush1.bf16.msra.mxu0 %v963
    %1213 = vmatprep.subr.bf16.mxu0 %v969
    %1214 = vmatpush1.bf16.msra.mxu0 %v968
    %1215 = vmatprep.subr.bf16.mxu0 %v974
    %1216 = vmatpush1.bf16.msra.mxu0 %v973
    %1217 = vmatprep.subr.bf16.mxu0 %v979
    %1218 = vmatpush1.bf16.msra.mxu0 %v978
    %1219 = vmatprep.subr.bf16.mxu0 %v984
    %1220 = vmatpush1.bf16.msra.mxu0 %v983
    %1221 = vmatprep.mubr.bf16.mxu0 %v311
    %1222 = vmatmul.mubr.bf16.gmra.mrb[0].mxu0 %v310
    %v1223 = vpop.f32.mrb[0].mxu0
    %v1224 = vadd.f32 %v1183, %v1223
    %v1225 = vpop.f32.mrb[0].mxu0
    %v1226 = vadd.f32 %v1185, %v1225
    %v1227 = vpop.f32.mrb[0].mxu0
    %v1228 = vpop.f32.mrb[0].mxu0
    %1229 = vdwg.mxu0
    %1230 = vmatprep.subr.bf16.mxu0 %v831
    %1231 = vmatpush1.bf16.msra.mxu0 %v830
    %1232 = vmatprep.subr.bf16.mxu0 %v836
    %1233 = vmatpush1.bf16.msra.mxu0 %v835
    %1234 = vmatprep.subr.bf16.mxu0 %v841
    %1235 = vmatpush1.bf16.msra.mxu0 %v840
    %1236 = vmatprep.subr.bf16.mxu0 %v846
    %1237 = vmatpush1.bf16.msra.mxu0 %v845
    %1238 = vmatprep.subr.bf16.mxu0 %v851
    %1239 = vmatpush1.bf16.msra.mxu0 %v850
    %1240 = vmatprep.subr.bf16.mxu0 %v856
    %1241 = vmatpush1.bf16.msra.mxu0 %v855
    %1242 = vmatprep.subr.bf16.mxu0 %v861
    %1243 = vmatpush1.bf16.msra.mxu0 %v860
    %1244 = vmatprep.subr.bf16.mxu0 %v866
    %1245 = vmatpush1.bf16.msra.mxu0 %v865
    %1246 = vmatprep.subr.bf16.mxu0 %v871
    %1247 = vmatpush1.bf16.msra.mxu0 %v870
    %1248 = vmatprep.subr.bf16.mxu0 %v876
    %1249 = vmatpush1.bf16.msra.mxu0 %v875
    %1250 = vmatprep.subr.bf16.mxu0 %v881
    %1251 = vmatpush1.bf16.msra.mxu0 %v880
    %1252 = vmatprep.subr.bf16.mxu0 %v886
    %1253 = vmatpush1.bf16.msra.mxu0 %v885
    %1254 = vmatprep.subr.bf16.mxu0 %v891
    %1255 = vmatpush1.bf16.msra.mxu0 %v890
    %1256 = vmatprep.subr.bf16.mxu0 %v896
    %1257 = vmatpush1.bf16.msra.mxu0 %v895
    %1258 = vmatprep.subr.bf16.mxu0 %v901
    %1259 = vmatpush1.bf16.msra.mxu0 %v900
    %1260 = vmatprep.subr.bf16.mxu0 %v906
    %1261 = vmatpush1.bf16.msra.mxu0 %v905
    %1262 = vmatprep.mubr.bf16.mxu0 %v309
    %1263 = vmatmul.mubr.bf16.gmra.mrb[0].mxu0 %v308
    %v1264 = vpop.f32.mrb[0].mxu0
    %v1265 = vadd.f32 %v288, %v1264
    %v1266 = vpop.f32.mrb[0].mxu0
    %v1267 = vadd.f32 %v292, %v1266
    %v1268 = vpop.f32.mrb[0].mxu0
    %v1269 = vpop.f32.mrb[0].mxu0
    %1270 = vdwg.mxu0
    %1271 = vmatprep.subr.bf16.mxu0 %v911
    %1272 = vmatpush1.bf16.msra.mxu0 %v910
    %1273 = vmatprep.subr.bf16.mxu0 %v916
    %1274 = vmatpush1.bf16.msra.mxu0 %v915
    %1275 = vmatprep.subr.bf16.mxu0 %v921
    %1276 = vmatpush1.bf16.msra.mxu0 %v920
    %1277 = vmatprep.subr.bf16.mxu0 %v926
    %1278 = vmatpush1.bf16.msra.mxu0 %v925
    %1279 = vmatprep.subr.bf16.mxu0 %v931
    %1280 = vmatpush1.bf16.msra.mxu0 %v930
    %1281 = vmatprep.subr.bf16.mxu0 %v936
    %1282 = vmatpush1.bf16.msra.mxu0 %v935
    %1283 = vmatprep.subr.bf16.mxu0 %v941
    %1284 = vmatpush1.bf16.msra.mxu0 %v940
    %1285 = vmatprep.subr.bf16.mxu0 %v946
    %1286 = vmatpush1.bf16.msra.mxu0 %v945
    %1287 = vmatprep.subr.bf16.mxu0 %v951
    %1288 = vmatpush1.bf16.msra.mxu0 %v950
    %1289 = vmatprep.subr.bf16.mxu0 %v956
    %1290 = vmatpush1.bf16.msra.mxu0 %v955
    %1291 = vmatprep.subr.bf16.mxu0 %v961
    %1292 = vmatpush1.bf16.msra.mxu0 %v960
    %1293 = vmatprep.subr.bf16.mxu0 %v966
    %1294 = vmatpush1.bf16.msra.mxu0 %v965
    %1295 = vmatprep.subr.bf16.mxu0 %v971
    %1296 = vmatpush1.bf16.msra.mxu0 %v970
    %1297 = vmatprep.subr.bf16.mxu0 %v976
    %1298 = vmatpush1.bf16.msra.mxu0 %v975
    %1299 = vmatprep.subr.bf16.mxu0 %v981
    %1300 = vmatpush1.bf16.msra.mxu0 %v980
    %1301 = vmatprep.subr.bf16.mxu0 %v986
    %1302 = vmatpush1.bf16.msra.mxu0 %v985
    %1303 = vmatprep.mubr.bf16.mxu0 %v311
    %1304 = vmatmul.mubr.bf16.gmra.mrb[0].mxu0 %v310
    %v1305 = vpop.f32.mrb[0].mxu0
    %v1306 = vadd.f32 %v1265, %v1305
    %v1307 = vpop.f32.mrb[0].mxu0
    %v1308 = vadd.f32 %v1267, %v1307
    %v1309 = vpop.f32.mrb[0].mxu0
    %v1310 = vpop.f32.mrb[0].mxu0
    %1311 = vdwg.mxu0
    %1312 = vmatprep.subr.bf16.mxu0 0
    %1313 = vmatpush1.bf16.msra.mxu0 %v832
    %1314 = vmatprep.subr.bf16.mxu0 0
    %1315 = vmatpush1.bf16.msra.mxu0 %v837
    %1316 = vmatprep.subr.bf16.mxu0 0
    %1317 = vmatpush1.bf16.msra.mxu0 %v842
    %1318 = vmatprep.subr.bf16.mxu0 0
    %1319 = vmatpush1.bf16.msra.mxu0 %v847
    %1320 = vmatprep.subr.bf16.mxu0 0
    %1321 = vmatpush1.bf16.msra.mxu0 %v852
    %1322 = vmatprep.subr.bf16.mxu0 0
    %1323 = vmatpush1.bf16.msra.mxu0 %v857
    %1324 = vmatprep.subr.bf16.mxu0 0
    %1325 = vmatpush1.bf16.msra.mxu0 %v862
    %1326 = vmatprep.subr.bf16.mxu0 0
    %1327 = vmatpush1.bf16.msra.mxu0 %v867
    %1328 = vmatprep.subr.bf16.mxu0 0
    %1329 = vmatpush1.bf16.msra.mxu0 %v872
    %1330 = vmatprep.subr.bf16.mxu0 0
    %1331 = vmatpush1.bf16.msra.mxu0 %v877
    %1332 = vmatprep.subr.bf16.mxu0 0
    %1333 = vmatpush1.bf16.msra.mxu0 %v882
    %1334 = vmatprep.subr.bf16.mxu0 0
    %1335 = vmatpush1.bf16.msra.mxu0 %v887
    %1336 = vmatprep.subr.bf16.mxu0 0
    %1337 = vmatpush1.bf16.msra.mxu0 %v892
    %1338 = vmatprep.subr.bf16.mxu0 0
    %1339 = vmatpush1.bf16.msra.mxu0 %v897
    %1340 = vmatprep.subr.bf16.mxu0 0
    %1341 = vmatpush1.bf16.msra.mxu0 %v902
    %1342 = vmatprep.subr.bf16.mxu0 0
    %1343 = vmatpush1.bf16.msra.mxu0 %v907
    %1344 = vmatprep.mubr.bf16.mxu0 %v309
    %1345 = vmatmul.mubr.bf16.gmra.mrb[0].mxu0 %v308
    %v1346 = vpop.f32.mrb[0].mxu0
    %v1347 = vadd.f32 %v296, %v1346
    %v1348 = vpop.f32.mrb[0].mxu0
    %v1349 = vpop.f32.mrb[0].mxu0
    %v1350 = vpop.f32.mrb[0].mxu0
    %1351 = vdwg.mxu0
    %1352 = vmatprep.subr.bf16.mxu0 0
    %1353 = vmatpush1.bf16.msra.mxu0 %v912
    %1354 = vmatprep.subr.bf16.mxu0 0
    %1355 = vmatpush1.bf16.msra.mxu0 %v917
    %1356 = vmatprep.subr.bf16.mxu0 0
    %1357 = vmatpush1.bf16.msra.mxu0 %v922
    %1358 = vmatprep.subr.bf16.mxu0 0
    %1359 = vmatpush1.bf16.msra.mxu0 %v927
    %1360 = vmatprep.subr.bf16.mxu0 0
    %1361 = vmatpush1.bf16.msra.mxu0 %v932
    %1362 = vmatprep.subr.bf16.mxu0 0
    %1363 = vmatpush1.bf16.msra.mxu0 %v937
    %1364 = vmatprep.subr.bf16.mxu0 0
    %1365 = vmatpush1.bf16.msra.mxu0 %v942
    %1366 = vmatprep.subr.bf16.mxu0 0
    %1367 = vmatpush1.bf16.msra.mxu0 %v947
    %1368 = vmatprep.subr.bf16.mxu0 0
    %1369 = vmatpush1.bf16.msra.mxu0 %v952
    %1370 = vmatprep.subr.bf16.mxu0 0
    %1371 = vmatpush1.bf16.msra.mxu0 %v957
    %1372 = vmatprep.subr.bf16.mxu0 0
    %1373 = vmatpush1.bf16.msra.mxu0 %v962
    %1374 = vmatprep.subr.bf16.mxu0 0
    %1375 = vmatpush1.bf16.msra.mxu0 %v967
    %1376 = vmatprep.subr.bf16.mxu0 0
    %1377 = vmatpush1.bf16.msra.mxu0 %v972
    %1378 = vmatprep.subr.bf16.mxu0 0
    %1379 = vmatpush1.bf16.msra.mxu0 %v977
    %1380 = vmatprep.subr.bf16.mxu0 0
    %1381 = vmatpush1.bf16.msra.mxu0 %v982
    %1382 = vmatprep.subr.bf16.mxu0 0
    %1383 = vmatpush1.bf16.msra.mxu0 %v987
    %1384 = vmatprep.mubr.bf16.mxu0 %v311
    %1385 = vmatmul.mubr.bf16.gmra.mrb[0].mxu0 %v310
    %v1386 = vpop.f32.mrb[0].mxu0
    %v1387 = vadd.f32 %v1347, %v1386
    %v1388 = vpop.f32.mrb[0].mxu0
    %v1389 = vpop.f32.mrb[0].mxu0
    %v1390 = vpop.f32.mrb[0].mxu0
    %1391 = vdwg.mxu0
    %v1392 = vtanh.pop %v1224
    %v1393 = vtanh.pop %v1226
    %v1394 = vtanh.pop %v1306
    %v1395 = vtanh.pop %v1308
    %v1396 = vtanh.pop %v1387
    %1397 = vst [vmem:[#allocation2] sm:$0xff] %v1392
    %1398 = vst [vmem:[#allocation2 + $0x8] sm:$0xff] %v1393
    %1399 = vst [vmem:[#allocation2 + $0x10] sm:$0xff] %v1394
    %1400 = vst [vmem:[#allocation2 + $0x18] sm:$0xff] %v1395
    %1401 = vst [vmem:[#allocation2 + $0x20] sm:$0xff] %v1396
    %v1402 = vld [vmem:[#allocation2] sm:$0xff]
    %v1403 = vld [vmem:[#allocation2 + $0x8] sm:$0xff]
    %v1404 = vld [vmem:[#allocation2 + $0x10] sm:$0xff]
    %v1405 = vld [vmem:[#allocation2 + $0x18] sm:$0xff]
    %v1406 = vld [vmem:[#allocation2 + $0x20] sm:$0xff]
    %v1407 = vpack.c.bf16 %v1403, %v1402
    %v1408 = vpack.c.bf16 %v1405, %v1404
    %v1409 = vpack.c.bf16 %v1406, %v1406
    %v1410 = vld [vmem:[#allocation5] sm:$0xff]
    %v1411 = vld [vmem:[#allocation5 + $0x8] sm:$0xff]
    %v1412 = vld [vmem:[#allocation5 + $0x10] sm:$0xff]
    %v1413 = vld [vmem:[#allocation5 + $0x18] sm:$0xff]
    %v1414 = vld [vmem:[#allocation5 + $0x20] sm:$0xff]
    %v1415 = vld [vmem:[#allocation5 + $0x28] sm:$0xff]
    %v1416 = vld [vmem:[#allocation5 + $0x30] sm:$0xff]
    %v1417 = vld [vmem:[#allocation5 + $0x38] sm:$0xff]
    %v1418 = vld [vmem:[#allocation5 + $0x40] sm:$0xff]
    %v1419 = vld [vmem:[#allocation5 + $0x48] sm:$0xff]
    %v1420 = vld [vmem:[#allocation5 + $0x50] sm:$0xff]
    %v1421 = vld [vmem:[#allocation5 + $0x58] sm:$0xff]
    %v1422 = vld [vmem:[#allocation5 + $0x60] sm:$0xff]
    %v1423 = vld [vmem:[#allocation5 + $0x68] sm:$0xff]
    %v1424 = vld [vmem:[#allocation5 + $0x70] sm:$0xff]
    %v1425 = vld [vmem:[#allocation5 + $0x78] sm:$0xff]
    %v1426 = vld [vmem:[#allocation5 + $0x80] sm:$0xff]
    %v1427 = vld [vmem:[#allocation5 + $0x88] sm:$0xff]
    %v1428 = vld [vmem:[#allocation5 + $0x90] sm:$0xff]
    %v1429 = vld [vmem:[#allocation5 + $0x98] sm:$0xff]
    %v1430 = vld [vmem:[#allocation5 + $0xa0] sm:$0xff]
    %v1431 = vld [vmem:[#allocation5 + $0xa8] sm:$0xff]
    %v1432 = vld [vmem:[#allocation5 + $0xb0] sm:$0xff]
    %v1433 = vld [vmem:[#allocation5 + $0xb8] sm:$0xff]
    %v1434 = vld [vmem:[#allocation5 + $0xc0] sm:$0xff]
    %v1435 = vld [vmem:[#allocation5 + $0xc8] sm:$0xff]
    %v1436 = vld [vmem:[#allocation5 + $0xd0] sm:$0xff]
    %v1437 = vld [vmem:[#allocation5 + $0xd8] sm:$0xff]
    %v1438 = vld [vmem:[#allocation5 + $0xe0] sm:$0xff]
    %v1439 = vld [vmem:[#allocation5 + $0xe8] sm:$0xff]
    %v1440 = vld [vmem:[#allocation5 + $0xf0] sm:$0xff]
    %v1441 = vld [vmem:[#allocation5 + $0xf8] sm:$0xff]
    %v1442 = vld [vmem:[#allocation5 + $0x100] sm:$0xff]
    %v1443 = vld [vmem:[#allocation5 + $0x108] sm:$0xff]
    %v1444 = vld [vmem:[#allocation5 + $0x110] sm:$0xff]
    %v1445 = vld [vmem:[#allocation5 + $0x118] sm:$0xff]
    %v1446 = vld [vmem:[#allocation5 + $0x120] sm:$0xff]
    %v1447 = vld [vmem:[#allocation5 + $0x128] sm:$0xff]
    %v1448 = vld [vmem:[#allocation5 + $0x130] sm:$0xff]
    %v1449 = vld [vmem:[#allocation5 + $0x138] sm:$0xff]
    %v1450 = vld [vmem:[#allocation5 + $0x140] sm:$0xff]
    %v1451 = vld [vmem:[#allocation5 + $0x148] sm:$0xff]
    %v1452 = vld [vmem:[#allocation5 + $0x150] sm:$0xff]
    %v1453 = vld [vmem:[#allocation5 + $0x158] sm:$0xff]
    %v1454 = vld [vmem:[#allocation5 + $0x160] sm:$0xff]
    %v1455 = vld [vmem:[#allocation5 + $0x168] sm:$0xff]
    %v1456 = vld [vmem:[#allocation5 + $0x170] sm:$0xff]
    %v1457 = vld [vmem:[#allocation5 + $0x178] sm:$0xff]
    %v1458 = vld [vmem:[#allocation5 + $0x180] sm:$0xff]
    %v1459 = vld [vmem:[#allocation5 + $0x188] sm:$0xff]
    %v1460 = vld [vmem:[#allocation5 + $0x190] sm:$0xff]
    %v1461 = vld [vmem:[#allocation5 + $0x198] sm:$0xff]
    %v1462 = vld [vmem:[#allocation5 + $0x1a0] sm:$0xff]
    %v1463 = vld [vmem:[#allocation5 + $0x1a8] sm:$0xff]
    %v1464 = vld [vmem:[#allocation5 + $0x1b0] sm:$0xff]
    %v1465 = vld [vmem:[#allocation5 + $0x1b8] sm:$0xff]
    %v1466 = vld [vmem:[#allocation5 + $0x1c0] sm:$0xff]
    %v1467 = vld [vmem:[#allocation5 + $0x1c8] sm:$0xff]
    %v1468 = vld [vmem:[#allocation5 + $0x1d0] sm:$0xff]
    %v1469 = vld [vmem:[#allocation5 + $0x1d8] sm:$0xff]
    %v1470 = vld [vmem:[#allocation5 + $0x1e0] sm:$0xff]
    %v1471 = vld [vmem:[#allocation5 + $0x1e8] sm:$0xff]
    %v1472 = vld [vmem:[#allocation5 + $0x1f0] sm:$0xff]
    %v1473 = vld [vmem:[#allocation5 + $0x1f8] sm:$0xff]
    %v1474 = vld [vmem:[#allocation5 + $0x200] sm:$0xff]
    %v1475 = vld [vmem:[#allocation5 + $0x208] sm:$0xff]
    %v1476 = vld [vmem:[#allocation5 + $0x210] sm:$0xff]
    %v1477 = vld [vmem:[#allocation5 + $0x218] sm:$0xff]
    %v1478 = vld [vmem:[#allocation5 + $0x220] sm:$0xff]
    %v1479 = vld [vmem:[#allocation5 + $0x228] sm:$0xff]
    %v1480 = vld [vmem:[#allocation5 + $0x230] sm:$0xff]
    %v1481 = vld [vmem:[#allocation5 + $0x238] sm:$0xff]
    %v1482 = vld [vmem:[#allocation5 + $0x240] sm:$0xff]
    %v1483 = vld [vmem:[#allocation5 + $0x248] sm:$0xff]
    %v1484 = vld [vmem:[#allocation5 + $0x250] sm:$0xff]
    %v1485 = vld [vmem:[#allocation5 + $0x258] sm:$0xff]
    %v1486 = vld [vmem:[#allocation5 + $0x260] sm:$0xff]
    %v1487 = vld [vmem:[#allocation5 + $0x268] sm:$0xff]
    %v1488 = vld [vmem:[#allocation5 + $0x270] sm:$0xff]
    %v1489 = vld [vmem:[#allocation5 + $0x278] sm:$0xff]
    %v1490 = vld [vmem:[#allocation5 + $0x280] sm:$0xff]
    %v1491 = vld [vmem:[#allocation5 + $0x288] sm:$0xff]
    %v1492 = vld [vmem:[#allocation5 + $0x290] sm:$0xff]
    %v1493 = vld [vmem:[#allocation5 + $0x298] sm:$0xff]
    %v1494 = vld [vmem:[#allocation5 + $0x2a0] sm:$0xff]
    %v1495 = vld [vmem:[#allocation5 + $0x2a8] sm:$0xff]
    %v1496 = vld [vmem:[#allocation5 + $0x2b0] sm:$0xff]
    %v1497 = vld [vmem:[#allocation5 + $0x2b8] sm:$0xff]
    %v1498 = vld [vmem:[#allocation5 + $0x2c0] sm:$0xff]
    %v1499 = vld [vmem:[#allocation5 + $0x2c8] sm:$0xff]
    %v1500 = vld [vmem:[#allocation5 + $0x2d0] sm:$0xff]
    %v1501 = vld [vmem:[#allocation5 + $0x2d8] sm:$0xff]
    %v1502 = vld [vmem:[#allocation5 + $0x2e0] sm:$0xff]
    %v1503 = vld [vmem:[#allocation5 + $0x2e8] sm:$0xff]
    %v1504 = vld [vmem:[#allocation5 + $0x2f0] sm:$0xff]
    %v1505 = vld [vmem:[#allocation5 + $0x2f8] sm:$0xff]
    %s1506 = scalar_lea.vmem %s5, 1
    %v1507 = vld [vmem:[%s1506] ss:$8 sm:$0xf]
    %v1508 = vld [vmem:[%s1506] ss:$8 sm:$0xf0]
    %v1509 = vor.u32 %v1507, %v1508
    %s1510 = scalar_lea.vmem %s5, 65
    %v1511 = vld [vmem:[%s1510] ss:$8 sm:$0xf]
    %v1514 = vlaneseq
    %v1515 = vshrl.u32 %v1514, 7
    %v1516 = vsub.s32 0, %v1515
    %v1517 = vrot.slane %v1509, %v1516
    %v1518 = vlaneseq
    %v1519 = vshrl.u32 %v1518, 7
    %v1520 = vsub.s32 1, %v1519
    %v1521 = vrot.slane %v1509, %v1520
    %v1522 = vlaneseq
    %v1523 = vshrl.u32 %v1522, 7
    %v1524 = vsub.s32 2, %v1523
    %v1525 = vrot.slane %v1509, %v1524
    %v1526 = vlaneseq
    %v1527 = vshrl.u32 %v1526, 7
    %v1528 = vsub.s32 3, %v1527
    %v1529 = vrot.slane %v1509, %v1528
    %v1530 = vlaneseq
    %v1531 = vshrl.u32 %v1530, 7
    %v1532 = vsub.s32 4, %v1531
    %v1533 = vrot.slane %v1509, %v1532
    %v1534 = vlaneseq
    %v1535 = vshrl.u32 %v1534, 7
    %v1536 = vsub.s32 5, %v1535
    %v1537 = vrot.slane %v1509, %v1536
    %v1538 = vlaneseq
    %v1539 = vshrl.u32 %v1538, 7
    %v1540 = vsub.s32 6, %v1539
    %v1541 = vrot.slane %v1509, %v1540
    %v1542 = vlaneseq
    %v1543 = vshrl.u32 %v1542, 7
    %v1544 = vsub.s32 7, %v1543
    %v1545 = vrot.slane %v1509, %v1544
    %v1546 = vlaneseq
    %v1547 = vshrl.u32 %v1546, 7
    %v1548 = vsub.s32 0, %v1547
    %v1549 = vrot.slane %v1511, %v1548
    %v1550 = vlaneseq
    %v1551 = vshrl.u32 %v1550, 7
    %v1552 = vsub.s32 1, %v1551
    %v1553 = vrot.slane %v1511, %v1552
    %v1554 = vlaneseq
    %v1555 = vshrl.u32 %v1554, 7
    %v1556 = vsub.s32 2, %v1555
    %v1557 = vrot.slane %v1511, %v1556
    %v1558 = vlaneseq
    %v1559 = vshrl.u32 %v1558, 7
    %v1560 = vsub.s32 3, %v1559
    %v1561 = vrot.slane %v1511, %v1560
    %v1670 = vunpack.c.l.b16 %v1410
    %v1671 = vunpack.c.h.b16 %v1410
    %v1672 = vunpack.c.l.b16 %v1411
    %v1673 = vunpack.c.h.b16 %v1411
    %v1674 = vunpack.c.l.b16 %v1412
    %v1675 = vunpack.c.h.b16 %v1412
    %v1676 = vunpack.c.l.b16 %v1413
    %v1677 = vunpack.c.h.b16 %v1413
    %v1678 = vunpack.c.l.b16 %v1414
    %v1679 = vunpack.c.h.b16 %v1414
    %v1680 = vunpack.c.l.b16 %v1415
    %v1681 = vunpack.c.h.b16 %v1415
    %v1682 = vunpack.c.l.b16 %v1416
    %v1683 = vunpack.c.h.b16 %v1416
    %v1684 = vunpack.c.l.b16 %v1417
    %v1685 = vunpack.c.h.b16 %v1417
    %v1686 = vunpack.c.l.b16 %v1418
    %v1687 = vunpack.c.h.b16 %v1418
    %v1688 = vunpack.c.l.b16 %v1419
    %v1689 = vunpack.c.h.b16 %v1419
    %v1690 = vunpack.c.l.b16 %v1420
    %v1691 = vunpack.c.h.b16 %v1420
    %v1692 = vunpack.c.l.b16 %v1421
    %v1693 = vunpack.c.h.b16 %v1421
    %v1694 = vunpack.c.l.b16 %v1422
    %v1695 = vunpack.c.h.b16 %v1422
    %v1696 = vunpack.c.l.b16 %v1423
    %v1697 = vunpack.c.h.b16 %v1423
    %v1698 = vunpack.c.l.b16 %v1424
    %v1699 = vunpack.c.h.b16 %v1424
    %v1700 = vunpack.c.l.b16 %v1425
    %v1701 = vunpack.c.h.b16 %v1425
    %v1702 = vunpack.c.l.b16 %v1426
    %v1703 = vunpack.c.h.b16 %v1426
    %v1704 = vunpack.c.l.b16 %v1427
    %v1705 = vunpack.c.h.b16 %v1427
    %v1706 = vunpack.c.l.b16 %v1428
    %v1707 = vunpack.c.h.b16 %v1428
    %v1708 = vunpack.c.l.b16 %v1429
    %v1709 = vunpack.c.h.b16 %v1429
    %v1710 = vunpack.c.l.b16 %v1430
    %v1711 = vunpack.c.h.b16 %v1430
    %v1712 = vunpack.c.l.b16 %v1431
    %v1713 = vunpack.c.h.b16 %v1431
    %v1714 = vunpack.c.l.b16 %v1432
    %v1715 = vunpack.c.h.b16 %v1432
    %v1716 = vunpack.c.l.b16 %v1433
    %v1717 = vunpack.c.h.b16 %v1433
    %v1718 = vunpack.c.l.b16 %v1434
    %v1719 = vunpack.c.h.b16 %v1434
    %v1720 = vunpack.c.l.b16 %v1435
    %v1721 = vunpack.c.h.b16 %v1435
    %v1722 = vunpack.c.l.b16 %v1436
    %v1723 = vunpack.c.h.b16 %v1436
    %v1724 = vunpack.c.l.b16 %v1437
    %v1725 = vunpack.c.h.b16 %v1437
    %v1726 = vunpack.c.l.b16 %v1438
    %v1727 = vunpack.c.h.b16 %v1438
    %v1728 = vunpack.c.l.b16 %v1439
    %v1729 = vunpack.c.h.b16 %v1439
    %v1730 = vunpack.c.l.b16 %v1440
    %v1731 = vunpack.c.h.b16 %v1440
    %v1732 = vunpack.c.l.b16 %v1441
    %v1733 = vunpack.c.h.b16 %v1441
    %v1734 = vunpack.c.l.b16 %v1442
    %v1735 = vunpack.c.h.b16 %v1442
    %v1736 = vunpack.c.l.b16 %v1443
    %v1737 = vunpack.c.h.b16 %v1443
    %v1738 = vunpack.c.l.b16 %v1444
    %v1739 = vunpack.c.h.b16 %v1444
    %v1740 = vunpack.c.l.b16 %v1445
    %v1741 = vunpack.c.h.b16 %v1445
    %v1742 = vunpack.c.l.b16 %v1446
    %v1743 = vunpack.c.h.b16 %v1446
    %v1744 = vunpack.c.l.b16 %v1447
    %v1745 = vunpack.c.h.b16 %v1447
    %v1746 = vunpack.c.l.b16 %v1448
    %v1747 = vunpack.c.h.b16 %v1448
    %v1748 = vunpack.c.l.b16 %v1449
    %v1749 = vunpack.c.h.b16 %v1449
    %v1750 = vunpack.c.l.b16 %v1450
    %v1751 = vunpack.c.h.b16 %v1450
    %v1752 = vunpack.c.l.b16 %v1451
    %v1753 = vunpack.c.h.b16 %v1451
    %v1754 = vunpack.c.l.b16 %v1452
    %v1755 = vunpack.c.h.b16 %v1452
    %v1756 = vunpack.c.l.b16 %v1453
    %v1757 = vunpack.c.h.b16 %v1453
    %v1758 = vunpack.c.l.b16 %v1454
    %v1759 = vunpack.c.h.b16 %v1454
    %v1760 = vunpack.c.l.b16 %v1455
    %v1761 = vunpack.c.h.b16 %v1455
    %v1762 = vunpack.c.l.b16 %v1456
    %v1763 = vunpack.c.h.b16 %v1456
    %v1764 = vunpack.c.l.b16 %v1457
    %v1765 = vunpack.c.h.b16 %v1457
    %v1766 = vunpack.c.l.b16 %v1458
    %v1767 = vunpack.c.h.b16 %v1458
    %v1768 = vunpack.c.l.b16 %v1459
    %v1769 = vunpack.c.h.b16 %v1459
    %v1770 = vunpack.c.l.b16 %v1460
    %v1771 = vunpack.c.h.b16 %v1460
    %v1772 = vunpack.c.l.b16 %v1461
    %v1773 = vunpack.c.h.b16 %v1461
    %v1774 = vunpack.c.l.b16 %v1462
    %v1775 = vunpack.c.h.b16 %v1462
    %v1776 = vunpack.c.l.b16 %v1463
    %v1777 = vunpack.c.h.b16 %v1463
    %v1778 = vunpack.c.l.b16 %v1464
    %v1779 = vunpack.c.h.b16 %v1464
    %v1780 = vunpack.c.l.b16 %v1465
    %v1781 = vunpack.c.h.b16 %v1465
    %v1782 = vunpack.c.l.b16 %v1466
    %v1783 = vunpack.c.h.b16 %v1466
    %v1784 = vunpack.c.l.b16 %v1467
    %v1785 = vunpack.c.h.b16 %v1467
    %v1786 = vunpack.c.l.b16 %v1468
    %v1787 = vunpack.c.h.b16 %v1468
    %v1788 = vunpack.c.l.b16 %v1469
    %v1789 = vunpack.c.h.b16 %v1469
    %v1790 = vunpack.c.l.b16 %v1470
    %v1791 = vunpack.c.h.b16 %v1470
    %v1792 = vunpack.c.l.b16 %v1471
    %v1793 = vunpack.c.h.b16 %v1471
    %v1794 = vunpack.c.l.b16 %v1472
    %v1795 = vunpack.c.h.b16 %v1472
    %v1796 = vunpack.c.l.b16 %v1473
    %v1797 = vunpack.c.h.b16 %v1473
    %v1798 = vunpack.c.l.b16 %v1474
    %v1799 = vunpack.c.h.b16 %v1474
    %v1800 = vunpack.c.l.b16 %v1475
    %v1801 = vunpack.c.h.b16 %v1475
    %v1802 = vunpack.c.l.b16 %v1476
    %v1803 = vunpack.c.h.b16 %v1476
    %v1804 = vunpack.c.l.b16 %v1477
    %v1805 = vunpack.c.h.b16 %v1477
    %v1806 = vunpack.c.l.b16 %v1478
    %v1807 = vunpack.c.h.b16 %v1478
    %v1808 = vunpack.c.l.b16 %v1479
    %v1809 = vunpack.c.h.b16 %v1479
    %v1810 = vunpack.c.l.b16 %v1480
    %v1811 = vunpack.c.h.b16 %v1480
    %v1812 = vunpack.c.l.b16 %v1481
    %v1813 = vunpack.c.h.b16 %v1481
    %v1814 = vunpack.c.l.b16 %v1482
    %v1815 = vunpack.c.h.b16 %v1482
    %v1816 = vunpack.c.l.b16 %v1483
    %v1817 = vunpack.c.h.b16 %v1483
    %v1818 = vunpack.c.l.b16 %v1484
    %v1819 = vunpack.c.h.b16 %v1484
    %v1820 = vunpack.c.l.b16 %v1485
    %v1821 = vunpack.c.h.b16 %v1485
    %v1822 = vunpack.c.l.b16 %v1486
    %v1823 = vunpack.c.h.b16 %v1486
    %v1824 = vunpack.c.l.b16 %v1487
    %v1825 = vunpack.c.h.b16 %v1487
    %v1826 = vunpack.c.l.b16 %v1488
    %v1827 = vunpack.c.h.b16 %v1488
    %v1828 = vunpack.c.l.b16 %v1489
    %v1829 = vunpack.c.h.b16 %v1489
    %v1830 = vunpack.c.l.b16 %v1490
    %v1831 = vunpack.c.h.b16 %v1490
    %v1832 = vunpack.c.l.b16 %v1491
    %v1833 = vunpack.c.h.b16 %v1491
    %v1834 = vunpack.c.l.b16 %v1492
    %v1835 = vunpack.c.h.b16 %v1492
    %v1836 = vunpack.c.l.b16 %v1493
    %v1837 = vunpack.c.h.b16 %v1493
    %v1838 = vunpack.c.l.b16 %v1494
    %v1839 = vunpack.c.h.b16 %v1494
    %v1840 = vunpack.c.l.b16 %v1495
    %v1841 = vunpack.c.h.b16 %v1495
    %v1842 = vunpack.c.l.b16 %v1496
    %v1843 = vunpack.c.h.b16 %v1496
    %v1844 = vunpack.c.l.b16 %v1497
    %v1845 = vunpack.c.h.b16 %v1497
    %v1846 = vunpack.c.l.b16 %v1498
    %v1847 = vunpack.c.h.b16 %v1498
    %v1848 = vunpack.c.l.b16 %v1499
    %v1849 = vunpack.c.h.b16 %v1499
    %v1850 = vunpack.c.l.b16 %v1500
    %v1851 = vunpack.c.h.b16 %v1500
    %v1852 = vunpack.c.l.b16 %v1501
    %v1853 = vunpack.c.h.b16 %v1501
    %v1854 = vunpack.c.l.b16 %v1502
    %v1855 = vunpack.c.h.b16 %v1502
    %v1856 = vunpack.c.l.b16 %v1503
    %v1857 = vunpack.c.h.b16 %v1503
    %v1858 = vunpack.c.l.b16 %v1504
    %v1859 = vunpack.c.h.b16 %v1504
    %v1860 = vunpack.c.l.b16 %v1505
    %v1861 = vunpack.c.h.b16 %v1505
    %v1862 = vpack.c.b16 %v1682, %v1670
    %v1863 = vpack.c.b16 %v1683, %v1671
    %v1864 = vpack.c.b16 %v1684, %v1672
    %v1865 = vpack.c.b16 %v1685, %v1673
    %v1866 = vpack.c.b16 %v1686, %v1674
    %v1867 = vpack.c.b16 %v1687, %v1675
    %v1868 = vpack.c.b16 %v1688, %v1676
    %v1869 = vpack.c.b16 %v1689, %v1677
    %v1870 = vpack.c.b16 %v1690, %v1678
    %v1871 = vpack.c.b16 %v1691, %v1679
    %v1872 = vpack.c.b16 %v1692, %v1680
    %v1873 = vpack.c.b16 %v1693, %v1681
    %v1874 = vpack.c.b16 %v1706, %v1694
    %v1875 = vpack.c.b16 %v1707, %v1695
    %v1876 = vpack.c.b16 %v1708, %v1696
    %v1877 = vpack.c.b16 %v1709, %v1697
    %v1878 = vpack.c.b16 %v1710, %v1698
    %v1879 = vpack.c.b16 %v1711, %v1699
    %v1880 = vpack.c.b16 %v1712, %v1700
    %v1881 = vpack.c.b16 %v1713, %v1701
    %v1882 = vpack.c.b16 %v1714, %v1702
    %v1883 = vpack.c.b16 %v1715, %v1703
    %v1884 = vpack.c.b16 %v1716, %v1704
    %v1885 = vpack.c.b16 %v1717, %v1705
    %v1886 = vpack.c.b16 %v1730, %v1718
    %v1887 = vpack.c.b16 %v1731, %v1719
    %v1888 = vpack.c.b16 %v1732, %v1720
    %v1889 = vpack.c.b16 %v1733, %v1721
    %v1890 = vpack.c.b16 %v1734, %v1722
    %v1891 = vpack.c.b16 %v1735, %v1723
    %v1892 = vpack.c.b16 %v1736, %v1724
    %v1893 = vpack.c.b16 %v1737, %v1725
    %v1894 = vpack.c.b16 %v1738, %v1726
    %v1895 = vpack.c.b16 %v1739, %v1727
    %v1896 = vpack.c.b16 %v1740, %v1728
    %v1897 = vpack.c.b16 %v1741, %v1729
    %v1898 = vpack.c.b16 %v1754, %v1742
    %v1899 = vpack.c.b16 %v1755, %v1743
    %v1900 = vpack.c.b16 %v1756, %v1744
    %v1901 = vpack.c.b16 %v1757, %v1745
    %v1902 = vpack.c.b16 %v1758, %v1746
    %v1903 = vpack.c.b16 %v1759, %v1747
    %v1904 = vpack.c.b16 %v1760, %v1748
    %v1905 = vpack.c.b16 %v1761, %v1749
    %v1906 = vpack.c.b16 %v1762, %v1750
    %v1907 = vpack.c.b16 %v1763, %v1751
    %v1908 = vpack.c.b16 %v1764, %v1752
    %v1909 = vpack.c.b16 %v1765, %v1753
    %v1910 = vpack.c.b16 %v1778, %v1766
    %v1911 = vpack.c.b16 %v1779, %v1767
    %v1912 = vpack.c.b16 %v1780, %v1768
    %v1913 = vpack.c.b16 %v1781, %v1769
    %v1914 = vpack.c.b16 %v1782, %v1770
    %v1915 = vpack.c.b16 %v1783, %v1771
    %v1916 = vpack.c.b16 %v1784, %v1772
    %v1917 = vpack.c.b16 %v1785, %v1773
    %v1918 = vpack.c.b16 %v1786, %v1774
    %v1919 = vpack.c.b16 %v1787, %v1775
    %v1920 = vpack.c.b16 %v1788, %v1776
    %v1921 = vpack.c.b16 %v1789, %v1777
    %v1922 = vpack.c.b16 %v1802, %v1790
    %v1923 = vpack.c.b16 %v1803, %v1791
    %v1924 = vpack.c.b16 %v1804, %v1792
    %v1925 = vpack.c.b16 %v1805, %v1793
    %v1926 = vpack.c.b16 %v1806, %v1794
    %v1927 = vpack.c.b16 %v1807, %v1795
    %v1928 = vpack.c.b16 %v1808, %v1796
    %v1929 = vpack.c.b16 %v1809, %v1797
    %v1930 = vpack.c.b16 %v1810, %v1798
    %v1931 = vpack.c.b16 %v1811, %v1799
    %v1932 = vpack.c.b16 %v1812, %v1800
    %v1933 = vpack.c.b16 %v1813, %v1801
    %v1934 = vpack.c.b16 %v1826, %v1814
    %v1935 = vpack.c.b16 %v1827, %v1815
    %v1936 = vpack.c.b16 %v1828, %v1816
    %v1937 = vpack.c.b16 %v1829, %v1817
    %v1938 = vpack.c.b16 %v1830, %v1818
    %v1939 = vpack.c.b16 %v1831, %v1819
    %v1940 = vpack.c.b16 %v1832, %v1820
    %v1941 = vpack.c.b16 %v1833, %v1821
    %v1942 = vpack.c.b16 %v1834, %v1822
    %v1943 = vpack.c.b16 %v1835, %v1823
    %v1944 = vpack.c.b16 %v1836, %v1824
    %v1945 = vpack.c.b16 %v1837, %v1825
    %v1946 = vpack.c.b16 %v1850, %v1838
    %v1947 = vpack.c.b16 %v1851, %v1839
    %v1948 = vpack.c.b16 %v1852, %v1840
    %v1949 = vpack.c.b16 %v1853, %v1841
    %v1950 = vpack.c.b16 %v1854, %v1842
    %v1951 = vpack.c.b16 %v1855, %v1843
    %v1952 = vpack.c.b16 %v1856, %v1844
    %v1953 = vpack.c.b16 %v1857, %v1845
    %v1954 = vpack.c.b16 %v1858, %v1846
    %v1955 = vpack.c.b16 %v1859, %v1847
    %v1956 = vpack.c.b16 %v1860, %v1848
    %v1957 = vpack.c.b16 %v1861, %v1849
    %2054 = vmatprep.subr.bf16.mxu0 %v1863
    %2055 = vmatpush1.bf16.msra.mxu0 %v1862
    %2056 = vmatprep.subr.bf16.mxu0 %v1875
    %2057 = vmatpush1.bf16.msra.mxu0 %v1874
    %2058 = vmatprep.subr.bf16.mxu0 %v1887
    %2059 = vmatpush1.bf16.msra.mxu0 %v1886
    %2060 = vmatprep.subr.bf16.mxu0 %v1899
    %2061 = vmatpush1.bf16.msra.mxu0 %v1898
    %2062 = vmatprep.subr.bf16.mxu0 %v1911
    %2063 = vmatpush1.bf16.msra.mxu0 %v1910
    %2064 = vmatprep.subr.bf16.mxu0 %v1923
    %2065 = vmatpush1.bf16.msra.mxu0 %v1922
    %2066 = vmatprep.subr.bf16.mxu0 %v1935
    %2067 = vmatpush1.bf16.msra.mxu0 %v1934
    %2068 = vmatprep.subr.bf16.mxu0 %v1947
    %2069 = vmatpush1.bf16.msra.mxu0 %v1946
    %2070 = vmatprep.subr.bf16.mxu0 0
    %2071 = vmatpush1.bf16.msra.mxu0 0
    %2072 = vmatprep.subr.bf16.mxu0 0
    %2073 = vmatpush1.bf16.msra.mxu0 0
    %2074 = vmatprep.subr.bf16.mxu0 0
    %2075 = vmatpush1.bf16.msra.mxu0 0
    %2076 = vmatprep.subr.bf16.mxu0 0
    %2077 = vmatpush1.bf16.msra.mxu0 0
    %2078 = vmatprep.subr.bf16.mxu0 0
    %2079 = vmatpush1.bf16.msra.mxu0 0
    %2080 = vmatprep.subr.bf16.mxu0 0
    %2081 = vmatpush1.bf16.msra.mxu0 0
    %2082 = vmatprep.subr.bf16.mxu0 0
    %2083 = vmatpush1.bf16.msra.mxu0 0
    %2084 = vmatprep.subr.bf16.mxu0 0
    %2085 = vmatpush1.bf16.msra.mxu0 0
    %2086 = vmatprep.mubr.bf16.mxu0 0
    %2087 = vmatmul.mubr.bf16.gmra.mrb[0].mxu0 %v1407
    %v2088 = vpop.f32.mrb[0].mxu0
    %v2089 = vadd.f32 %v1517, %v2088
    %v2090 = vpop.f32.mrb[0].mxu0
    %v2091 = vadd.f32 %v1521, %v2090
    %v2092 = vpop.f32.mrb[0].mxu0
    %v2093 = vadd.f32 %v1517, %v2092
    %v2094 = vpop.f32.mrb[0].mxu0
    %v2095 = vadd.f32 %v1521, %v2094
    %2096 = vmatprep.mubr.bf16.mxu0 0
    %2097 = vmatmul.mubr.bf16.gmra.mrb[0].mxu0 %v1408
    %v2098 = vpop.f32.mrb[0].mxu0
    %v2099 = vadd.f32 %v1517, %v2098
    %v2100 = vpop.f32.mrb[0].mxu0
    %v2101 = vadd.f32 %v1521, %v2100
    %v2102 = vpop.f32.mrb[0].mxu0
    %v2103 = vadd.f32 %v1517, %v2102
    %v2104 = vpop.f32.mrb[0].mxu0
    %v2105 = vadd.f32 %v1521, %v2104
    %2106 = vmatprep.mubr.bf16.mxu0 0
    %2107 = vmatmul.mubr.bf16.gmra.mrb[0].mxu0 %v1409
    %v2108 = vpop.f32.mrb[0].mxu0
    %v2109 = vadd.f32 %v1517, %v2108
    %v2110 = vpop.f32.mrb[0].mxu0
    %v2111 = vadd.f32 %v1521, %v2110
    %v2112 = vpop.f32.mrb[0].mxu0
    %v2113 = vpop.f32.mrb[0].mxu0
    %2114 = vdwg.mxu0
    %2115 = vmatprep.subr.bf16.mxu0 %v1865
    %2116 = vmatpush1.bf16.msra.mxu0 %v1864
    %2117 = vmatprep.subr.bf16.mxu0 %v1877
    %2118 = vmatpush1.bf16.msra.mxu0 %v1876
    %2119 = vmatprep.subr.bf16.mxu0 %v1889
    %2120 = vmatpush1.bf16.msra.mxu0 %v1888
    %2121 = vmatprep.subr.bf16.mxu0 %v1901
    %2122 = vmatpush1.bf16.msra.mxu0 %v1900
    %2123 = vmatprep.subr.bf16.mxu0 %v1913
    %2124 = vmatpush1.bf16.msra.mxu0 %v1912
    %2125 = vmatprep.subr.bf16.mxu0 %v1925
    %2126 = vmatpush1.bf16.msra.mxu0 %v1924
    %2127 = vmatprep.subr.bf16.mxu0 %v1937
    %2128 = vmatpush1.bf16.msra.mxu0 %v1936
    %2129 = vmatprep.subr.bf16.mxu0 %v1949
    %2130 = vmatpush1.bf16.msra.mxu0 %v1948
    %2131 = vmatprep.subr.bf16.mxu0 0
    %2132 = vmatpush1.bf16.msra.mxu0 0
    %2133 = vmatprep.subr.bf16.mxu0 0
    %2134 = vmatpush1.bf16.msra.mxu0 0
    %2135 = vmatprep.subr.bf16.mxu0 0
    %2136 = vmatpush1.bf16.msra.mxu0 0
    %2137 = vmatprep.subr.bf16.mxu0 0
    %2138 = vmatpush1.bf16.msra.mxu0 0
    %2139 = vmatprep.subr.bf16.mxu0 0
    %2140 = vmatpush1.bf16.msra.mxu0 0
    %2141 = vmatprep.subr.bf16.mxu0 0
    %2142 = vmatpush1.bf16.msra.mxu0 0
    %2143 = vmatprep.subr.bf16.mxu0 0
    %2144 = vmatpush1.bf16.msra.mxu0 0
    %2145 = vmatprep.subr.bf16.mxu0 0
    %2146 = vmatpush1.bf16.msra.mxu0 0
    %2147 = vmatprep.mubr.bf16.mxu0 0
    %2148 = vmatmul.mubr.bf16.gmra.mrb[0].mxu0 %v1407
    %v2149 = vpop.f32.mrb[0].mxu0
    %v2150 = vadd.f32 %v1525, %v2149
    %v2151 = vpop.f32.mrb[0].mxu0
    %v2152 = vadd.f32 %v1529, %v2151
    %v2153 = vpop.f32.mrb[0].mxu0
    %v2154 = vadd.f32 %v1525, %v2153
    %v2155 = vpop.f32.mrb[0].mxu0
    %v2156 = vadd.f32 %v1529, %v2155
    %2157 = vmatprep.mubr.bf16.mxu0 0
    %2158 = vmatmul.mubr.bf16.gmra.mrb[0].mxu0 %v1408
    %v2159 = vpop.f32.mrb[0].mxu0
    %v2160 = vadd.f32 %v1525, %v2159
    %v2161 = vpop.f32.mrb[0].mxu0
    %v2162 = vadd.f32 %v1529, %v2161
    %v2163 = vpop.f32.mrb[0].mxu0
    %v2164 = vadd.f32 %v1525, %v2163
    %v2165 = vpop.f32.mrb[0].mxu0
    %v2166 = vadd.f32 %v1529, %v2165
    %2167 = vmatprep.mubr.bf16.mxu0 0
    %2168 = vmatmul.mubr.bf16.gmra.mrb[0].mxu0 %v1409
    %v2169 = vpop.f32.mrb[0].mxu0
    %v2170 = vadd.f32 %v1525, %v2169
    %v2171 = vpop.f32.mrb[0].mxu0
    %v2172 = vadd.f32 %v1529, %v2171
    %v2173 = vpop.f32.mrb[0].mxu0
    %v2174 = vpop.f32.mrb[0].mxu0
    %2175 = vdwg.mxu0
    %2176 = vmatprep.subr.bf16.mxu0 %v1867
    %2177 = vmatpush1.bf16.msra.mxu0 %v1866
    %2178 = vmatprep.subr.bf16.mxu0 %v1879
    %2179 = vmatpush1.bf16.msra.mxu0 %v1878
    %2180 = vmatprep.subr.bf16.mxu0 %v1891
    %2181 = vmatpush1.bf16.msra.mxu0 %v1890
    %2182 = vmatprep.subr.bf16.mxu0 %v1903
    %2183 = vmatpush1.bf16.msra.mxu0 %v1902
    %2184 = vmatprep.subr.bf16.mxu0 %v1915
    %2185 = vmatpush1.bf16.msra.mxu0 %v1914
    %2186 = vmatprep.subr.bf16.mxu0 %v1927
    %2187 = vmatpush1.bf16.msra.mxu0 %v1926
    %2188 = vmatprep.subr.bf16.mxu0 %v1939
    %2189 = vmatpush1.bf16.msra.mxu0 %v1938
    %2190 = vmatprep.subr.bf16.mxu0 %v1951
    %2191 = vmatpush1.bf16.msra.mxu0 %v1950
    %2192 = vmatprep.subr.bf16.mxu0 0
    %2193 = vmatpush1.bf16.msra.mxu0 0
    %2194 = vmatprep.subr.bf16.mxu0 0
    %2195 = vmatpush1.bf16.msra.mxu0 0
    %2196 = vmatprep.subr.bf16.mxu0 0
    %2197 = vmatpush1.bf16.msra.mxu0 0
    %2198 = vmatprep.subr.bf16.mxu0 0
    %2199 = vmatpush1.bf16.msra.mxu0 0
    %2200 = vmatprep.subr.bf16.mxu0 0
    %2201 = vmatpush1.bf16.msra.mxu0 0
    %2202 = vmatprep.subr.bf16.mxu0 0
    %2203 = vmatpush1.bf16.msra.mxu0 0
    %2204 = vmatprep.subr.bf16.mxu0 0
    %2205 = vmatpush1.bf16.msra.mxu0 0
    %2206 = vmatprep.subr.bf16.mxu0 0
    %2207 = vmatpush1.bf16.msra.mxu0 0
    %2208 = vmatprep.mubr.bf16.mxu0 0
    %2209 = vmatmul.mubr.bf16.gmra.mrb[0].mxu0 %v1407
    %v2210 = vpop.f32.mrb[0].mxu0
    %v2211 = vadd.f32 %v1533, %v2210
    %v2212 = vpop.f32.mrb[0].mxu0
    %v2213 = vadd.f32 %v1537, %v2212
    %v2214 = vpop.f32.mrb[0].mxu0
    %v2215 = vadd.f32 %v1533, %v2214
    %v2216 = vpop.f32.mrb[0].mxu0
    %v2217 = vadd.f32 %v1537, %v2216
    %2218 = vmatprep.mubr.bf16.mxu0 0
    %2219 = vmatmul.mubr.bf16.gmra.mrb[0].mxu0 %v1408
    %v2220 = vpop.f32.mrb[0].mxu0
    %v2221 = vadd.f32 %v1533, %v2220
    %v2222 = vpop.f32.mrb[0].mxu0
    %v2223 = vadd.f32 %v1537, %v2222
    %v2224 = vpop.f32.mrb[0].mxu0
    %v2225 = vadd.f32 %v1533, %v2224
    %v2226 = vpop.f32.mrb[0].mxu0
    %v2227 = vadd.f32 %v1537, %v2226
    %2228 = vmatprep.mubr.bf16.mxu0 0
    %2229 = vmatmul.mubr.bf16.gmra.mrb[0].mxu0 %v1409
    %v2230 = vpop.f32.mrb[0].mxu0
    %v2231 = vadd.f32 %v1533, %v2230
    %v2232 = vpop.f32.mrb[0].mxu0
    %v2233 = vadd.f32 %v1537, %v2232
    %v2234 = vpop.f32.mrb[0].mxu0
    %v2235 = vpop.f32.mrb[0].mxu0
    %2236 = vdwg.mxu0
    %2237 = vmatprep.subr.bf16.mxu0 %v1869
    %2238 = vmatpush1.bf16.msra.mxu0 %v1868
    %2239 = vmatprep.subr.bf16.mxu0 %v1881
    %2240 = vmatpush1.bf16.msra.mxu0 %v1880
    %2241 = vmatprep.subr.bf16.mxu0 %v1893
    %2242 = vmatpush1.bf16.msra.mxu0 %v1892
    %2243 = vmatprep.subr.bf16.mxu0 %v1905
    %2244 = vmatpush1.bf16.msra.mxu0 %v1904
    %2245 = vmatprep.subr.bf16.mxu0 %v1917
    %2246 = vmatpush1.bf16.msra.mxu0 %v1916
    %2247 = vmatprep.subr.bf16.mxu0 %v1929
    %2248 = vmatpush1.bf16.msra.mxu0 %v1928
    %2249 = vmatprep.subr.bf16.mxu0 %v1941
    %2250 = vmatpush1.bf16.msra.mxu0 %v1940
    %2251 = vmatprep.subr.bf16.mxu0 %v1953
    %2252 = vmatpush1.bf16.msra.mxu0 %v1952
    %2253 = vmatprep.subr.bf16.mxu0 0
    %2254 = vmatpush1.bf16.msra.mxu0 0
    %2255 = vmatprep.subr.bf16.mxu0 0
    %2256 = vmatpush1.bf16.msra.mxu0 0
    %2257 = vmatprep.subr.bf16.mxu0 0
    %2258 = vmatpush1.bf16.msra.mxu0 0
    %2259 = vmatprep.subr.bf16.mxu0 0
    %2260 = vmatpush1.bf16.msra.mxu0 0
    %2261 = vmatprep.subr.bf16.mxu0 0
    %2262 = vmatpush1.bf16.msra.mxu0 0
    %2263 = vmatprep.subr.bf16.mxu0 0
    %2264 = vmatpush1.bf16.msra.mxu0 0
    %2265 = vmatprep.subr.bf16.mxu0 0
    %2266 = vmatpush1.bf16.msra.mxu0 0
    %2267 = vmatprep.subr.bf16.mxu0 0
    %2268 = vmatpush1.bf16.msra.mxu0 0
    %2269 = vmatprep.mubr.bf16.mxu0 0
    %2270 = vmatmul.mubr.bf16.gmra.mrb[0].mxu0 %v1407
    %v2271 = vpop.f32.mrb[0].mxu0
    %v2272 = vadd.f32 %v1541, %v2271
    %v2273 = vpop.f32.mrb[0].mxu0
    %v2274 = vadd.f32 %v1545, %v2273
    %v2275 = vpop.f32.mrb[0].mxu0
    %v2276 = vadd.f32 %v1541, %v2275
    %v2277 = vpop.f32.mrb[0].mxu0
    %v2278 = vadd.f32 %v1545, %v2277
    %2279 = vmatprep.mubr.bf16.mxu0 0
    %2280 = vmatmul.mubr.bf16.gmra.mrb[0].mxu0 %v1408
    %v2281 = vpop.f32.mrb[0].mxu0
    %v2282 = vadd.f32 %v1541, %v2281
    %v2283 = vpop.f32.mrb[0].mxu0
    %v2284 = vadd.f32 %v1545, %v2283
    %v2285 = vpop.f32.mrb[0].mxu0
    %v2286 = vadd.f32 %v1541, %v2285
    %v2287 = vpop.f32.mrb[0].mxu0
    %v2288 = vadd.f32 %v1545, %v2287
    %2289 = vmatprep.mubr.bf16.mxu0 0
    %2290 = vmatmul.mubr.bf16.gmra.mrb[0].mxu0 %v1409
    %v2291 = vpop.f32.mrb[0].mxu0
    %v2292 = vadd.f32 %v1541, %v2291
    %v2293 = vpop.f32.mrb[0].mxu0
    %v2294 = vadd.f32 %v1545, %v2293
    %v2295 = vpop.f32.mrb[0].mxu0
    %v2296 = vpop.f32.mrb[0].mxu0
    %2297 = vdwg.mxu0
    %2298 = vmatprep.subr.bf16.mxu0 %v1871
    %2299 = vmatpush1.bf16.msra.mxu0 %v1870
    %2300 = vmatprep.subr.bf16.mxu0 %v1883
    %2301 = vmatpush1.bf16.msra.mxu0 %v1882
    %2302 = vmatprep.subr.bf16.mxu0 %v1895
    %2303 = vmatpush1.bf16.msra.mxu0 %v1894
    %2304 = vmatprep.subr.bf16.mxu0 %v1907
    %2305 = vmatpush1.bf16.msra.mxu0 %v1906
    %2306 = vmatprep.subr.bf16.mxu0 %v1919
    %2307 = vmatpush1.bf16.msra.mxu0 %v1918
    %2308 = vmatprep.subr.bf16.mxu0 %v1931
    %2309 = vmatpush1.bf16.msra.mxu0 %v1930
    %2310 = vmatprep.subr.bf16.mxu0 %v1943
    %2311 = vmatpush1.bf16.msra.mxu0 %v1942
    %2312 = vmatprep.subr.bf16.mxu0 %v1955
    %2313 = vmatpush1.bf16.msra.mxu0 %v1954
    %2314 = vmatprep.subr.bf16.mxu0 0
    %2315 = vmatpush1.bf16.msra.mxu0 0
    %2316 = vmatprep.subr.bf16.mxu0 0
    %2317 = vmatpush1.bf16.msra.mxu0 0
    %2318 = vmatprep.subr.bf16.mxu0 0
    %2319 = vmatpush1.bf16.msra.mxu0 0
    %2320 = vmatprep.subr.bf16.mxu0 0
    %2321 = vmatpush1.bf16.msra.mxu0 0
    %2322 = vmatprep.subr.bf16.mxu0 0
    %2323 = vmatpush1.bf16.msra.mxu0 0
    %2324 = vmatprep.subr.bf16.mxu0 0
    %2325 = vmatpush1.bf16.msra.mxu0 0
    %2326 = vmatprep.subr.bf16.mxu0 0
    %2327 = vmatpush1.bf16.msra.mxu0 0
    %2328 = vmatprep.subr.bf16.mxu0 0
    %2329 = vmatpush1.bf16.msra.mxu0 0
    %2330 = vmatprep.mubr.bf16.mxu0 0
    %2331 = vmatmul.mubr.bf16.gmra.mrb[0].mxu0 %v1407
    %v2332 = vpop.f32.mrb[0].mxu0
    %v2333 = vadd.f32 %v1549, %v2332
    %v2334 = vpop.f32.mrb[0].mxu0
    %v2335 = vadd.f32 %v1553, %v2334
    %v2336 = vpop.f32.mrb[0].mxu0
    %v2337 = vadd.f32 %v1549, %v2336
    %v2338 = vpop.f32.mrb[0].mxu0
    %v2339 = vadd.f32 %v1553, %v2338
    %2340 = vmatprep.mubr.bf16.mxu0 0
    %2341 = vmatmul.mubr.bf16.gmra.mrb[0].mxu0 %v1408
    %v2342 = vpop.f32.mrb[0].mxu0
    %v2343 = vadd.f32 %v1549, %v2342
    %v2344 = vpop.f32.mrb[0].mxu0
    %v2345 = vadd.f32 %v1553, %v2344
    %v2346 = vpop.f32.mrb[0].mxu0
    %v2347 = vadd.f32 %v1549, %v2346
    %v2348 = vpop.f32.mrb[0].mxu0
    %v2349 = vadd.f32 %v1553, %v2348
    %2350 = vmatprep.mubr.bf16.mxu0 0
    %2351 = vmatmul.mubr.bf16.gmra.mrb[0].mxu0 %v1409
    %v2352 = vpop.f32.mrb[0].mxu0
    %v2353 = vadd.f32 %v1549, %v2352
    %v2354 = vpop.f32.mrb[0].mxu0
    %v2355 = vadd.f32 %v1553, %v2354
    %v2356 = vpop.f32.mrb[0].mxu0
    %v2357 = vpop.f32.mrb[0].mxu0
    %2358 = vdwg.mxu0
    %2359 = vmatprep.subr.bf16.mxu0 %v1873
    %2360 = vmatpush1.bf16.msra.mxu0 %v1872
    %2361 = vmatprep.subr.bf16.mxu0 %v1885
    %2362 = vmatpush1.bf16.msra.mxu0 %v1884
    %2363 = vmatprep.subr.bf16.mxu0 %v1897
    %2364 = vmatpush1.bf16.msra.mxu0 %v1896
    %2365 = vmatprep.subr.bf16.mxu0 %v1909
    %2366 = vmatpush1.bf16.msra.mxu0 %v1908
    %2367 = vmatprep.subr.bf16.mxu0 %v1921
    %2368 = vmatpush1.bf16.msra.mxu0 %v1920
    %2369 = vmatprep.subr.bf16.mxu0 %v1933
    %2370 = vmatpush1.bf16.msra.mxu0 %v1932
    %2371 = vmatprep.subr.bf16.mxu0 %v1945
    %2372 = vmatpush1.bf16.msra.mxu0 %v1944
    %2373 = vmatprep.subr.bf16.mxu0 %v1957
    %2374 = vmatpush1.bf16.msra.mxu0 %v1956
    %2375 = vmatprep.subr.bf16.mxu0 0
    %2376 = vmatpush1.bf16.msra.mxu0 0
    %2377 = vmatprep.subr.bf16.mxu0 0
    %2378 = vmatpush1.bf16.msra.mxu0 0
    %2379 = vmatprep.subr.bf16.mxu0 0
    %2380 = vmatpush1.bf16.msra.mxu0 0
    %2381 = vmatprep.subr.bf16.mxu0 0
    %2382 = vmatpush1.bf16.msra.mxu0 0
    %2383 = vmatprep.subr.bf16.mxu0 0
    %2384 = vmatpush1.bf16.msra.mxu0 0
    %2385 = vmatprep.subr.bf16.mxu0 0
    %2386 = vmatpush1.bf16.msra.mxu0 0
    %2387 = vmatprep.subr.bf16.mxu0 0
    %2388 = vmatpush1.bf16.msra.mxu0 0
    %2389 = vmatprep.subr.bf16.mxu0 0
    %2390 = vmatpush1.bf16.msra.mxu0 0
    %2391 = vmatprep.mubr.bf16.mxu0 0
    %2392 = vmatmul.mubr.bf16.gmra.mrb[0].mxu0 %v1407
    %v2393 = vpop.f32.mrb[0].mxu0
    %v2394 = vadd.f32 %v1557, %v2393
    %v2395 = vpop.f32.mrb[0].mxu0
    %v2396 = vadd.f32 %v1561, %v2395
    %v2397 = vpop.f32.mrb[0].mxu0
    %v2398 = vadd.f32 %v1557, %v2397
    %v2399 = vpop.f32.mrb[0].mxu0
    %v2400 = vadd.f32 %v1561, %v2399
    %2401 = vmatprep.mubr.bf16.mxu0 0
    %2402 = vmatmul.mubr.bf16.gmra.mrb[0].mxu0 %v1408
    %v2403 = vpop.f32.mrb[0].mxu0
    %v2404 = vadd.f32 %v1557, %v2403
    %v2405 = vpop.f32.mrb[0].mxu0
    %v2406 = vadd.f32 %v1561, %v2405
    %v2407 = vpop.f32.mrb[0].mxu0
    %v2408 = vadd.f32 %v1557, %v2407
    %v2409 = vpop.f32.mrb[0].mxu0
    %v2410 = vadd.f32 %v1561, %v2409
    %2411 = vmatprep.mubr.bf16.mxu0 0
    %2412 = vmatmul.mubr.bf16.gmra.mrb[0].mxu0 %v1409
    %v2413 = vpop.f32.mrb[0].mxu0
    %v2414 = vadd.f32 %v1557, %v2413
    %v2415 = vpop.f32.mrb[0].mxu0
    %v2416 = vadd.f32 %v1561, %v2415
    %v2417 = vpop.f32.mrb[0].mxu0
    %v2418 = vpop.f32.mrb[0].mxu0
    %2419 = vdwg.mxu0
    %v2420 = vlaneseq
    %v2421 = vshrl.u32 %v2420, 7
    %v2422 = vadd.s32 %v2421, 8
    %v2423 = vadd.s32 %v2421, 16
    %v2424 = vadd.s32 %v2421, 24
    %v2425 = vadd.s32 %v2421, 32
    %v2426 = vand.u32 %v2421, 7
    %v2427 = vand.u32 %v2422, 7
    %v2428 = vand.u32 %v2423, 7
    %v2429 = vand.u32 %v2424, 7
    %v2430 = vand.u32 %v2425, 7
    %v2431 = vlaneseq
    %v2432 = vand.u32 %v2431, 127
    %v2433 = vand.u32 %v2432, 7
    %vm2434 = vcmp.lt.s32.totalorder %v2426, 2
    %vm2435 = vcmp.lt.s32.totalorder %v2427, 2
    %vm2436 = vcmp.lt.s32.totalorder %v2428, 2
    %vm2437 = vcmp.lt.s32.totalorder %v2429, 2
    %vm2438 = vcmp.lt.s32.totalorder %v2430, 2
    %vm2439 = vcmp.lt.s32.totalorder %v2433, 2
    %vm2440 = vmxor %vm2434, %vm2439
    %vm2441 = vmxor %vm2435, %vm2439
    %vm2442 = vmxor %vm2436, %vm2439
    %vm2443 = vmxor %vm2437, %vm2439
    %vm2444 = vmxor %vm2438, %vm2439
    %vm2445 = vcmp.lt.s32.totalorder %v2433, 6
    %vm2446 = vmand %vm2440, %vm2445
    %vm2447 = vmand %vm2441, %vm2445
    %vm2448 = vmand %vm2442, %vm2445
    %vm2449 = vmand %vm2443, %vm2445
    %vm2450 = vmand %vm2444, %vm2445
    %v2451 = vsel %vm2446, 0.0, -1e+30
    %v2452 = vsel %vm2447, 0.0, -1e+30
    %v2453 = vsel %vm2448, 0.0, -1e+30
    %v2454 = vsel %vm2449, 0.0, -1e+30
    %v2455 = vsel %vm2450, 0.0, -1e+30
    %v2456 = vpack.c.bf16 %v2093, %v2089
    %v2457 = vpack.c.bf16 %v2103, %v2099
    %v2458 = vpack.c.bf16 %v2109, %v2109
    %v2459 = vpack.c.bf16 %v2215, %v2211
    %v2460 = vpack.c.bf16 %v2225, %v2221
    %v2461 = vpack.c.bf16 %v2231, %v2231
    %v2462 = vpack.c.bf16 %v2337, %v2333
    %v2463 = vpack.c.bf16 %v2347, %v2343
    %v2464 = vpack.c.bf16 %v2353, %v2353
    %2465 = vmatprep.subr.bf16.mxu0 0
    %2466 = vmatpush1.bf16.xpose.msra.mxu0 %v2459
    %2467 = vmatprep.subr.bf16.mxu0 0
    %2468 = vmatpush1.bf16.xpose.msra.mxu0 %v2460
    %2469 = vmatprep.subr.bf16.mxu0 0
    %2470 = vmatpush1.bf16.xpose.msra.mxu0 %v2461
    %2471 = vmatprep.subr.bf16.mxu0 0
    %2472 = vmatpush1.bf16.xpose.msra.mxu0 0
    %2473 = vmatprep.subr.bf16.mxu0 0
    %2474 = vmatpush1.bf16.xpose.msra.mxu0 0
    %2475 = vmatprep.subr.bf16.mxu0 0
    %2476 = vmatpush1.bf16.xpose.msra.mxu0 0
    %2477 = vmatprep.subr.bf16.mxu0 0
    %2478 = vmatpush1.bf16.xpose.msra.mxu0 0
    %2479 = vmatprep.subr.bf16.mxu0 0
    %2480 = vmatpush1.bf16.xpose.msra.mxu0 0
    %2481 = vmatprep.subr.bf16.mxu0 0
    %2482 = vmatpush1.bf16.xpose.msra.mxu0 0
    %2483 = vmatprep.subr.bf16.mxu0 0
    %2484 = vmatpush1.bf16.xpose.msra.mxu0 0
    %2485 = vmatprep.subr.bf16.mxu0 0
    %2486 = vmatpush1.bf16.xpose.msra.mxu0 0
    %2487 = vmatprep.subr.bf16.mxu0 0
    %2488 = vmatpush1.bf16.xpose.msra.mxu0 0
    %2489 = vmatprep.subr.bf16.mxu0 0
    %2490 = vmatpush1.bf16.xpose.msra.mxu0 0
    %2491 = vmatprep.subr.bf16.mxu0 0
    %2492 = vmatpush1.bf16.xpose.msra.mxu0 0
    %2493 = vmatprep.subr.bf16.mxu0 0
    %2494 = vmatpush1.bf16.xpose.msra.mxu0 0
    %2495 = vmatprep.subr.bf16.mxu0 0
    %2496 = vmatpush1.bf16.xpose.msra.mxu0 0
    %2497 = vmatprep.mubr.bf16.mxu0 0
    %2498 = vmatmul.mubr.bf16.gmra.mrb[0].mxu0 %v2456
    %v2499 = vpop.f32.mrb[0].mxu0
    %v2500 = vadd.f32 %v2451, %v2499
    %v2501 = vpop.f32.mrb[0].mxu0
    %v2502 = vpop.f32.mrb[0].mxu0
    %v2503 = vadd.f32 %v2452, %v2502
    %v2504 = vpop.f32.mrb[0].mxu0
    %2505 = vmatprep.mubr.bf16.mxu0 0
    %2506 = vmatmul.mubr.bf16.gmra.mrb[0].mxu0 %v2457
    %v2507 = vpop.f32.mrb[0].mxu0
    %v2508 = vadd.f32 %v2453, %v2507
    %v2509 = vpop.f32.mrb[0].mxu0
    %v2510 = vpop.f32.mrb[0].mxu0
    %v2511 = vadd.f32 %v2454, %v2510
    %v2512 = vpop.f32.mrb[0].mxu0
    %2513 = vmatprep.mubr.bf16.mxu0 0
    %2514 = vmatmul.mubr.bf16.gmra.mrb[0].mxu0 %v2458
    %v2515 = vpop.f32.mrb[0].mxu0
    %v2516 = vadd.f32 %v2455, %v2515
    %v2517 = vpop.f32.mrb[0].mxu0
    %v2518 = vpop.f32.mrb[0].mxu0
    %v2519 = vpop.f32.mrb[0].mxu0
    %2520 = vdwg.mxu0
    %vm2521 = vcmask 326656
    %v2522 = vsel %vm2521, %v2500, -inf
    %2523 = vmax.xlane.f32.xlu0 %v2522
    %v2524 = vpop.xlane.xlu0 %2523
    %v2525 = vsel %vm2521, %v2503, -inf
    %2526 = vmax.xlane.f32.xlu0 %v2525
    %v2527 = vpop.xlane.xlu0 %2526
    %v2528 = vsel %vm2521, %v2508, -inf
    %2529 = vmax.xlane.f32.xlu0 %v2528
    %v2530 = vpop.xlane.xlu0 %2529
    %v2531 = vsel %vm2521, %v2511, -inf
    %2532 = vmax.xlane.f32.xlu0 %v2531
    %v2533 = vpop.xlane.xlu0 %2532
    %v2534 = vsel %vm2521, %v2516, -inf
    %2535 = vmax.xlane.f32.xlu0 %v2534
    %v2536 = vpop.xlane.xlu0 %2535
    %v2537 = vsub.f32 %v2500, %v2524
    %v2538 = vsub.f32 %v2503, %v2527
    %v2539 = vsub.f32 %v2508, %v2530
    %v2540 = vsub.f32 %v2511, %v2533
    %v2541 = vsub.f32 %v2516, %v2536
    %v2542 = vmul.f32 %v2537, 1.442695
    %v2543 = vpow.pop %v2542
    %v2544 = vmul.f32 %v2538, 1.442695
    %v2545 = vpow.pop %v2544
    %v2546 = vmul.f32 %v2539, 1.442695
    %v2547 = vpow.pop %v2546
    %v2548 = vmul.f32 %v2540, 1.442695
    %v2549 = vpow.pop %v2548
    %v2550 = vmul.f32 %v2541, 1.442695
    %v2551 = vpow.pop %v2550
    %v2552 = vsel %vm2521, %v2543, 0.0
    %2553 = vadd.xlane.f32.xlu0 %v2552
    %v2554 = vpop.xlane.xlu0 %2553
    %v2555 = vsel %vm2521, %v2545, 0.0
    %2556 = vadd.xlane.f32.xlu0 %v2555
    %v2557 = vpop.xlane.xlu0 %2556
    %v2558 = vsel %vm2521, %v2547, 0.0
    %2559 = vadd.xlane.f32.xlu0 %v2558
    %v2560 = vpop.xlane.xlu0 %2559
    %v2561 = vsel %vm2521, %v2549, 0.0
    %2562 = vadd.xlane.f32.xlu0 %v2561
    %v2563 = vpop.xlane.xlu0 %2562
    %v2564 = vsel %vm2521, %v2551, 0.0
    %2565 = vadd.xlane.f32.xlu0 %v2564
    %v2566 = vpop.xlane.xlu0 %2565
    %v2567 = vrcp.pop %v2554
    %v2568 = vrcp.pop %v2557
    %v2569 = vrcp.pop %v2560
    %v2570 = vrcp.pop %v2563
    %v2571 = vrcp.pop %v2566
    %v2572 = vmul.f32 %v2543, %v2567
    %v2573 = vmul.f32 %v2545, %v2568
    %v2574 = vmul.f32 %v2547, %v2569
    %v2575 = vmul.f32 %v2549, %v2570
    %v2576 = vmul.f32 %v2551, %v2571
    %v2577 = vpack.c.bf16 %v2573, %v2572
    %v2578 = vpack.c.bf16 %v2575, %v2574
    %v2579 = vpack.c.bf16 %v2576, %v2576
    %v2581 = vsel %vm2521, %v2577, 0
    %v2584 = vsel %vm2521, %v2578, 0
    %v2587 = vsel %vm2521, %v2579, 0
    %vm2589 = vcmask 1043456
    %v2591 = vsel %vm2589, %v2464, 0
    %2593 = vmatprep.subr.bf16.mxu0 0
    %2594 = vmatpush1.bf16.msra.mxu0 %v2462
    %2595 = vmatprep.subr.bf16.mxu0 0
    %2596 = vmatpush1.bf16.msra.mxu0 %v2463
    %2597 = vmatprep.subr.bf16.mxu0 0
    %2598 = vmatpush1.bf16.msra.mxu0 %v2591
    %2599 = vmatprep.subr.bf16.mxu0 0
    %2600 = vmatpush1.bf16.msra.mxu0 0
    %2601 = vmatprep.subr.bf16.mxu0 0
    %2602 = vmatpush1.bf16.msra.mxu0 0
    %2603 = vmatprep.subr.bf16.mxu0 0
    %2604 = vmatpush1.bf16.msra.mxu0 0
    %2605 = vmatprep.subr.bf16.mxu0 0
    %2606 = vmatpush1.bf16.msra.mxu0 0
    %2607 = vmatprep.subr.bf16.mxu0 0
    %2608 = vmatpush1.bf16.msra.mxu0 0
    %2609 = vmatprep.subr.bf16.mxu0 0
    %2610 = vmatpush1.bf16.msra.mxu0 0
    %2611 = vmatprep.subr.bf16.mxu0 0
    %2612 = vmatpush1.bf16.msra.mxu0 0
    %2613 = vmatprep.subr.bf16.mxu0 0
    %2614 = vmatpush1.bf16.msra.mxu0 0
    %2615 = vmatprep.subr.bf16.mxu0 0
    %2616 = vmatpush1.bf16.msra.mxu0 0
    %2617 = vmatprep.subr.bf16.mxu0 0
    %2618 = vmatpush1.bf16.msra.mxu0 0
    %2619 = vmatprep.subr.bf16.mxu0 0
    %2620 = vmatpush1.bf16.msra.mxu0 0
    %2621 = vmatprep.subr.bf16.mxu0 0
    %2622 = vmatpush1.bf16.msra.mxu0 0
    %2623 = vmatprep.subr.bf16.mxu0 0
    %2624 = vmatpush1.bf16.msra.mxu0 0
    %2625 = vmatprep.mubr.bf16.mxu0 0
    %2626 = vmatmul.mubr.bf16.gmra.mrb[0].mxu0 %v2581
    %v2627 = vpop.f32.mrb[0].mxu0
    %v2628 = vadd.f32 0.0, %v2627
    %v2629 = vpop.f32.mrb[0].mxu0
    %v2630 = vpop.f32.mrb[0].mxu0
    %v2631 = vadd.f32 0.0, %v2630
    %v2632 = vpop.f32.mrb[0].mxu0
    %2633 = vmatprep.mubr.bf16.mxu0 0
    %2634 = vmatmul.mubr.bf16.gmra.mrb[0].mxu0 %v2584
    %v2635 = vpop.f32.mrb[0].mxu0
    %v2636 = vadd.f32 0.0, %v2635
    %v2637 = vpop.f32.mrb[0].mxu0
    %v2638 = vpop.f32.mrb[0].mxu0
    %v2639 = vadd.f32 0.0, %v2638
    %v2640 = vpop.f32.mrb[0].mxu0
    %2641 = vmatprep.mubr.bf16.mxu0 0
    %2642 = vmatmul.mubr.bf16.gmra.mrb[0].mxu0 %v2587
    %v2643 = vpop.f32.mrb[0].mxu0
    %v2644 = vadd.f32 0.0, %v2643
    %v2645 = vpop.f32.mrb[0].mxu0
    %v2646 = vpop.f32.mrb[0].mxu0
    %v2647 = vpop.f32.mrb[0].mxu0
    %2648 = vdwg.mxu0
    %v2649 = vadd.f32 %v2628, %v2631
    %v2650 = vadd.f32 %v2649, %v2636
    %v2651 = vadd.f32 %v2650, %v2639
    %v2652 = vadd.f32 %v2651, %v2644
    %v2653 = vpack.c.bf16 %v2652, %v2652
    %v2654 = vld [vmem:[#allocation7] sm:$0xf]
    %v2655 = vld [vmem:[#allocation7 + $0x10] sm:$0xf]
    %v2656 = vld [vmem:[#allocation7 + $0x20] sm:$0xf]
    %v2657 = vld [vmem:[#allocation7 + $0x30] sm:$0xf]
    %v2658 = vld [vmem:[#allocation7 + $0x40] sm:$0xf]
    %v2659 = vld [vmem:[#allocation7 + $0x50] sm:$0xf]
    %v2660 = vld [vmem:[#allocation7 + $0x60] sm:$0xf]
    %v2661 = vld [vmem:[#allocation7 + $0x70] sm:$0xf]
    %v2662 = vld [vmem:[#allocation7 + $0x80] sm:$0xf]
    %v2663 = vld [vmem:[#allocation7 + $0x90] sm:$0xf]
    %v2664 = vld [vmem:[#allocation7 + $0xa0] sm:$0xf]
    %v2665 = vld [vmem:[#allocation7 + $0xb0] sm:$0xf]
    %v2666 = vld [vmem:[#allocation7 + $0xc0] sm:$0xf]
    %v2667 = vld [vmem:[#allocation7 + $0xd0] sm:$0xf]
    %v2668 = vld [vmem:[#allocation7 + $0xe0] sm:$0xf]
    %v2669 = vld [vmem:[#allocation7 + $0xf0] sm:$0xf]
    %v2670 = vpack.c.bf16 %v2095, %v2091
    %v2671 = vpack.c.bf16 %v2105, %v2101
    %v2672 = vpack.c.bf16 %v2111, %v2111
    %v2673 = vpack.c.bf16 %v2217, %v2213
    %v2674 = vpack.c.bf16 %v2227, %v2223
    %v2675 = vpack.c.bf16 %v2233, %v2233
    %v2676 = vpack.c.bf16 %v2339, %v2335
    %v2677 = vpack.c.bf16 %v2349, %v2345
    %v2678 = vpack.c.bf16 %v2355, %v2355
    %2679 = vmatprep.subr.bf16.mxu0 0
    %2680 = vmatpush1.bf16.xpose.msra.mxu0 %v2673
    %2681 = vmatprep.subr.bf16.mxu0 0
    %2682 = vmatpush1.bf16.xpose.msra.mxu0 %v2674
    %2683 = vmatprep.subr.bf16.mxu0 0
    %2684 = vmatpush1.bf16.xpose.msra.mxu0 %v2675
    %2685 = vmatprep.subr.bf16.mxu0 0
    %2686 = vmatpush1.bf16.xpose.msra.mxu0 0
    %2687 = vmatprep.subr.bf16.mxu0 0
    %2688 = vmatpush1.bf16.xpose.msra.mxu0 0
    %2689 = vmatprep.subr.bf16.mxu0 0
    %2690 = vmatpush1.bf16.xpose.msra.mxu0 0
    %2691 = vmatprep.subr.bf16.mxu0 0
    %2692 = vmatpush1.bf16.xpose.msra.mxu0 0
    %2693 = vmatprep.subr.bf16.mxu0 0
    %2694 = vmatpush1.bf16.xpose.msra.mxu0 0
    %2695 = vmatprep.subr.bf16.mxu0 0
    %2696 = vmatpush1.bf16.xpose.msra.mxu0 0
    %2697 = vmatprep.subr.bf16.mxu0 0
    %2698 = vmatpush1.bf16.xpose.msra.mxu0 0
    %2699 = vmatprep.subr.bf16.mxu0 0
    %2700 = vmatpush1.bf16.xpose.msra.mxu0 0
    %2701 = vmatprep.subr.bf16.mxu0 0
    %2702 = vmatpush1.bf16.xpose.msra.mxu0 0
    %2703 = vmatprep.subr.bf16.mxu0 0
    %2704 = vmatpush1.bf16.xpose.msra.mxu0 0
    %2705 = vmatprep.subr.bf16.mxu0 0
    %2706 = vmatpush1.bf16.xpose.msra.mxu0 0
    %2707 = vmatprep.subr.bf16.mxu0 0
    %2708 = vmatpush1.bf16.xpose.msra.mxu0 0
    %2709 = vmatprep.subr.bf16.mxu0 0
    %2710 = vmatpush1.bf16.xpose.msra.mxu0 0
    %2711 = vmatprep.mubr.bf16.mxu0 0
    %2712 = vmatmul.mubr.bf16.gmra.mrb[0].mxu0 %v2670
    %v2713 = vpop.f32.mrb[0].mxu0
    %v2714 = vadd.f32 %v2451, %v2713
    %v2715 = vpop.f32.mrb[0].mxu0
    %v2716 = vpop.f32.mrb[0].mxu0
    %v2717 = vadd.f32 %v2452, %v2716
    %v2718 = vpop.f32.mrb[0].mxu0
    %2719 = vmatprep.mubr.bf16.mxu0 0
    %2720 = vmatmul.mubr.bf16.gmra.mrb[0].mxu0 %v2671
    %v2721 = vpop.f32.mrb[0].mxu0
    %v2722 = vadd.f32 %v2453, %v2721
    %v2723 = vpop.f32.mrb[0].mxu0
    %v2724 = vpop.f32.mrb[0].mxu0
    %v2725 = vadd.f32 %v2454, %v2724
    %v2726 = vpop.f32.mrb[0].mxu0
    %2727 = vmatprep.mubr.bf16.mxu0 0
    %2728 = vmatmul.mubr.bf16.gmra.mrb[0].mxu0 %v2672
    %v2729 = vpop.f32.mrb[0].mxu0
    %v2730 = vadd.f32 %v2455, %v2729
    %v2731 = vpop.f32.mrb[0].mxu0
    %v2732 = vpop.f32.mrb[0].mxu0
    %v2733 = vpop.f32.mrb[0].mxu0
    %2734 = vdwg.mxu0
    %v2735 = vsel %vm2521, %v2714, -inf
    %2736 = vmax.xlane.f32.xlu0 %v2735
    %v2737 = vpop.xlane.xlu0 %2736
    %v2738 = vsel %vm2521, %v2717, -inf
    %2739 = vmax.xlane.f32.xlu0 %v2738
    %v2740 = vpop.xlane.xlu0 %2739
    %v2741 = vsel %vm2521, %v2722, -inf
    %2742 = vmax.xlane.f32.xlu0 %v2741
    %v2743 = vpop.xlane.xlu0 %2742
    %v2744 = vsel %vm2521, %v2725, -inf
    %2745 = vmax.xlane.f32.xlu0 %v2744
    %v2746 = vpop.xlane.xlu0 %2745
    %v2747 = vsel %vm2521, %v2730, -inf
    %2748 = vmax.xlane.f32.xlu0 %v2747
    %v2749 = vpop.xlane.xlu0 %2748
    %v2750 = vsub.f32 %v2714, %v2737
    %v2751 = vsub.f32 %v2717, %v2740
    %v2752 = vsub.f32 %v2722, %v2743
    %v2753 = vsub.f32 %v2725, %v2746
    %v2754 = vsub.f32 %v2730, %v2749
    %v2755 = vmul.f32 %v2750, 1.442695
    %v2756 = vpow.pop %v2755
    %v2757 = vmul.f32 %v2751, 1.442695
    %v2758 = vpow.pop %v2757
    %v2759 = vmul.f32 %v2752, 1.442695
    %v2760 = vpow.pop %v2759
    %v2761 = vmul.f32 %v2753, 1.442695
    %v2762 = vpow.pop %v2761
    %v2763 = vmul.f32 %v2754, 1.442695
    %v2764 = vpow.pop %v2763
    %v2765 = vsel %vm2521, %v2756, 0.0
    %2766 = vadd.xlane.f32.xlu0 %v2765
    %v2767 = vpop.xlane.xlu0 %2766
    %v2768 = vsel %vm2521, %v2758, 0.0
    %2769 = vadd.xlane.f32.xlu0 %v2768
    %v2770 = vpop.xlane.xlu0 %2769
    %v2771 = vsel %vm2521, %v2760, 0.0
    %2772 = vadd.xlane.f32.xlu0 %v2771
    %v2773 = vpop.xlane.xlu0 %2772
    %v2774 = vsel %vm2521, %v2762, 0.0
    %2775 = vadd.xlane.f32.xlu0 %v2774
    %v2776 = vpop.xlane.xlu0 %2775
    %v2777 = vsel %vm2521, %v2764, 0.0
    %2778 = vadd.xlane.f32.xlu0 %v2777
    %v2779 = vpop.xlane.xlu0 %2778
    %v2780 = vrcp.pop %v2767
    %v2781 = vrcp.pop %v2770
    %v2782 = vrcp.pop %v2773
    %v2783 = vrcp.pop %v2776
    %v2784 = vrcp.pop %v2779
    %v2785 = vmul.f32 %v2756, %v2780
    %v2786 = vmul.f32 %v2758, %v2781
    %v2787 = vmul.f32 %v2760, %v2782
    %v2788 = vmul.f32 %v2762, %v2783
    %v2789 = vmul.f32 %v2764, %v2784
    %v2790 = vpack.c.bf16 %v2786, %v2785
    %v2791 = vpack.c.bf16 %v2788, %v2787
    %v2792 = vpack.c.bf16 %v2789, %v2789
    %v2794 = vsel %vm2521, %v2790, 0
    %v2797 = vsel %vm2521, %v2791, 0
    %v2800 = vsel %vm2521, %v2792, 0
    %v2803 = vsel %vm2589, %v2678, 0
    %2805 = vmatprep.subr.bf16.mxu0 0
    %2806 = vmatpush1.bf16.msra.mxu0 %v2676
    %2807 = vmatprep.subr.bf16.mxu0 0
    %2808 = vmatpush1.bf16.msra.mxu0 %v2677
    %2809 = vmatprep.subr.bf16.mxu0 0
    %2810 = vmatpush1.bf16.msra.mxu0 %v2803
    %2811 = vmatprep.subr.bf16.mxu0 0
    %2812 = vmatpush1.bf16.msra.mxu0 0
    %2813 = vmatprep.subr.bf16.mxu0 0
    %2814 = vmatpush1.bf16.msra.mxu0 0
    %2815 = vmatprep.subr.bf16.mxu0 0
    %2816 = vmatpush1.bf16.msra.mxu0 0
    %2817 = vmatprep.subr.bf16.mxu0 0
    %2818 = vmatpush1.bf16.msra.mxu0 0
    %2819 = vmatprep.subr.bf16.mxu0 0
    %2820 = vmatpush1.bf16.msra.mxu0 0
    %2821 = vmatprep.subr.bf16.mxu0 0
    %2822 = vmatpush1.bf16.msra.mxu0 0
    %2823 = vmatprep.subr.bf16.mxu0 0
    %2824 = vmatpush1.bf16.msra.mxu0 0
    %2825 = vmatprep.subr.bf16.mxu0 0
    %2826 = vmatpush1.bf16.msra.mxu0 0
    %2827 = vmatprep.subr.bf16.mxu0 0
    %2828 = vmatpush1.bf16.msra.mxu0 0
    %2829 = vmatprep.subr.bf16.mxu0 0
    %2830 = vmatpush1.bf16.msra.mxu0 0
    %2831 = vmatprep.subr.bf16.mxu0 0
    %2832 = vmatpush1.bf16.msra.mxu0 0
    %2833 = vmatprep.subr.bf16.mxu0 0
    %2834 = vmatpush1.bf16.msra.mxu0 0
    %2835 = vmatprep.subr.bf16.mxu0 0
    %2836 = vmatpush1.bf16.msra.mxu0 0
    %2837 = vmatprep.mubr.bf16.mxu0 0
    %2838 = vmatmul.mubr.bf16.gmra.mrb[0].mxu0 %v2794
    %v2839 = vpop.f32.mrb[0].mxu0
    %v2840 = vadd.f32 0.0, %v2839
    %v2841 = vpop.f32.mrb[0].mxu0
    %v2842 = vpop.f32.mrb[0].mxu0
    %v2843 = vadd.f32 0.0, %v2842
    %v2844 = vpop.f32.mrb[0].mxu0
    %2845 = vmatprep.mubr.bf16.mxu0 0
    %2846 = vmatmul.mubr.bf16.gmra.mrb[0].mxu0 %v2797
    %v2847 = vpop.f32.mrb[0].mxu0
    %v2848 = vadd.f32 0.0, %v2847
    %v2849 = vpop.f32.mrb[0].mxu0
    %v2850 = vpop.f32.mrb[0].mxu0
    %v2851 = vadd.f32 0.0, %v2850
    %v2852 = vpop.f32.mrb[0].mxu0
    %2853 = vmatprep.mubr.bf16.mxu0 0
    %2854 = vmatmul.mubr.bf16.gmra.mrb[0].mxu0 %v2800
    %v2855 = vpop.f32.mrb[0].mxu0
    %v2856 = vadd.f32 0.0, %v2855
    %v2857 = vpop.f32.mrb[0].mxu0
    %v2858 = vpop.f32.mrb[0].mxu0
    %v2859 = vpop.f32.mrb[0].mxu0
    %2860 = vdwg.mxu0
    %v2861 = vadd.f32 %v2840, %v2843
    %v2862 = vadd.f32 %v2861, %v2848
    %v2863 = vadd.f32 %v2862, %v2851
    %v2864 = vadd.f32 %v2863, %v2856
    %v2865 = vpack.c.bf16 %v2864, %v2864
    %v2866 = vld [vmem:[#allocation7 + $0x4] sm:$0xf]
    %v2867 = vld [vmem:[#allocation7 + $0x14] sm:$0xf]
    %v2868 = vld [vmem:[#allocation7 + $0x24] sm:$0xf]
    %v2869 = vld [vmem:[#allocation7 + $0x34] sm:$0xf]
    %v2870 = vld [vmem:[#allocation7 + $0x44] sm:$0xf]
    %v2871 = vld [vmem:[#allocation7 + $0x54] sm:$0xf]
    %v2872 = vld [vmem:[#allocation7 + $0x64] sm:$0xf]
    %v2873 = vld [vmem:[#allocation7 + $0x74] sm:$0xf]
    %v2874 = vld [vmem:[#allocation7 + $0x84] sm:$0xf]
    %v2875 = vld [vmem:[#allocation7 + $0x94] sm:$0xf]
    %v2876 = vld [vmem:[#allocation7 + $0xa4] sm:$0xf]
    %v2877 = vld [vmem:[#allocation7 + $0xb4] sm:$0xf]
    %v2878 = vld [vmem:[#allocation7 + $0xc4] sm:$0xf]
    %v2879 = vld [vmem:[#allocation7 + $0xd4] sm:$0xf]
    %v2880 = vld [vmem:[#allocation7 + $0xe4] sm:$0xf]
    %v2881 = vld [vmem:[#allocation7 + $0xf4] sm:$0xf]
    %v2898 = vunpack.c.l.b16 %v2866
    %v2899 = vunpack.c.l.b16 %v2867
    %v2900 = vunpack.c.l.b16 %v2868
    %v2901 = vunpack.c.l.b16 %v2869
    %v2902 = vunpack.c.l.b16 %v2870
    %v2903 = vunpack.c.l.b16 %v2871
    %v2904 = vunpack.c.l.b16 %v2872
    %v2905 = vunpack.c.l.b16 %v2873
    %v2906 = vunpack.c.l.b16 %v2874
    %v2907 = vunpack.c.l.b16 %v2875
    %v2908 = vunpack.c.l.b16 %v2876
    %v2909 = vunpack.c.l.b16 %v2877
    %v2910 = vunpack.c.l.b16 %v2878
    %v2911 = vunpack.c.l.b16 %v2879
    %v2912 = vunpack.c.l.b16 %v2880
    %v2913 = vunpack.c.l.b16 %v2881
    %v2914 = vpack.c.b16 %v2899, %v2898
    %v2915 = vpack.c.b16 %v2901, %v2900
    %v2916 = vpack.c.b16 %v2903, %v2902
    %v2917 = vpack.c.b16 %v2905, %v2904
    %v2918 = vpack.c.b16 %v2907, %v2906
    %v2919 = vpack.c.b16 %v2909, %v2908
    %v2920 = vpack.c.b16 %v2911, %v2910
    %v2921 = vpack.c.b16 %v2913, %v2912
    %2930 = vmatprep.subr.bf16.mxu0 0
    %2931 = vmatpush1.bf16.msra.mxu0 %v2914
    %2932 = vmatprep.subr.bf16.mxu0 0
    %2933 = vmatpush1.bf16.msra.mxu0 %v2915
    %2934 = vmatprep.subr.bf16.mxu0 0
    %2935 = vmatpush1.bf16.msra.mxu0 %v2916
    %2936 = vmatprep.subr.bf16.mxu0 0
    %2937 = vmatpush1.bf16.msra.mxu0 %v2917
    %2938 = vmatprep.subr.bf16.mxu0 0
    %2939 = vmatpush1.bf16.msra.mxu0 %v2918
    %2940 = vmatprep.subr.bf16.mxu0 0
    %2941 = vmatpush1.bf16.msra.mxu0 %v2919
    %2942 = vmatprep.subr.bf16.mxu0 0
    %2943 = vmatpush1.bf16.msra.mxu0 %v2920
    %2944 = vmatprep.subr.bf16.mxu0 0
    %2945 = vmatpush1.bf16.msra.mxu0 %v2921
    %2946 = vmatprep.subr.bf16.mxu0 0
    %2947 = vmatpush1.bf16.msra.mxu0 0
    %2948 = vmatprep.subr.bf16.mxu0 0
    %2949 = vmatpush1.bf16.msra.mxu0 0
    %2950 = vmatprep.subr.bf16.mxu0 0
    %2951 = vmatpush1.bf16.msra.mxu0 0
    %2952 = vmatprep.subr.bf16.mxu0 0
    %2953 = vmatpush1.bf16.msra.mxu0 0
    %2954 = vmatprep.subr.bf16.mxu0 0
    %2955 = vmatpush1.bf16.msra.mxu0 0
    %2956 = vmatprep.subr.bf16.mxu0 0
    %2957 = vmatpush1.bf16.msra.mxu0 0
    %2958 = vmatprep.subr.bf16.mxu0 0
    %2959 = vmatpush1.bf16.msra.mxu0 0
    %2960 = vmatprep.subr.bf16.mxu0 0
    %2961 = vmatpush1.bf16.msra.mxu0 0
    %2962 = vmatprep.mubr.bf16.mxu0 0
    %2963 = vmatmul.mubr.bf16.gmra.mrb[0].mxu0 %v2865
    %v2964 = vpop.f32.mrb[0].mxu0
    %v2965 = vadd.f32 0.0, %v2964
    %v2966 = vpop.f32.mrb[0].mxu0
    %v2967 = vpop.f32.mrb[0].mxu0
    %v2968 = vpop.f32.mrb[0].mxu0
    %2969 = vdwg.mxu0
    %v2986 = vunpack.c.l.b16 %v2654
    %v2987 = vunpack.c.l.b16 %v2655
    %v2988 = vunpack.c.l.b16 %v2656
    %v2989 = vunpack.c.l.b16 %v2657
    %v2990 = vunpack.c.l.b16 %v2658
    %v2991 = vunpack.c.l.b16 %v2659
    %v2992 = vunpack.c.l.b16 %v2660
    %v2993 = vunpack.c.l.b16 %v2661
    %v2994 = vunpack.c.l.b16 %v2662
    %v2995 = vunpack.c.l.b16 %v2663
    %v2996 = vunpack.c.l.b16 %v2664
    %v2997 = vunpack.c.l.b16 %v2665
    %v2998 = vunpack.c.l.b16 %v2666
    %v2999 = vunpack.c.l.b16 %v2667
    %v3000 = vunpack.c.l.b16 %v2668
    %v3001 = vunpack.c.l.b16 %v2669
    %v3002 = vpack.c.b16 %v2987, %v2986
    %v3003 = vpack.c.b16 %v2989, %v2988
    %v3004 = vpack.c.b16 %v2991, %v2990
    %v3005 = vpack.c.b16 %v2993, %v2992
    %v3006 = vpack.c.b16 %v2995, %v2994
    %v3007 = vpack.c.b16 %v2997, %v2996
    %v3008 = vpack.c.b16 %v2999, %v2998
    %v3009 = vpack.c.b16 %v3001, %v3000
    %3018 = vmatprep.subr.bf16.mxu0 0
    %3019 = vmatpush1.bf16.msra.mxu0 %v3002
    %3020 = vmatprep.subr.bf16.mxu0 0
    %3021 = vmatpush1.bf16.msra.mxu0 %v3003
    %3022 = vmatprep.subr.bf16.mxu0 0
    %3023 = vmatpush1.bf16.msra.mxu0 %v3004
    %3024 = vmatprep.subr.bf16.mxu0 0
    %3025 = vmatpush1.bf16.msra.mxu0 %v3005
    %3026 = vmatprep.subr.bf16.mxu0 0
    %3027 = vmatpush1.bf16.msra.mxu0 %v3006
    %3028 = vmatprep.subr.bf16.mxu0 0
    %3029 = vmatpush1.bf16.msra.mxu0 %v3007
    %3030 = vmatprep.subr.bf16.mxu0 0
    %3031 = vmatpush1.bf16.msra.mxu0 %v3008
    %3032 = vmatprep.subr.bf16.mxu0 0
    %3033 = vmatpush1.bf16.msra.mxu0 %v3009
    %3034 = vmatprep.subr.bf16.mxu0 0
    %3035 = vmatpush1.bf16.msra.mxu0 0
    %3036 = vmatprep.subr.bf16.mxu0 0
    %3037 = vmatpush1.bf16.msra.mxu0 0
    %3038 = vmatprep.subr.bf16.mxu0 0
    %3039 = vmatpush1.bf16.msra.mxu0 0
    %3040 = vmatprep.subr.bf16.mxu0 0
    %3041 = vmatpush1.bf16.msra.mxu0 0
    %3042 = vmatprep.subr.bf16.mxu0 0
    %3043 = vmatpush1.bf16.msra.mxu0 0
    %3044 = vmatprep.subr.bf16.mxu0 0
    %3045 = vmatpush1.bf16.msra.mxu0 0
    %3046 = vmatprep.subr.bf16.mxu0 0
    %3047 = vmatpush1.bf16.msra.mxu0 0
    %3048 = vmatprep.subr.bf16.mxu0 0
    %3049 = vmatpush1.bf16.msra.mxu0 0
    %3050 = vmatprep.mubr.bf16.mxu0 0
    %3051 = vmatmul.mubr.bf16.gmra.mrb[0].mxu0 %v2653
    %v3052 = vpop.f32.mrb[0].mxu0
    %v3053 = vadd.f32 %v2965, %v3052
    %v3054 = vpop.f32.mrb[0].mxu0
    %v3055 = vpop.f32.mrb[0].mxu0
    %v3056 = vpop.f32.mrb[0].mxu0
    %3057 = vdwg.mxu0
    %v3058 = vpack.c.bf16 %v2154, %v2150
    %v3059 = vpack.c.bf16 %v2164, %v2160
    %v3060 = vpack.c.bf16 %v2170, %v2170
    %v3061 = vpack.c.bf16 %v2276, %v2272
    %v3062 = vpack.c.bf16 %v2286, %v2282
    %v3063 = vpack.c.bf16 %v2292, %v2292
    %v3064 = vpack.c.bf16 %v2398, %v2394
    %v3065 = vpack.c.bf16 %v2408, %v2404
    %v3066 = vpack.c.bf16 %v2414, %v2414
    %3067 = vmatprep.subr.bf16.mxu0 0
    %3068 = vmatpush1.bf16.xpose.msra.mxu0 %v3061
    %3069 = vmatprep.subr.bf16.mxu0 0
    %3070 = vmatpush1.bf16.xpose.msra.mxu0 %v3062
    %3071 = vmatprep.subr.bf16.mxu0 0
    %3072 = vmatpush1.bf16.xpose.msra.mxu0 %v3063
    %3073 = vmatprep.subr.bf16.mxu0 0
    %3074 = vmatpush1.bf16.xpose.msra.mxu0 0
    %3075 = vmatprep.subr.bf16.mxu0 0
    %3076 = vmatpush1.bf16.xpose.msra.mxu0 0
    %3077 = vmatprep.subr.bf16.mxu0 0
    %3078 = vmatpush1.bf16.xpose.msra.mxu0 0
    %3079 = vmatprep.subr.bf16.mxu0 0
    %3080 = vmatpush1.bf16.xpose.msra.mxu0 0
    %3081 = vmatprep.subr.bf16.mxu0 0
    %3082 = vmatpush1.bf16.xpose.msra.mxu0 0
    %3083 = vmatprep.subr.bf16.mxu0 0
    %3084 = vmatpush1.bf16.xpose.msra.mxu0 0
    %3085 = vmatprep.subr.bf16.mxu0 0
    %3086 = vmatpush1.bf16.xpose.msra.mxu0 0
    %3087 = vmatprep.subr.bf16.mxu0 0
    %3088 = vmatpush1.bf16.xpose.msra.mxu0 0
    %3089 = vmatprep.subr.bf16.mxu0 0
    %3090 = vmatpush1.bf16.xpose.msra.mxu0 0
    %3091 = vmatprep.subr.bf16.mxu0 0
    %3092 = vmatpush1.bf16.xpose.msra.mxu0 0
    %3093 = vmatprep.subr.bf16.mxu0 0
    %3094 = vmatpush1.bf16.xpose.msra.mxu0 0
    %3095 = vmatprep.subr.bf16.mxu0 0
    %3096 = vmatpush1.bf16.xpose.msra.mxu0 0
    %3097 = vmatprep.subr.bf16.mxu0 0
    %3098 = vmatpush1.bf16.xpose.msra.mxu0 0
    %3099 = vmatprep.mubr.bf16.mxu0 0
    %3100 = vmatmul.mubr.bf16.gmra.mrb[0].mxu0 %v3058
    %v3101 = vpop.f32.mrb[0].mxu0
    %v3102 = vadd.f32 %v2451, %v3101
    %v3103 = vpop.f32.mrb[0].mxu0
    %v3104 = vpop.f32.mrb[0].mxu0
    %v3105 = vadd.f32 %v2452, %v3104
    %v3106 = vpop.f32.mrb[0].mxu0
    %3107 = vmatprep.mubr.bf16.mxu0 0
    %3108 = vmatmul.mubr.bf16.gmra.mrb[0].mxu0 %v3059
    %v3109 = vpop.f32.mrb[0].mxu0
    %v3110 = vadd.f32 %v2453, %v3109
    %v3111 = vpop.f32.mrb[0].mxu0
    %v3112 = vpop.f32.mrb[0].mxu0
    %v3113 = vadd.f32 %v2454, %v3112
    %v3114 = vpop.f32.mrb[0].mxu0
    %3115 = vmatprep.mubr.bf16.mxu0 0
    %3116 = vmatmul.mubr.bf16.gmra.mrb[0].mxu0 %v3060
    %v3117 = vpop.f32.mrb[0].mxu0
    %v3118 = vadd.f32 %v2455, %v3117
    %v3119 = vpop.f32.mrb[0].mxu0
    %v3120 = vpop.f32.mrb[0].mxu0
    %v3121 = vpop.f32.mrb[0].mxu0
    %3122 = vdwg.mxu0
    %v3123 = vsel %vm2521, %v3102, -inf
    %3124 = vmax.xlane.f32.xlu0 %v3123
    %v3125 = vpop.xlane.xlu0 %3124
    %v3126 = vsel %vm2521, %v3105, -inf
    %3127 = vmax.xlane.f32.xlu0 %v3126
    %v3128 = vpop.xlane.xlu0 %3127
    %v3129 = vsel %vm2521, %v3110, -inf
    %3130 = vmax.xlane.f32.xlu0 %v3129
    %v3131 = vpop.xlane.xlu0 %3130
    %v3132 = vsel %vm2521, %v3113, -inf
    %3133 = vmax.xlane.f32.xlu0 %v3132
    %v3134 = vpop.xlane.xlu0 %3133
    %v3135 = vsel %vm2521, %v3118, -inf
    %3136 = vmax.xlane.f32.xlu0 %v3135
    %v3137 = vpop.xlane.xlu0 %3136
    %v3138 = vsub.f32 %v3102, %v3125
    %v3139 = vsub.f32 %v3105, %v3128
    %v3140 = vsub.f32 %v3110, %v3131
    %v3141 = vsub.f32 %v3113, %v3134
    %v3142 = vsub.f32 %v3118, %v3137
    %v3143 = vmul.f32 %v3138, 1.442695
    %v3144 = vpow.pop %v3143
    %v3145 = vmul.f32 %v3139, 1.442695
    %v3146 = vpow.pop %v3145
    %v3147 = vmul.f32 %v3140, 1.442695
    %v3148 = vpow.pop %v3147
    %v3149 = vmul.f32 %v3141, 1.442695
    %v3150 = vpow.pop %v3149
    %v3151 = vmul.f32 %v3142, 1.442695
    %v3152 = vpow.pop %v3151
    %v3153 = vsel %vm2521, %v3144, 0.0
    %3154 = vadd.xlane.f32.xlu0 %v3153
    %v3155 = vpop.xlane.xlu0 %3154
    %v3156 = vsel %vm2521, %v3146, 0.0
    %3157 = vadd.xlane.f32.xlu0 %v3156
    %v3158 = vpop.xlane.xlu0 %3157
    %v3159 = vsel %vm2521, %v3148, 0.0
    %3160 = vadd.xlane.f32.xlu0 %v3159
    %v3161 = vpop.xlane.xlu0 %3160
    %v3162 = vsel %vm2521, %v3150, 0.0
    %3163 = vadd.xlane.f32.xlu0 %v3162
    %v3164 = vpop.xlane.xlu0 %3163
    %v3165 = vsel %vm2521, %v3152, 0.0
    %3166 = vadd.xlane.f32.xlu0 %v3165
    %v3167 = vpop.xlane.xlu0 %3166
    %v3168 = vrcp.pop %v3155
    %v3169 = vrcp.pop %v3158
    %v3170 = vrcp.pop %v3161
    %v3171 = vrcp.pop %v3164
    %v3172 = vrcp.pop %v3167
    %v3173 = vmul.f32 %v3144, %v3168
    %v3174 = vmul.f32 %v3146, %v3169
    %v3175 = vmul.f32 %v3148, %v3170
    %v3176 = vmul.f32 %v3150, %v3171
    %v3177 = vmul.f32 %v3152, %v3172
    %v3178 = vpack.c.bf16 %v3174, %v3173
    %v3179 = vpack.c.bf16 %v3176, %v3175
    %v3180 = vpack.c.bf16 %v3177, %v3177
    %v3182 = vsel %vm2521, %v3178, 0
    %v3185 = vsel %vm2521, %v3179, 0
    %v3188 = vsel %vm2521, %v3180, 0
    %v3191 = vsel %vm2589, %v3066, 0
    %3193 = vmatprep.subr.bf16.mxu0 0
    %3194 = vmatpush1.bf16.msra.mxu0 %v3064
    %3195 = vmatprep.subr.bf16.mxu0 0
    %3196 = vmatpush1.bf16.msra.mxu0 %v3065
    %3197 = vmatprep.subr.bf16.mxu0 0
    %3198 = vmatpush1.bf16.msra.mxu0 %v3191
    %3199 = vmatprep.subr.bf16.mxu0 0
    %3200 = vmatpush1.bf16.msra.mxu0 0
    %3201 = vmatprep.subr.bf16.mxu0 0
    %3202 = vmatpush1.bf16.msra.mxu0 0
    %3203 = vmatprep.subr.bf16.mxu0 0
    %3204 = vmatpush1.bf16.msra.mxu0 0
    %3205 = vmatprep.subr.bf16.mxu0 0
    %3206 = vmatpush1.bf16.msra.mxu0 0
    %3207 = vmatprep.subr.bf16.mxu0 0
    %3208 = vmatpush1.bf16.msra.mxu0 0
    %3209 = vmatprep.subr.bf16.mxu0 0
    %3210 = vmatpush1.bf16.msra.mxu0 0
    %3211 = vmatprep.subr.bf16.mxu0 0
    %3212 = vmatpush1.bf16.msra.mxu0 0
    %3213 = vmatprep.subr.bf16.mxu0 0
    %3214 = vmatpush1.bf16.msra.mxu0 0
    %3215 = vmatprep.subr.bf16.mxu0 0
    %3216 = vmatpush1.bf16.msra.mxu0 0
    %3217 = vmatprep.subr.bf16.mxu0 0
    %3218 = vmatpush1.bf16.msra.mxu0 0
    %3219 = vmatprep.subr.bf16.mxu0 0
    %3220 = vmatpush1.bf16.msra.mxu0 0
    %3221 = vmatprep.subr.bf16.mxu0 0
    %3222 = vmatpush1.bf16.msra.mxu0 0
    %3223 = vmatprep.subr.bf16.mxu0 0
    %3224 = vmatpush1.bf16.msra.mxu0 0
    %3225 = vmatprep.mubr.bf16.mxu0 0
    %3226 = vmatmul.mubr.bf16.gmra.mrb[0].mxu0 %v3182
    %v3227 = vpop.f32.mrb[0].mxu0
    %v3228 = vadd.f32 0.0, %v3227
    %v3229 = vpop.f32.mrb[0].mxu0
    %v3230 = vpop.f32.mrb[0].mxu0
    %v3231 = vadd.f32 0.0, %v3230
    %v3232 = vpop.f32.mrb[0].mxu0
    %3233 = vmatprep.mubr.bf16.mxu0 0
    %3234 = vmatmul.mubr.bf16.gmra.mrb[0].mxu0 %v3185
    %v3235 = vpop.f32.mrb[0].mxu0
    %v3236 = vadd.f32 0.0, %v3235
    %v3237 = vpop.f32.mrb[0].mxu0
    %v3238 = vpop.f32.mrb[0].mxu0
    %v3239 = vadd.f32 0.0, %v3238
    %v3240 = vpop.f32.mrb[0].mxu0
    %3241 = vmatprep.mubr.bf16.mxu0 0
    %3242 = vmatmul.mubr.bf16.gmra.mrb[0].mxu0 %v3188
    %v3243 = vpop.f32.mrb[0].mxu0
    %v3244 = vadd.f32 0.0, %v3243
    %v3245 = vpop.f32.mrb[0].mxu0
    %v3246 = vpop.f32.mrb[0].mxu0
    %v3247 = vpop.f32.mrb[0].mxu0
    %3248 = vdwg.mxu0
    %v3249 = vadd.f32 %v3228, %v3231
    %v3250 = vadd.f32 %v3249, %v3236
    %v3251 = vadd.f32 %v3250, %v3239
    %v3252 = vadd.f32 %v3251, %v3244
    %v3253 = vpack.c.bf16 %v3252, %v3252
    %v3254 = vld [vmem:[#allocation7 + $0x8] sm:$0xf]
    %v3255 = vld [vmem:[#allocation7 + $0x18] sm:$0xf]
    %v3256 = vld [vmem:[#allocation7 + $0x28] sm:$0xf]
    %v3257 = vld [vmem:[#allocation7 + $0x38] sm:$0xf]
    %v3258 = vld [vmem:[#allocation7 + $0x48] sm:$0xf]
    %v3259 = vld [vmem:[#allocation7 + $0x58] sm:$0xf]
    %v3260 = vld [vmem:[#allocation7 + $0x68] sm:$0xf]
    %v3261 = vld [vmem:[#allocation7 + $0x78] sm:$0xf]
    %v3262 = vld [vmem:[#allocation7 + $0x88] sm:$0xf]
    %v3263 = vld [vmem:[#allocation7 + $0x98] sm:$0xf]
    %v3264 = vld [vmem:[#allocation7 + $0xa8] sm:$0xf]
    %v3265 = vld [vmem:[#allocation7 + $0xb8] sm:$0xf]
    %v3266 = vld [vmem:[#allocation7 + $0xc8] sm:$0xf]
    %v3267 = vld [vmem:[#allocation7 + $0xd8] sm:$0xf]
    %v3268 = vld [vmem:[#allocation7 + $0xe8] sm:$0xf]
    %v3269 = vld [vmem:[#allocation7 + $0xf8] sm:$0xf]
    %v3286 = vunpack.c.l.b16 %v3254
    %v3287 = vunpack.c.l.b16 %v3255
    %v3288 = vunpack.c.l.b16 %v3256
    %v3289 = vunpack.c.l.b16 %v3257
    %v3290 = vunpack.c.l.b16 %v3258
    %v3291 = vunpack.c.l.b16 %v3259
    %v3292 = vunpack.c.l.b16 %v3260
    %v3293 = vunpack.c.l.b16 %v3261
    %v3294 = vunpack.c.l.b16 %v3262
    %v3295 = vunpack.c.l.b16 %v3263
    %v3296 = vunpack.c.l.b16 %v3264
    %v3297 = vunpack.c.l.b16 %v3265
    %v3298 = vunpack.c.l.b16 %v3266
    %v3299 = vunpack.c.l.b16 %v3267
    %v3300 = vunpack.c.l.b16 %v3268
    %v3301 = vunpack.c.l.b16 %v3269
    %v3302 = vpack.c.b16 %v3287, %v3286
    %v3303 = vpack.c.b16 %v3289, %v3288
    %v3304 = vpack.c.b16 %v3291, %v3290
    %v3305 = vpack.c.b16 %v3293, %v3292
    %v3306 = vpack.c.b16 %v3295, %v3294
    %v3307 = vpack.c.b16 %v3297, %v3296
    %v3308 = vpack.c.b16 %v3299, %v3298
    %v3309 = vpack.c.b16 %v3301, %v3300
    %3318 = vmatprep.subr.bf16.mxu0 0
    %3319 = vmatpush1.bf16.msra.mxu0 %v3302
    %3320 = vmatprep.subr.bf16.mxu0 0
    %3321 = vmatpush1.bf16.msra.mxu0 %v3303
    %3322 = vmatprep.subr.bf16.mxu0 0
    %3323 = vmatpush1.bf16.msra.mxu0 %v3304
    %3324 = vmatprep.subr.bf16.mxu0 0
    %3325 = vmatpush1.bf16.msra.mxu0 %v3305
    %3326 = vmatprep.subr.bf16.mxu0 0
    %3327 = vmatpush1.bf16.msra.mxu0 %v3306
    %3328 = vmatprep.subr.bf16.mxu0 0
    %3329 = vmatpush1.bf16.msra.mxu0 %v3307
    %3330 = vmatprep.subr.bf16.mxu0 0
    %3331 = vmatpush1.bf16.msra.mxu0 %v3308
    %3332 = vmatprep.subr.bf16.mxu0 0
    %3333 = vmatpush1.bf16.msra.mxu0 %v3309
    %3334 = vmatprep.subr.bf16.mxu0 0
    %3335 = vmatpush1.bf16.msra.mxu0 0
    %3336 = vmatprep.subr.bf16.mxu0 0
    %3337 = vmatpush1.bf16.msra.mxu0 0
    %3338 = vmatprep.subr.bf16.mxu0 0
    %3339 = vmatpush1.bf16.msra.mxu0 0
    %3340 = vmatprep.subr.bf16.mxu0 0
    %3341 = vmatpush1.bf16.msra.mxu0 0
    %3342 = vmatprep.subr.bf16.mxu0 0
    %3343 = vmatpush1.bf16.msra.mxu0 0
    %3344 = vmatprep.subr.bf16.mxu0 0
    %3345 = vmatpush1.bf16.msra.mxu0 0
    %3346 = vmatprep.subr.bf16.mxu0 0
    %3347 = vmatpush1.bf16.msra.mxu0 0
    %3348 = vmatprep.subr.bf16.mxu0 0
    %3349 = vmatpush1.bf16.msra.mxu0 0
    %3350 = vmatprep.mubr.bf16.mxu0 0
    %3351 = vmatmul.mubr.bf16.gmra.mrb[0].mxu0 %v3253
    %v3352 = vpop.f32.mrb[0].mxu0
    %v3353 = vadd.f32 0.0, %v3352
    %v3354 = vpop.f32.mrb[0].mxu0
    %v3355 = vpop.f32.mrb[0].mxu0
    %v3356 = vpop.f32.mrb[0].mxu0
    %3357 = vdwg.mxu0
    %v3358 = vadd.f32 %v3053, %v3353
    %v3359 = vpack.c.bf16 %v2156, %v2152
    %v3360 = vpack.c.bf16 %v2166, %v2162
    %v3361 = vpack.c.bf16 %v2172, %v2172
    %v3362 = vpack.c.bf16 %v2278, %v2274
    %v3363 = vpack.c.bf16 %v2288, %v2284
    %v3364 = vpack.c.bf16 %v2294, %v2294
    %v3365 = vpack.c.bf16 %v2400, %v2396
    %v3366 = vpack.c.bf16 %v2410, %v2406
    %v3367 = vpack.c.bf16 %v2416, %v2416
    %3368 = vmatprep.subr.bf16.mxu0 0
    %3369 = vmatpush1.bf16.xpose.msra.mxu0 %v3362
    %3370 = vmatprep.subr.bf16.mxu0 0
    %3371 = vmatpush1.bf16.xpose.msra.mxu0 %v3363
    %3372 = vmatprep.subr.bf16.mxu0 0
    %3373 = vmatpush1.bf16.xpose.msra.mxu0 %v3364
    %3374 = vmatprep.subr.bf16.mxu0 0
    %3375 = vmatpush1.bf16.xpose.msra.mxu0 0
    %3376 = vmatprep.subr.bf16.mxu0 0
    %3377 = vmatpush1.bf16.xpose.msra.mxu0 0
    %3378 = vmatprep.subr.bf16.mxu0 0
    %3379 = vmatpush1.bf16.xpose.msra.mxu0 0
    %3380 = vmatprep.subr.bf16.mxu0 0
    %3381 = vmatpush1.bf16.xpose.msra.mxu0 0
    %3382 = vmatprep.subr.bf16.mxu0 0
    %3383 = vmatpush1.bf16.xpose.msra.mxu0 0
    %3384 = vmatprep.subr.bf16.mxu0 0
    %3385 = vmatpush1.bf16.xpose.msra.mxu0 0
    %3386 = vmatprep.subr.bf16.mxu0 0
    %3387 = vmatpush1.bf16.xpose.msra.mxu0 0
    %3388 = vmatprep.subr.bf16.mxu0 0
    %3389 = vmatpush1.bf16.xpose.msra.mxu0 0
    %3390 = vmatprep.subr.bf16.mxu0 0
    %3391 = vmatpush1.bf16.xpose.msra.mxu0 0
    %3392 = vmatprep.subr.bf16.mxu0 0
    %3393 = vmatpush1.bf16.xpose.msra.mxu0 0
    %3394 = vmatprep.subr.bf16.mxu0 0
    %3395 = vmatpush1.bf16.xpose.msra.mxu0 0
    %3396 = vmatprep.subr.bf16.mxu0 0
    %3397 = vmatpush1.bf16.xpose.msra.mxu0 0
    %3398 = vmatprep.subr.bf16.mxu0 0
    %3399 = vmatpush1.bf16.xpose.msra.mxu0 0
    %3400 = vmatprep.mubr.bf16.mxu0 0
    %3401 = vmatmul.mubr.bf16.gmra.mrb[0].mxu0 %v3359
    %v3402 = vpop.f32.mrb[0].mxu0
    %v3403 = vadd.f32 %v2451, %v3402
    %v3404 = vpop.f32.mrb[0].mxu0
    %v3405 = vpop.f32.mrb[0].mxu0
    %v3406 = vadd.f32 %v2452, %v3405
    %v3407 = vpop.f32.mrb[0].mxu0
    %3408 = vmatprep.mubr.bf16.mxu0 0
    %3409 = vmatmul.mubr.bf16.gmra.mrb[0].mxu0 %v3360
    %v3410 = vpop.f32.mrb[0].mxu0
    %v3411 = vadd.f32 %v2453, %v3410
    %v3412 = vpop.f32.mrb[0].mxu0
    %v3413 = vpop.f32.mrb[0].mxu0
    %v3414 = vadd.f32 %v2454, %v3413
    %v3415 = vpop.f32.mrb[0].mxu0
    %3416 = vmatprep.mubr.bf16.mxu0 0
    %3417 = vmatmul.mubr.bf16.gmra.mrb[0].mxu0 %v3361
    %v3418 = vpop.f32.mrb[0].mxu0
    %v3419 = vadd.f32 %v2455, %v3418
    %v3420 = vpop.f32.mrb[0].mxu0
    %v3421 = vpop.f32.mrb[0].mxu0
    %v3422 = vpop.f32.mrb[0].mxu0
    %3423 = vdwg.mxu0
    %v3424 = vsel %vm2521, %v3403, -inf
    %3425 = vmax.xlane.f32.xlu0 %v3424
    %v3426 = vpop.xlane.xlu0 %3425
    %v3427 = vsel %vm2521, %v3406, -inf
    %3428 = vmax.xlane.f32.xlu0 %v3427
    %v3429 = vpop.xlane.xlu0 %3428
    %v3430 = vsel %vm2521, %v3411, -inf
    %3431 = vmax.xlane.f32.xlu0 %v3430
    %v3432 = vpop.xlane.xlu0 %3431
    %v3433 = vsel %vm2521, %v3414, -inf
    %3434 = vmax.xlane.f32.xlu0 %v3433
    %v3435 = vpop.xlane.xlu0 %3434
    %v3436 = vsel %vm2521, %v3419, -inf
    %3437 = vmax.xlane.f32.xlu0 %v3436
    %v3438 = vpop.xlane.xlu0 %3437
    %v3439 = vsub.f32 %v3403, %v3426
    %v3440 = vsub.f32 %v3406, %v3429
    %v3441 = vsub.f32 %v3411, %v3432
    %v3442 = vsub.f32 %v3414, %v3435
    %v3443 = vsub.f32 %v3419, %v3438
    %v3444 = vmul.f32 %v3439, 1.442695
    %v3445 = vpow.pop %v3444
    %v3446 = vmul.f32 %v3440, 1.442695
    %v3447 = vpow.pop %v3446
    %v3448 = vmul.f32 %v3441, 1.442695
    %v3449 = vpow.pop %v3448
    %v3450 = vmul.f32 %v3442, 1.442695
    %v3451 = vpow.pop %v3450
    %v3452 = vmul.f32 %v3443, 1.442695
    %v3453 = vpow.pop %v3452
    %v3454 = vsel %vm2521, %v3445, 0.0
    %3455 = vadd.xlane.f32.xlu0 %v3454
    %v3456 = vpop.xlane.xlu0 %3455
    %v3457 = vsel %vm2521, %v3447, 0.0
    %3458 = vadd.xlane.f32.xlu0 %v3457
    %v3459 = vpop.xlane.xlu0 %3458
    %v3460 = vsel %vm2521, %v3449, 0.0
    %3461 = vadd.xlane.f32.xlu0 %v3460
    %v3462 = vpop.xlane.xlu0 %3461
    %v3463 = vsel %vm2521, %v3451, 0.0
    %3464 = vadd.xlane.f32.xlu0 %v3463
    %v3465 = vpop.xlane.xlu0 %3464
    %v3466 = vsel %vm2521, %v3453, 0.0
    %3467 = vadd.xlane.f32.xlu0 %v3466
    %v3468 = vpop.xlane.xlu0 %3467
    %v3469 = vrcp.pop %v3456
    %v3470 = vrcp.pop %v3459
    %v3471 = vrcp.pop %v3462
    %v3472 = vrcp.pop %v3465
    %v3473 = vrcp.pop %v3468
    %v3474 = vmul.f32 %v3445, %v3469
    %v3475 = vmul.f32 %v3447, %v3470
    %v3476 = vmul.f32 %v3449, %v3471
    %v3477 = vmul.f32 %v3451, %v3472
    %v3478 = vmul.f32 %v3453, %v3473
    %v3479 = vpack.c.bf16 %v3475, %v3474
    %v3480 = vpack.c.bf16 %v3477, %v3476
    %v3481 = vpack.c.bf16 %v3478, %v3478
    %v3483 = vsel %vm2521, %v3479, 0
    %v3486 = vsel %vm2521, %v3480, 0
    %v3489 = vsel %vm2521, %v3481, 0
    %v3492 = vsel %vm2589, %v3367, 0
    %3494 = vmatprep.subr.bf16.mxu0 0
    %3495 = vmatpush1.bf16.msra.mxu0 %v3365
    %3496 = vmatprep.subr.bf16.mxu0 0
    %3497 = vmatpush1.bf16.msra.mxu0 %v3366
    %3498 = vmatprep.subr.bf16.mxu0 0
    %3499 = vmatpush1.bf16.msra.mxu0 %v3492
    %3500 = vmatprep.subr.bf16.mxu0 0
    %3501 = vmatpush1.bf16.msra.mxu0 0
    %3502 = vmatprep.subr.bf16.mxu0 0
    %3503 = vmatpush1.bf16.msra.mxu0 0
    %3504 = vmatprep.subr.bf16.mxu0 0
    %3505 = vmatpush1.bf16.msra.mxu0 0
    %3506 = vmatprep.subr.bf16.mxu0 0
    %3507 = vmatpush1.bf16.msra.mxu0 0
    %3508 = vmatprep.subr.bf16.mxu0 0
    %3509 = vmatpush1.bf16.msra.mxu0 0
    %3510 = vmatprep.subr.bf16.mxu0 0
    %3511 = vmatpush1.bf16.msra.mxu0 0
    %3512 = vmatprep.subr.bf16.mxu0 0
    %3513 = vmatpush1.bf16.msra.mxu0 0
    %3514 = vmatprep.subr.bf16.mxu0 0
    %3515 = vmatpush1.bf16.msra.mxu0 0
    %3516 = vmatprep.subr.bf16.mxu0 0
    %3517 = vmatpush1.bf16.msra.mxu0 0
    %3518 = vmatprep.subr.bf16.mxu0 0
    %3519 = vmatpush1.bf16.msra.mxu0 0
    %3520 = vmatprep.subr.bf16.mxu0 0
    %3521 = vmatpush1.bf16.msra.mxu0 0
    %3522 = vmatprep.subr.bf16.mxu0 0
    %3523 = vmatpush1.bf16.msra.mxu0 0
    %3524 = vmatprep.subr.bf16.mxu0 0
    %3525 = vmatpush1.bf16.msra.mxu0 0
    %3526 = vmatprep.mubr.bf16.mxu0 0
    %3527 = vmatmul.mubr.bf16.gmra.mrb[0].mxu0 %v3483
    %v3528 = vpop.f32.mrb[0].mxu0
    %v3529 = vadd.f32 0.0, %v3528
    %v3530 = vpop.f32.mrb[0].mxu0
    %v3531 = vpop.f32.mrb[0].mxu0
    %v3532 = vadd.f32 0.0, %v3531
    %v3533 = vpop.f32.mrb[0].mxu0
    %3534 = vmatprep.mubr.bf16.mxu0 0
    %3535 = vmatmul.mubr.bf16.gmra.mrb[0].mxu0 %v3486
    %v3536 = vpop.f32.mrb[0].mxu0
    %v3537 = vadd.f32 0.0, %v3536
    %v3538 = vpop.f32.mrb[0].mxu0
    %v3539 = vpop.f32.mrb[0].mxu0
    %v3540 = vadd.f32 0.0, %v3539
    %v3541 = vpop.f32.mrb[0].mxu0
    %3542 = vmatprep.mubr.bf16.mxu0 0
    %3543 = vmatmul.mubr.bf16.gmra.mrb[0].mxu0 %v3489
    %v3544 = vpop.f32.mrb[0].mxu0
    %v3545 = vadd.f32 0.0, %v3544
    %v3546 = vpop.f32.mrb[0].mxu0
    %v3547 = vpop.f32.mrb[0].mxu0
    %v3548 = vpop.f32.mrb[0].mxu0
    %3549 = vdwg.mxu0
    %v3550 = vadd.f32 %v3529, %v3532
    %v3551 = vadd.f32 %v3550, %v3537
    %v3552 = vadd.f32 %v3551, %v3540
    %v3553 = vadd.f32 %v3552, %v3545
    %v3554 = vpack.c.bf16 %v3553, %v3553
    %v3555 = vld [vmem:[#allocation7 + $0xc] sm:$0xf]
    %v3556 = vld [vmem:[#allocation7 + $0x1c] sm:$0xf]
    %v3557 = vld [vmem:[#allocation7 + $0x2c] sm:$0xf]
    %v3558 = vld [vmem:[#allocation7 + $0x3c] sm:$0xf]
    %v3559 = vld [vmem:[#allocation7 + $0x4c] sm:$0xf]
    %v3560 = vld [vmem:[#allocation7 + $0x5c] sm:$0xf]
    %v3561 = vld [vmem:[#allocation7 + $0x6c] sm:$0xf]
    %v3562 = vld [vmem:[#allocation7 + $0x7c] sm:$0xf]
    %v3563 = vld [vmem:[#allocation7 + $0x8c] sm:$0xf]
    %v3564 = vld [vmem:[#allocation7 + $0x9c] sm:$0xf]
    %v3565 = vld [vmem:[#allocation7 + $0xac] sm:$0xf]
    %v3566 = vld [vmem:[#allocation7 + $0xbc] sm:$0xf]
    %v3567 = vld [vmem:[#allocation7 + $0xcc] sm:$0xf]
    %v3568 = vld [vmem:[#allocation7 + $0xdc] sm:$0xf]
    %v3569 = vld [vmem:[#allocation7 + $0xec] sm:$0xf]
    %v3570 = vld [vmem:[#allocation7 + $0xfc] sm:$0xf]
    %v3587 = vunpack.c.l.b16 %v3555
    %v3588 = vunpack.c.l.b16 %v3556
    %v3589 = vunpack.c.l.b16 %v3557
    %v3590 = vunpack.c.l.b16 %v3558
    %v3591 = vunpack.c.l.b16 %v3559
    %v3592 = vunpack.c.l.b16 %v3560
    %v3593 = vunpack.c.l.b16 %v3561
    %v3594 = vunpack.c.l.b16 %v3562
    %v3595 = vunpack.c.l.b16 %v3563
    %v3596 = vunpack.c.l.b16 %v3564
    %v3597 = vunpack.c.l.b16 %v3565
    %v3598 = vunpack.c.l.b16 %v3566
    %v3599 = vunpack.c.l.b16 %v3567
    %v3600 = vunpack.c.l.b16 %v3568
    %v3601 = vunpack.c.l.b16 %v3569
    %v3602 = vunpack.c.l.b16 %v3570
    %v3603 = vpack.c.b16 %v3588, %v3587
    %v3604 = vpack.c.b16 %v3590, %v3589
    %v3605 = vpack.c.b16 %v3592, %v3591
    %v3606 = vpack.c.b16 %v3594, %v3593
    %v3607 = vpack.c.b16 %v3596, %v3595
    %v3608 = vpack.c.b16 %v3598, %v3597
    %v3609 = vpack.c.b16 %v3600, %v3599
    %v3610 = vpack.c.b16 %v3602, %v3601
    %3619 = vmatprep.subr.bf16.mxu0 0
    %3620 = vmatpush1.bf16.msra.mxu0 %v3603
    %3621 = vmatprep.subr.bf16.mxu0 0
    %3622 = vmatpush1.bf16.msra.mxu0 %v3604
    %3623 = vmatprep.subr.bf16.mxu0 0
    %3624 = vmatpush1.bf16.msra.mxu0 %v3605
    %3625 = vmatprep.subr.bf16.mxu0 0
    %3626 = vmatpush1.bf16.msra.mxu0 %v3606
    %3627 = vmatprep.subr.bf16.mxu0 0
    %3628 = vmatpush1.bf16.msra.mxu0 %v3607
    %3629 = vmatprep.subr.bf16.mxu0 0
    %3630 = vmatpush1.bf16.msra.mxu0 %v3608
    %3631 = vmatprep.subr.bf16.mxu0 0
    %3632 = vmatpush1.bf16.msra.mxu0 %v3609
    %3633 = vmatprep.subr.bf16.mxu0 0
    %3634 = vmatpush1.bf16.msra.mxu0 %v3610
    %3635 = vmatprep.subr.bf16.mxu0 0
    %3636 = vmatpush1.bf16.msra.mxu0 0
    %3637 = vmatprep.subr.bf16.mxu0 0
    %3638 = vmatpush1.bf16.msra.mxu0 0
    %3639 = vmatprep.subr.bf16.mxu0 0
    %3640 = vmatpush1.bf16.msra.mxu0 0
    %3641 = vmatprep.subr.bf16.mxu0 0
    %3642 = vmatpush1.bf16.msra.mxu0 0
    %3643 = vmatprep.subr.bf16.mxu0 0
    %3644 = vmatpush1.bf16.msra.mxu0 0
    %3645 = vmatprep.subr.bf16.mxu0 0
    %3646 = vmatpush1.bf16.msra.mxu0 0
    %3647 = vmatprep.subr.bf16.mxu0 0
    %3648 = vmatpush1.bf16.msra.mxu0 0
    %3649 = vmatprep.subr.bf16.mxu0 0
    %3650 = vmatpush1.bf16.msra.mxu0 0
    %3651 = vmatprep.mubr.bf16.mxu0 0
    %3652 = vmatmul.mubr.bf16.gmra.mrb[0].mxu0 %v3554
    %v3653 = vpop.f32.mrb[0].mxu0
    %v3654 = vadd.f32 0.0, %v3653
    %v3655 = vpop.f32.mrb[0].mxu0
    %v3656 = vpop.f32.mrb[0].mxu0
    %v3657 = vpop.f32.mrb[0].mxu0
    %3658 = vdwg.mxu0
    %v3659 = vadd.f32 %v3358, %v3654
    %v3660 = vld [vmem:[%s5 + $0x2] ss:$0 sm:$0xff]
    %v3661 = vadd.f32 %v3659, %v3660
    %v3662 = vmax.f32 %v3661, 0.0
    %v3663 = vpack.c.bf16 %v3662, %v3662
    %v3664 = vld [vmem:[#allocation8] sm:$0xf]
    %v3665 = vld [vmem:[#allocation8 + $0x4] sm:$0xf]
    %v3666 = vld [vmem:[#allocation8 + $0x8] sm:$0xf]
    %v3667 = vld [vmem:[#allocation8 + $0xc] sm:$0xf]
    %v3668 = vld [vmem:[#allocation8 + $0x10] sm:$0xf]
    %v3669 = vld [vmem:[#allocation8 + $0x14] sm:$0xf]
    %v3670 = vld [vmem:[#allocation8 + $0x18] sm:$0xf]
    %v3671 = vld [vmem:[#allocation8 + $0x1c] sm:$0xf]
    %v3672 = vld [vmem:[#allocation8 + $0x20] sm:$0xf]
    %v3673 = vld [vmem:[#allocation8 + $0x24] sm:$0xf]
    %v3674 = vld [vmem:[#allocation8 + $0x28] sm:$0xf]
    %v3675 = vld [vmem:[#allocation8 + $0x2c] sm:$0xf]
    %v3676 = vld [vmem:[#allocation8 + $0x30] sm:$0xf]
    %v3677 = vld [vmem:[#allocation8 + $0x34] sm:$0xf]
    %v3678 = vld [vmem:[#allocation8 + $0x38] sm:$0xf]
    %v3679 = vld [vmem:[#allocation8 + $0x3c] sm:$0xf]
    %v3680 = vld [vmem:[%s5 + $0x3] ss:$0 sm:$0xff]
    %v3697 = vunpack.c.l.b16 %v3664
    %v3698 = vunpack.c.l.b16 %v3665
    %v3699 = vunpack.c.l.b16 %v3666
    %v3700 = vunpack.c.l.b16 %v3667
    %v3701 = vunpack.c.l.b16 %v3668
    %v3702 = vunpack.c.l.b16 %v3669
    %v3703 = vunpack.c.l.b16 %v3670
    %v3704 = vunpack.c.l.b16 %v3671
    %v3705 = vunpack.c.l.b16 %v3672
    %v3706 = vunpack.c.l.b16 %v3673
    %v3707 = vunpack.c.l.b16 %v3674
    %v3708 = vunpack.c.l.b16 %v3675
    %v3709 = vunpack.c.l.b16 %v3676
    %v3710 = vunpack.c.l.b16 %v3677
    %v3711 = vunpack.c.l.b16 %v3678
    %v3712 = vunpack.c.l.b16 %v3679
    %v3713 = vpack.c.b16 %v3698, %v3697
    %v3714 = vpack.c.b16 %v3700, %v3699
    %v3715 = vpack.c.b16 %v3702, %v3701
    %v3716 = vpack.c.b16 %v3704, %v3703
    %v3717 = vpack.c.b16 %v3706, %v3705
    %v3718 = vpack.c.b16 %v3708, %v3707
    %v3719 = vpack.c.b16 %v3710, %v3709
    %v3720 = vpack.c.b16 %v3712, %v3711
    %3729 = vmatprep.subr.bf16.mxu0 0
    %3730 = vmatpush1.bf16.msra.mxu0 %v3713
    %3731 = vmatprep.subr.bf16.mxu0 0
    %3732 = vmatpush1.bf16.msra.mxu0 %v3714
    %3733 = vmatprep.subr.bf16.mxu0 0
    %3734 = vmatpush1.bf16.msra.mxu0 %v3715
    %3735 = vmatprep.subr.bf16.mxu0 0
    %3736 = vmatpush1.bf16.msra.mxu0 %v3716
    %3737 = vmatprep.subr.bf16.mxu0 0
    %3738 = vmatpush1.bf16.msra.mxu0 %v3717
    %3739 = vmatprep.subr.bf16.mxu0 0
    %3740 = vmatpush1.bf16.msra.mxu0 %v3718
    %3741 = vmatprep.subr.bf16.mxu0 0
    %3742 = vmatpush1.bf16.msra.mxu0 %v3719
    %3743 = vmatprep.subr.bf16.mxu0 0
    %3744 = vmatpush1.bf16.msra.mxu0 %v3720
    %3745 = vmatprep.subr.bf16.mxu0 0
    %3746 = vmatpush1.bf16.msra.mxu0 0
    %3747 = vmatprep.subr.bf16.mxu0 0
    %3748 = vmatpush1.bf16.msra.mxu0 0
    %3749 = vmatprep.subr.bf16.mxu0 0
    %3750 = vmatpush1.bf16.msra.mxu0 0
    %3751 = vmatprep.subr.bf16.mxu0 0
    %3752 = vmatpush1.bf16.msra.mxu0 0
    %3753 = vmatprep.subr.bf16.mxu0 0
    %3754 = vmatpush1.bf16.msra.mxu0 0
    %3755 = vmatprep.subr.bf16.mxu0 0
    %3756 = vmatpush1.bf16.msra.mxu0 0
    %3757 = vmatprep.subr.bf16.mxu0 0
    %3758 = vmatpush1.bf16.msra.mxu0 0
    %3759 = vmatprep.subr.bf16.mxu0 0
    %3760 = vmatpush1.bf16.msra.mxu0 0
    %3761 = vmatprep.mubr.bf16.mxu0 0
    %3762 = vmatmul.mubr.bf16.gmra.mrb[0].mxu0 %v3663
    %v3763 = vpop.f32.mrb[0].mxu0
    %v3764 = vadd.f32 %v3680, %v3763
    %v3765 = vpop.f32.mrb[0].mxu0
    %v3766 = vpop.f32.mrb[0].mxu0
    %v3767 = vpop.f32.mrb[0].mxu0
    %3768 = vdwg.mxu0
    %3769 = vst [vmem:[%s6] sm:$0xff] %v3661
    %3770 = vst [vmem:[%s6 + $0x8] sm:$0xff] %v3764
    // Predicated region
    $region42: #{cross_attention_flatten_2class_forward.1} parent=1 // pred_check
      _
    $region43: #{cross_attention_flatten_2class_forward.1} parent=1 // pred_check_branch
      %3772 = sbr.rel (0) target = $region45
    $region44: #{cross_attention_flatten_2class_forward.1} parent=1 // pred_region
      _
    $region45: #{cross_attention_flatten_2class_forward.1} parent=1 // pred_fallthru
      _
    // Predicated region
    $region46: #{cross_attention_flatten_2class_forward.1} parent=1 // pred_check
      _
    $region47: #{cross_attention_flatten_2class_forward.1} parent=1 // pred_check_branch
      %3774 = sbr.rel (0) target = $region49
    $region48: #{cross_attention_flatten_2class_forward.1} parent=1 // pred_region
      _
    $region49: #{cross_attention_flatten_2class_forward.1} parent=1 // pred_fallthru
      _
    %3775 = vsyncpa [#allocation4], 1
    %3776 = vsyncpa [#allocation6], 1
    %3777 = vsyncpa [#allocation9], 1

</llo_original>
